<compile_context>
chip_gen: v5e
topology: v5e:2x2
jax: 0.10.0
libtpu: 0.0.40
codegen_flags: <defaults>
</compile_context>

<pallas_src>
import math

import jax
import jax.numpy as jnp
import numpy as np
from jax.experimental import pallas as pl
from jax.experimental.pallas import tpu as pltpu


# ----------------------------------------------------------------------------
# Fused Pallas kernel
# ----------------------------------------------------------------------------
def make_fused_convblock_kernel(H, W, Nb, Ci_p, Co_p, K1, pad1, K2, pad2,
                                *, stride0_mask=True):
    """Fused ConvBlock kernel operating on Nb samples per grid step.

    Ref layouts (all VMEM):
      x_ref  : (Nb, Cin, H*W)          raw input, lane dim = H*W
      w1_ref : (Co, K1*K1*Ci_p) bf16   conv1 weight, (kh, kw, ci) row order
      b1_ref : (Co, 1) f32
      w2_ref : (Co, K2*K2*Co_p) bf16   conv2 weight
      b2_ref : (Co, 1) f32
      ws_ref : (Co, Ci_p) bf16         1x1 skip weight
      bs_ref : (Co, 1) f32
      m1_ref : (K1*K1, H*W) f32        per-tap boundary masks for conv1
      m2_ref : (K2*K2, H*W) f32        per-tap boundary masks for conv2
      o_ref  : (Nb, Co, H*W) f32
      col1_ref / col2_ref              bf16 im2col scratch, lanes = Nb*H*W
    """
    HW = H * W
    inv_sqrt2 = 1.0 / math.sqrt(2.0)
    tc1 = pad1 * K1 + pad1               # conv1 centre-tap index (holds raw x)

    def lrelu(v):
        # max(v, 0.2*v): 2 VALU ops/vreg instead of cmp+mul+select.
        return jnp.maximum(v, 0.2 * v)

    def pad_rows(v, rows):
        c = v.shape[0]
        if c == rows:
            return v
        return jnp.concatenate(
            [v, jnp.zeros((rows - c,) + v.shape[1:], v.dtype)], axis=0)

    def build_cols(planes, C_p, K, pad, mask_ref, col_ref):
        # planes[b]: (C_p, HW) f32, already channel-padded.
        # Writes the im2col matrix (K*K*C_p, Nb*HW) into col_ref (bf16).
        # Row-block t = kh*K + kw holds the tap-(kh, kw) shifted copy of every
        # channel; the shift is a lane roll over the flattened H*W axis with
        # wrapped (out-of-image) positions zeroed by the precomputed mask.
        # Every store is a full, aligned (C_p, HW) block -> no scratch
        # pre-zeroing needed (safe on multi-TensorCore chips).
        for b in range(Nb):
            xb = planes[b]
            for kh in range(K):
                for kw in range(K):
                    t = kh * K + kw
                    s = (kh - pad) * W + (kw - pad)     # flattened tap offset
                    if s == 0:
                        plane = xb                      # centre tap: no shift
                    else:
                        rolled = pltpu.roll(xb, (-s) % HW, 1)  # out[q]=x[q+s]
                        if stride0_mask:
                            # sublane-broadcast mask row t to C_p rows in vld
                            m = mask_ref[pl.ds(t, C_p, stride=0), :]
                        else:
                            m = mask_ref[t:t + 1, :]    # (1, HW) + broadcast
                        plane = rolled * m
                    col_ref[t * C_p:(t + 1) * C_p, b * HW:(b + 1) * HW] = (
                        plane.astype(col_ref.dtype))

    def kernel(x_ref, w1_ref, b1_ref, w2_ref, b2_ref, ws_ref, bs_ref,
               m1_ref, m2_ref, o_ref, col1_ref, col2_ref):
        # conv1 (K1 x K1, 'same') + lrelu: all Nb samples in one im2col matmul.
        x_planes = [pad_rows(x_ref[b], Ci_p) for b in range(Nb)]
        build_cols(x_planes, Ci_p, K1, pad1, m1_ref, col1_ref)
        h1 = jnp.dot(w1_ref[...], col1_ref[...],
                     preferred_element_type=jnp.float32) + b1_ref[...]
        h1 = lrelu(h1)                                   # (Co, Nb*HW) f32

        # conv2 (K2 x K2, 'same') + lrelu.
        h1p = pad_rows(h1, Co_p)
        build_cols([h1p[:, b * HW:(b + 1) * HW] for b in range(Nb)],
                   Co_p, K2, pad2, m2_ref, col2_ref)
        h2 = jnp.dot(w2_ref[...], col2_ref[...],
                     preferred_element_type=jnp.float32) + b2_ref[...]
        h2 = lrelu(h2)                                   # (Co, Nb*HW) f32

        # skip (1x1 conv on the raw input): reuse conv1's centre-tap im2col
        # block, which holds the unshifted input -> no extra data movement.
        xc = col1_ref[tc1 * Ci_p:(tc1 + 1) * Ci_p, :]    # (Ci_p, Nb*HW) bf16
        skip = jnp.dot(ws_ref[...], xc,
                       preferred_element_type=jnp.float32) + bs_ref[...]

        out = (skip + h2) * inv_sqrt2                    # (Co, Nb*HW) f32
        for b in range(Nb):
            o_ref[b] = out[:, b * HW:(b + 1) * HW].astype(o_ref.dtype)

    return kernel


def _tap_masks(H, W, K, pad):
    """Precomputed per-tap validity masks, shape (K*K, H*W), float32."""
    q = np.arange(H * W)
    h, w = q // W, q % W
    rows = []
    for kh in range(K):
        for kw in range(K):
            dh, dw = kh - pad, kw - pad
            valid = ((h + dh >= 0) & (h + dh < H) &
                     (w + dw >= 0) & (w + dw < W))
            rows.append(valid.astype(np.float32))
    return jnp.asarray(np.stack(rows, axis=0))


def _vmem_limit_bytes():
    """Per-generation VMEM budget: ~75% of physical, capped at 100 MiB
    (=> ~48 MiB on v7x's 64 MiB/TC, ~96-100 MiB on v5e/v6e)."""
    try:
        cap = int(pltpu.get_tpu_info().vmem_capacity_bytes)
    except Exception:
        cap = 128 * 1024 * 1024
    return min(int(cap * 0.75), 100 * 1024 * 1024)


def _pick_batch_tile(N, bytes_per_sample, budget, max_nb=8):
    """Largest divisor Nb of N that fits the VMEM budget; keep >= 2 grid
    steps when N allows it so both v7x TensorCores get a step."""
    best = 1
    for nb in range(1, min(N, max_nb) + 1):
        if N % nb:
            continue
        if nb * bytes_per_sample > budget:
            continue
        if nb > 1 and N // nb < 2:
            continue
        best = nb
    return best


# ----------------------------------------------------------------------------
# ConvBlock forward (wrapper, NCHW interface like PyTorch)
# ----------------------------------------------------------------------------
def conv_block_forward(x_nchw, params, *, pad1, pad2):
    """params = (w1, b1, w2, b2, ws, bs) in PyTorch layouts:
       w1: (Cout, Cin, K1, K1), w2: (Cout, Cout, K2, K2), ws: (Cout, Cin, 1, 1)
    """
    w1, b1, w2, b2, ws, bs = params
    Cout, Cin, K1, _ = w1.shape
    K2 = w2.shape[-1]
    N, _, H, W = x_nchw.shape
    HW = H * W

    # The roll-based fused im2col requires 'same' convolutions, which is what
    # the residual in ConvBlock needs anyway (output spatial == input spatial).
    assert K1 == 2 * pad1 + 1 and K2 == 2 * pad2 + 1, "only 'same' convs supported"
    # TODO(synk): downsample/fused branches (FusedDownsample, AvgPool2d) and
    # last_layer=True are not implemented by this default-config kernel.
    # TODO(synk): at StyleGAN-scale resolutions (large H*W, Cout) add H-row
    # tiling with halo so the im2col scratch fits v7x's 64 MiB VMEM.

    # EqualLR: scale weights by sqrt(2 / fan_in) at forward time.
    m1 = math.sqrt(2.0 / (Cin * K1 * K1))
    m2 = math.sqrt(2.0 / (Cout * K2 * K2))
    ms = math.sqrt(2.0 / Cin)

    # bf16 matmul operands -> pad per-tap channel blocks to 16 rows so the
    # packed bf16 (16,128) tiles of the im2col scratch stay aligned.
    Ci_p = ((Cin + 15) // 16) * 16
    Co_p = ((Cout + 15) // 16) * 16

    # Flatten weights to (Co, K*K*C_p) matching the (kh, kw, c) im2col row
    # order; padded channel columns are zero. Cast to bf16 (MXU operands).
    w1t = jnp.transpose(w1 * m1, (0, 2, 3, 1))                    # (Co,K,K,Ci)
    w1t = jnp.pad(w1t, ((0, 0), (0, 0), (0, 0), (0, Ci_p - Cin)))
    w1f = w1t.reshape(Cout, K1 * K1 * Ci_p).astype(jnp.bfloat16)
    w2t = jnp.transpose(w2 * m2, (0, 2, 3, 1))                    # (Co,K,K,Co)
    w2t = jnp.pad(w2t, ((0, 0), (0, 0), (0, 0), (0, Co_p - Cout)))
    w2f = w2t.reshape(Cout, K2 * K2 * Co_p).astype(jnp.bfloat16)
    wsf = jnp.pad((ws * ms)[:, :, 0, 0],
                  ((0, 0), (0, Ci_p - Cin))).astype(jnp.bfloat16)  # (Co, Ci_p)
    b1c = b1.reshape(Cout, 1).astype(jnp.float32)
    b2c = b2.reshape(Cout, 1).astype(jnp.float32)
    bsc = bs.reshape(Cout, 1).astype(jnp.float32)

    # NCHW -> (N, Cin, H*W): metadata-only reshape, lane dim = H*W.
    # No channel pad over HBM (padding is handled as zero value-rows in-kernel).
    x2d = x_nchw.reshape(N, Cin, HW).astype(jnp.float32)

    mask1 = _tap_masks(H, W, K1, pad1)   # (K1*K1, HW) f32
    mask2 = _tap_masks(H, W, K2, pad2)   # (K2*K2, HW) f32

    vmem_limit = _vmem_limit_bytes()

    # Batch Nb samples per grid step (amortise per-step overhead, widen the
    # matmul lane dim). Per-sample VMEM: bf16 im2col scratch + dbl-buffered IO.
    col_bytes = (K1 * K1 * Ci_p + K2 * K2 * Co_p) * HW * 2
    io_bytes = (Cin + Cout) * HW * 4 * 2
    Nb = _pick_batch_tile(N, col_bytes + io_bytes, int(vmem_limit * 0.5))
    G = N // Nb

    def run(fast):
        kernel = make_fused_convblock_kernel(
            H, W, Nb, Ci_p, Co_p, K1, pad1, K2, pad2, stride0_mask=fast)
        # Constant operands: resident across grid steps; single-buffer them
        # (they never change) to save VMEM at large Cout.
        ckw = {"pipeline_mode": pl.Buffered(1)} if fast else {}

        def cspec(shape):
            return pl.BlockSpec(shape, lambda n: (0, 0), **ckw)

        out2d = pl.pallas_call(
            kernel,
            out_shape=jax.ShapeDtypeStruct((N, Cout, HW), jnp.float32),
            grid_spec=pltpu.PrefetchScalarGridSpec(
                num_scalar_prefetch=0,
                grid=(G,),
                in_specs=[
                    pl.BlockSpec((Nb, Cin, HW), lambda n: (n, 0, 0)),
                    cspec((Cout, K1 * K1 * Ci_p)),
                    cspec((Cout, 1)),
                    cspec((Cout, K2 * K2 * Co_p)),
                    cspec((Cout, 1)),
                    cspec((Cout, Ci_p)),
                    cspec((Cout, 1)),
                    cspec((K1 * K1, HW)),
                    cspec((K2 * K2, HW)),
                ],
                out_specs=pl.BlockSpec((Nb, Cout, HW), lambda n: (n, 0, 0)),
                scratch_shapes=[
                    pltpu.VMEM((K1 * K1 * Ci_p, Nb * HW), jnp.bfloat16),
                    pltpu.VMEM((K2 * K2 * Co_p, Nb * HW), jnp.bfloat16),
                ]),
            compiler_params=pltpu.CompilerParams(
                dimension_semantics=("parallel",),   # batch axis -> megacore
                vmem_limit_bytes=vmem_limit),
        )(x2d, w1f, b1c, w2f, b2c, wsf, bsc, mask1, mask2)
        return jax.block_until_ready(out2d)

    try:
        out2d = run(fast=True)
    except Exception:
        # Conservative fallback (no Buffered(1), no stride-0 broadcast load)
        # in case the installed Pallas/Mosaic rejects those features.
        out2d = run(fast=False)

    # (N, Cout, H*W) -> NCHW: metadata-only reshape.
    return out2d.reshape(N, Cout, H, W)


# ----------------------------------------------------------------------------
# Pure-JAX reference (for correctness check)
# ----------------------------------------------------------------------------
def conv_block_reference(x_nchw, params, *, pad1, pad2):
    w1, b1, w2, b2, ws, bs = params
    Cout, Cin, K1, _ = w1.shape
    K2 = w2.shape[-1]
    m1 = math.sqrt(2.0 / (Cin * K1 * K1))
    m2 = math.sqrt(2.0 / (Cout * K2 * K2))
    ms = math.sqrt(2.0 / Cin)

    def conv(x, w, b, p):
        y = jax.lax.conv_general_dilated(
            x, w, (1, 1), [(p, p), (p, p)],
            dimension_numbers=("NCHW", "OIHW", "NCHW"))
        return y + b.reshape(1, -1, 1, 1)

    def lrelu(v):
        return jnp.where(v > 0, v, 0.2 * v)

    h = lrelu(conv(x_nchw, w1 * m1, b1, pad1))
    h = lrelu(conv(h, w2 * m2, b2, pad2))
    skip = conv(x_nchw, ws * ms, bs, 0)
    return (skip + h) / math.sqrt(2.0)


# ----------------------------------------------------------------------------
# Main
# ----------------------------------------------------------------------------
if __name__ == "__main__":
    # Module config: ConvBlock(in_channel=4, out_channel=8, kernel_size=3,
    #                          padding=1, downsample=False, last_layer=False)
    # batch=4 exercises the Nb=2-samples-per-grid-step path with a grid of 2.
    N, Cin, Cout, H, W = 4, 4, 8, 16, 16
    K1 = K2 = 3
    pad1 = pad2 = 1

    key = jax.random.PRNGKey(0)
    kx, k1, k2, k3 = jax.random.split(key, 4)

    x = jax.random.normal(kx, (N, Cin, H, W), dtype=jnp.float32)

    # EqualConv2d init: weight ~ N(0, 1), bias = 0.
    w1 = jax.random.normal(k1, (Cout, Cin, K1, K1), dtype=jnp.float32)
    b1 = jnp.zeros((Cout,), dtype=jnp.float32)
    w2 = jax.random.normal(k2, (Cout, Cout, K2, K2), dtype=jnp.float32)
    b2 = jnp.zeros((Cout,), dtype=jnp.float32)
    ws = jax.random.normal(k3, (Cout, Cin, 1, 1), dtype=jnp.float32)
    bs = jnp.zeros((Cout,), dtype=jnp.float32)
    params = (w1, b1, w2, b2, ws, bs)

    out = conv_block_forward(x, params, pad1=pad1, pad2=pad2)
    out = jax.block_until_ready(out)

    ref = jax.block_until_ready(
        conv_block_reference(x, params, pad1=pad1, pad2=pad2))

    assert out.shape == (N, Cout, H, W), out.shape
    # bf16 MXU operands (f32 accumulation) vs the pure-f32 lax.conv reference
    # -> allow ~1e-2-level relative error.
    np.testing.assert_allclose(np.asarray(out), np.asarray(ref),
                               rtol=2e-2, atol=3e-2)

    print("KERNEL_OK")
</pallas_src>

<mosaic_0001>
module attributes {stable_mosaic.version = 11 : i64} {
  func.func @kernel(%arg0: i32, %arg1: memref<2x4x256xf32, #tpu.memory_space<vmem>>, %arg2: memref<8x144xbf16, #tpu.memory_space<vmem>>, %arg3: memref<8x1xf32, #tpu.memory_space<vmem>>, %arg4: memref<8x144xbf16, #tpu.memory_space<vmem>>, %arg5: memref<8x1xf32, #tpu.memory_space<vmem>>, %arg6: memref<8x16xbf16, #tpu.memory_space<vmem>>, %arg7: memref<8x1xf32, #tpu.memory_space<vmem>>, %arg8: memref<9x256xf32, #tpu.memory_space<vmem>>, %arg9: memref<9x256xf32, #tpu.memory_space<vmem>>, %arg10: memref<2x8x256xf32, #tpu.memory_space<vmem>>, %arg11: memref<144x512xbf16, #tpu.memory_space<vmem>>, %arg12: memref<144x512xbf16, #tpu.memory_space<vmem>>) attributes {dimension_semantics = [#tpu.dimension_semantics<parallel>], iteration_bounds = array<i64: 2>, scalar_prefetch = 0 : i64, scratch_operands = 2 : i64, tpu.core_type = #tpu.core_type<tc>, window_params = [{transform_indices = @transform_0, window_bounds = array<i64: 2, 4, 256>}, {pipeline_mode = #tpu.pipeline_mode<synchronous>, transform_indices = @transform_1, window_bounds = array<i64: 8, 144>}, {pipeline_mode = #tpu.pipeline_mode<synchronous>, transform_indices = @transform_2, window_bounds = array<i64: 8, 1>}, {pipeline_mode = #tpu.pipeline_mode<synchronous>, transform_indices = @transform_3, window_bounds = array<i64: 8, 144>}, {pipeline_mode = #tpu.pipeline_mode<synchronous>, transform_indices = @transform_4, window_bounds = array<i64: 8, 1>}, {pipeline_mode = #tpu.pipeline_mode<synchronous>, transform_indices = @transform_5, window_bounds = array<i64: 8, 16>}, {pipeline_mode = #tpu.pipeline_mode<synchronous>, transform_indices = @transform_6, window_bounds = array<i64: 8, 1>}, {pipeline_mode = #tpu.pipeline_mode<synchronous>, transform_indices = @transform_7, window_bounds = array<i64: 9, 256>}, {pipeline_mode = #tpu.pipeline_mode<synchronous>, transform_indices = @transform_8, window_bounds = array<i64: 9, 256>}, {transform_indices = @transform_9, window_bounds = array<i64: 2, 8, 256>}]} {
    %c0 = arith.constant 0 : index
    %c0_0 = arith.constant 0 : index
    %c0_1 = arith.constant 0 : index
    %0 = vector.load %arg1[%c0, %c0_0, %c0_1] : memref<2x4x256xf32, #tpu.memory_space<vmem>>, vector<1x4x256xf32>
    %1 = vector.shape_cast %0 : vector<1x4x256xf32> to vector<4x256xf32>
    %cst = arith.constant 0.000000e+00 : f32
    %2 = vector.broadcast %cst : f32 to vector<12x256xf32>
    %3 = tpu.concatenate %1, %2 in 0 : vector<4x256xf32>, vector<12x256xf32> -> vector<16x256xf32>
    %c1 = arith.constant 1 : index
    %c0_2 = arith.constant 0 : index
    %c0_3 = arith.constant 0 : index
    %4 = vector.load %arg1[%c1, %c0_2, %c0_3] : memref<2x4x256xf32, #tpu.memory_space<vmem>>, vector<1x4x256xf32>
    %5 = vector.shape_cast %4 : vector<1x4x256xf32> to vector<4x256xf32>
    %cst_4 = arith.constant 0.000000e+00 : f32
    %6 = vector.broadcast %cst_4 : f32 to vector<12x256xf32>
    %7 = tpu.concatenate %5, %6 in 0 : vector<4x256xf32>, vector<12x256xf32> -> vector<16x256xf32>
    %c17_i32 = arith.constant 17 : i32
    %8 = tpu.dynamic_rotate %3 by %c17_i32 dim 1 : vector<16x256xf32>, i32 -> vector<16x256xf32>
    %c0_5 = arith.constant 0 : index
    %c0_6 = arith.constant 0 : index
    %9 = tpu.strided_load %arg8[%c0_5, %c0_6] {strides = array<i32: 0, 1>} : memref<9x256xf32, #tpu.memory_space<vmem>>, vector<16x256xf32>
    %10 = arith.mulf %8, %9 : vector<16x256xf32>
    %11 = arith.truncf %10 : vector<16x256xf32> to vector<16x256xbf16>
    %c0_7 = arith.constant 0 : index
    %c0_8 = arith.constant 0 : index
    %12 = vector.load %arg11[%c0_7, %c0_8] : memref<144x512xbf16, #tpu.memory_space<vmem>>, vector<16x256xbf16>
    tpu.vector_store %arg11[%c0_7, %c0_8], %11 {strides = array<i32>} : memref<144x512xbf16, #tpu.memory_space<vmem>>, vector<16x256xbf16>,
    %c16_i32 = arith.constant 16 : i32
    %13 = tpu.dynamic_rotate %3 by %c16_i32 dim 1 : vector<16x256xf32>, i32 -> vector<16x256xf32>
    %c1_9 = arith.constant 1 : index
    %c0_10 = arith.constant 0 : index
    %14 = tpu.strided_load %arg8[%c1_9, %c0_10] {strides = array<i32: 0, 1>} : memref<9x256xf32, #tpu.memory_space<vmem>>, vector<16x256xf32>
    %15 = arith.mulf %13, %14 : vector<16x256xf32>
    %16 = arith.truncf %15 : vector<16x256xf32> to vector<16x256xbf16>
    %c16 = arith.constant 16 : index
    %c0_11 = arith.constant 0 : index
    %17 = vector.load %arg11[%c16, %c0_11] : memref<144x512xbf16, #tpu.memory_space<vmem>>, vector<16x256xbf16>
    tpu.vector_store %arg11[%c16, %c0_11], %16 {strides = array<i32>} : memref<144x512xbf16, #tpu.memory_space<vmem>>, vector<16x256xbf16>,
    %c15_i32 = arith.constant 15 : i32
    %18 = tpu.dynamic_rotate %3 by %c15_i32 dim 1 : vector<16x256xf32>, i32 -> vector<16x256xf32>
    %c2 = arith.constant 2 : index
    %c0_12 = arith.constant 0 : index
    %19 = tpu.strided_load %arg8[%c2, %c0_12] {strides = array<i32: 0, 1>} : memref<9x256xf32, #tpu.memory_space<vmem>>, vector<16x256xf32>
    %20 = arith.mulf %18, %19 : vector<16x256xf32>
    %21 = arith.truncf %20 : vector<16x256xf32> to vector<16x256xbf16>
    %c32 = arith.constant 32 : index
    %c0_13 = arith.constant 0 : index
    %22 = vector.load %arg11[%c32, %c0_13] : memref<144x512xbf16, #tpu.memory_space<vmem>>, vector<16x256xbf16>
    tpu.vector_store %arg11[%c32, %c0_13], %21 {strides = array<i32>} : memref<144x512xbf16, #tpu.memory_space<vmem>>, vector<16x256xbf16>,
    %c1_i32 = arith.constant 1 : i32
    %23 = tpu.dynamic_rotate %3 by %c1_i32 dim 1 : vector<16x256xf32>, i32 -> vector<16x256xf32>
    %c3 = arith.constant 3 : index
    %c0_14 = arith.constant 0 : index
    %24 = tpu.strided_load %arg8[%c3, %c0_14] {strides = array<i32: 0, 1>} : memref<9x256xf32, #tpu.memory_space<vmem>>, vector<16x256xf32>
    %25 = arith.mulf %23, %24 : vector<16x256xf32>
    %26 = arith.truncf %25 : vector<16x256xf32> to vector<16x256xbf16>
    %c48 = arith.constant 48 : index
    %c0_15 = arith.constant 0 : index
    %27 = vector.load %arg11[%c48, %c0_15] : memref<144x512xbf16, #tpu.memory_space<vmem>>, vector<16x256xbf16>
    tpu.vector_store %arg11[%c48, %c0_15], %26 {strides = array<i32>} : memref<144x512xbf16, #tpu.memory_space<vmem>>, vector<16x256xbf16>,
    %28 = arith.truncf %3 : vector<16x256xf32> to vector<16x256xbf16>
    %c64 = arith.constant 64 : index
    %c0_16 = arith.constant 0 : index
    %29 = vector.load %arg11[%c64, %c0_16] : memref<144x512xbf16, #tpu.memory_space<vmem>>, vector<16x256xbf16>
    tpu.vector_store %arg11[%c64, %c0_16], %28 {strides = array<i32>} : memref<144x512xbf16, #tpu.memory_space<vmem>>, vector<16x256xbf16>,
    %c255_i32 = arith.constant 255 : i32
    %30 = tpu.dynamic_rotate %3 by %c255_i32 dim 1 : vector<16x256xf32>, i32 -> vector<16x256xf32>
    %c5 = arith.constant 5 : index
    %c0_17 = arith.constant 0 : index
    %31 = tpu.strided_load %arg8[%c5, %c0_17] {strides = array<i32: 0, 1>} : memref<9x256xf32, #tpu.memory_space<vmem>>, vector<16x256xf32>
    %32 = arith.mulf %30, %31 : vector<16x256xf32>
    %33 = arith.truncf %32 : vector<16x256xf32> to vector<16x256xbf16>
    %c80 = arith.constant 80 : index
    %c0_18 = arith.constant 0 : index
    %34 = vector.load %arg11[%c80, %c0_18] : memref<144x512xbf16, #tpu.memory_space<vmem>>, vector<16x256xbf16>
    tpu.vector_store %arg11[%c80, %c0_18], %33 {strides = array<i32>} : memref<144x512xbf16, #tpu.memory_space<vmem>>, vector<16x256xbf16>,
    %c241_i32 = arith.constant 241 : i32
    %35 = tpu.dynamic_rotate %3 by %c241_i32 dim 1 : vector<16x256xf32>, i32 -> vector<16x256xf32>
    %c6 = arith.constant 6 : index
    %c0_19 = arith.constant 0 : index
    %36 = tpu.strided_load %arg8[%c6, %c0_19] {strides = array<i32: 0, 1>} : memref<9x256xf32, #tpu.memory_space<vmem>>, vector<16x256xf32>
    %37 = arith.mulf %35, %36 : vector<16x256xf32>
    %38 = arith.truncf %37 : vector<16x256xf32> to vector<16x256xbf16>
    %c96 = arith.constant 96 : index
    %c0_20 = arith.constant 0 : index
    %39 = vector.load %arg11[%c96, %c0_20] : memref<144x512xbf16, #tpu.memory_space<vmem>>, vector<16x256xbf16>
    tpu.vector_store %arg11[%c96, %c0_20], %38 {strides = array<i32>} : memref<144x512xbf16, #tpu.memory_space<vmem>>, vector<16x256xbf16>,
    %c240_i32 = arith.constant 240 : i32
    %40 = tpu.dynamic_rotate %3 by %c240_i32 dim 1 : vector<16x256xf32>, i32 -> vector<16x256xf32>
    %c7 = arith.constant 7 : index
    %c0_21 = arith.constant 0 : index
    %41 = tpu.strided_load %arg8[%c7, %c0_21] {strides = array<i32: 0, 1>} : memref<9x256xf32, #tpu.memory_space<vmem>>, vector<16x256xf32>
    %42 = arith.mulf %40, %41 : vector<16x256xf32>
    %43 = arith.truncf %42 : vector<16x256xf32> to vector<16x256xbf16>
    %c112 = arith.constant 112 : index
    %c0_22 = arith.constant 0 : index
    %44 = vector.load %arg11[%c112, %c0_22] : memref<144x512xbf16, #tpu.memory_space<vmem>>, vector<16x256xbf16>
    tpu.vector_store %arg11[%c112, %c0_22], %43 {strides = array<i32>} : memref<144x512xbf16, #tpu.memory_space<vmem>>, vector<16x256xbf16>,
    %c239_i32 = arith.constant 239 : i32
    %45 = tpu.dynamic_rotate %3 by %c239_i32 dim 1 : vector<16x256xf32>, i32 -> vector<16x256xf32>
    %c8 = arith.constant 8 : index
    %c0_23 = arith.constant 0 : index
    %46 = tpu.strided_load %arg8[%c8, %c0_23] {strides = array<i32: 0, 1>} : memref<9x256xf32, #tpu.memory_space<vmem>>, vector<16x256xf32>
    %47 = arith.mulf %45, %46 : vector<16x256xf32>
    %48 = arith.truncf %47 : vector<16x256xf32> to vector<16x256xbf16>
    %c128 = arith.constant 128 : index
    %c0_24 = arith.constant 0 : index
    %49 = vector.load %arg11[%c128, %c0_24] : memref<144x512xbf16, #tpu.memory_space<vmem>>, vector<16x256xbf16>
    tpu.vector_store %arg11[%c128, %c0_24], %48 {strides = array<i32>} : memref<144x512xbf16, #tpu.memory_space<vmem>>, vector<16x256xbf16>,
    %c17_i32_25 = arith.constant 17 : i32
    %50 = tpu.dynamic_rotate %7 by %c17_i32_25 dim 1 : vector<16x256xf32>, i32 -> vector<16x256xf32>
    %c0_26 = arith.constant 0 : index
    %c0_27 = arith.constant 0 : index
    %51 = tpu.strided_load %arg8[%c0_26, %c0_27] {strides = array<i32: 0, 1>} : memref<9x256xf32, #tpu.memory_space<vmem>>, vector<16x256xf32>
    %52 = arith.mulf %50, %51 : vector<16x256xf32>
    %53 = arith.truncf %52 : vector<16x256xf32> to vector<16x256xbf16>
    %c0_28 = arith.constant 0 : index
    %c256 = arith.constant 256 : index
    %54 = vector.load %arg11[%c0_28, %c256] : memref<144x512xbf16, #tpu.memory_space<vmem>>, vector<16x256xbf16>
    tpu.vector_store %arg11[%c0_28, %c256], %53 {strides = array<i32>} : memref<144x512xbf16, #tpu.memory_space<vmem>>, vector<16x256xbf16>,
    %c16_i32_29 = arith.constant 16 : i32
    %55 = tpu.dynamic_rotate %7 by %c16_i32_29 dim 1 : vector<16x256xf32>, i32 -> vector<16x256xf32>
    %c1_30 = arith.constant 1 : index
    %c0_31 = arith.constant 0 : index
    %56 = tpu.strided_load %arg8[%c1_30, %c0_31] {strides = array<i32: 0, 1>} : memref<9x256xf32, #tpu.memory_space<vmem>>, vector<16x256xf32>
    %57 = arith.mulf %55, %56 : vector<16x256xf32>
    %58 = arith.truncf %57 : vector<16x256xf32> to vector<16x256xbf16>
    %c16_32 = arith.constant 16 : index
    %c256_33 = arith.constant 256 : index
    %59 = vector.load %arg11[%c16_32, %c256_33] : memref<144x512xbf16, #tpu.memory_space<vmem>>, vector<16x256xbf16>
    tpu.vector_store %arg11[%c16_32, %c256_33], %58 {strides = array<i32>} : memref<144x512xbf16, #tpu.memory_space<vmem>>, vector<16x256xbf16>,
    %c15_i32_34 = arith.constant 15 : i32
    %60 = tpu.dynamic_rotate %7 by %c15_i32_34 dim 1 : vector<16x256xf32>, i32 -> vector<16x256xf32>
    %c2_35 = arith.constant 2 : index
    %c0_36 = arith.constant 0 : index
    %61 = tpu.strided_load %arg8[%c2_35, %c0_36] {strides = array<i32: 0, 1>} : memref<9x256xf32, #tpu.memory_space<vmem>>, vector<16x256xf32>
    %62 = arith.mulf %60, %61 : vector<16x256xf32>
    %63 = arith.truncf %62 : vector<16x256xf32> to vector<16x256xbf16>
    %c32_37 = arith.constant 32 : index
    %c256_38 = arith.constant 256 : index
    %64 = vector.load %arg11[%c32_37, %c256_38] : memref<144x512xbf16, #tpu.memory_space<vmem>>, vector<16x256xbf16>
    tpu.vector_store %arg11[%c32_37, %c256_38], %63 {strides = array<i32>} : memref<144x512xbf16, #tpu.memory_space<vmem>>, vector<16x256xbf16>,
    %c1_i32_39 = arith.constant 1 : i32
    %65 = tpu.dynamic_rotate %7 by %c1_i32_39 dim 1 : vector<16x256xf32>, i32 -> vector<16x256xf32>
    %c3_40 = arith.constant 3 : index
    %c0_41 = arith.constant 0 : index
    %66 = tpu.strided_load %arg8[%c3_40, %c0_41] {strides = array<i32: 0, 1>} : memref<9x256xf32, #tpu.memory_space<vmem>>, vector<16x256xf32>
    %67 = arith.mulf %65, %66 : vector<16x256xf32>
    %68 = arith.truncf %67 : vector<16x256xf32> to vector<16x256xbf16>
    %c48_42 = arith.constant 48 : index
    %c256_43 = arith.constant 256 : index
    %69 = vector.load %arg11[%c48_42, %c256_43] : memref<144x512xbf16, #tpu.memory_space<vmem>>, vector<16x256xbf16>
    tpu.vector_store %arg11[%c48_42, %c256_43], %68 {strides = array<i32>} : memref<144x512xbf16, #tpu.memory_space<vmem>>, vector<16x256xbf16>,
    %70 = arith.truncf %7 : vector<16x256xf32> to vector<16x256xbf16>
    %c64_44 = arith.constant 64 : index
    %c256_45 = arith.constant 256 : index
    %71 = vector.load %arg11[%c64_44, %c256_45] : memref<144x512xbf16, #tpu.memory_space<vmem>>, vector<16x256xbf16>
    tpu.vector_store %arg11[%c64_44, %c256_45], %70 {strides = array<i32>} : memref<144x512xbf16, #tpu.memory_space<vmem>>, vector<16x256xbf16>,
    %c255_i32_46 = arith.constant 255 : i32
    %72 = tpu.dynamic_rotate %7 by %c255_i32_46 dim 1 : vector<16x256xf32>, i32 -> vector<16x256xf32>
    %c5_47 = arith.constant 5 : index
    %c0_48 = arith.constant 0 : index
    %73 = tpu.strided_load %arg8[%c5_47, %c0_48] {strides = array<i32: 0, 1>} : memref<9x256xf32, #tpu.memory_space<vmem>>, vector<16x256xf32>
    %74 = arith.mulf %72, %73 : vector<16x256xf32>
    %75 = arith.truncf %74 : vector<16x256xf32> to vector<16x256xbf16>
    %c80_49 = arith.constant 80 : index
    %c256_50 = arith.constant 256 : index
    %76 = vector.load %arg11[%c80_49, %c256_50] : memref<144x512xbf16, #tpu.memory_space<vmem>>, vector<16x256xbf16>
    tpu.vector_store %arg11[%c80_49, %c256_50], %75 {strides = array<i32>} : memref<144x512xbf16, #tpu.memory_space<vmem>>, vector<16x256xbf16>,
    %c241_i32_51 = arith.constant 241 : i32
    %77 = tpu.dynamic_rotate %7 by %c241_i32_51 dim 1 : vector<16x256xf32>, i32 -> vector<16x256xf32>
    %c6_52 = arith.constant 6 : index
    %c0_53 = arith.constant 0 : index
    %78 = tpu.strided_load %arg8[%c6_52, %c0_53] {strides = array<i32: 0, 1>} : memref<9x256xf32, #tpu.memory_space<vmem>>, vector<16x256xf32>
    %79 = arith.mulf %77, %78 : vector<16x256xf32>
    %80 = arith.truncf %79 : vector<16x256xf32> to vector<16x256xbf16>
    %c96_54 = arith.constant 96 : index
    %c256_55 = arith.constant 256 : index
    %81 = vector.load %arg11[%c96_54, %c256_55] : memref<144x512xbf16, #tpu.memory_space<vmem>>, vector<16x256xbf16>
    tpu.vector_store %arg11[%c96_54, %c256_55], %80 {strides = array<i32>} : memref<144x512xbf16, #tpu.memory_space<vmem>>, vector<16x256xbf16>,
    %c240_i32_56 = arith.constant 240 : i32
    %82 = tpu.dynamic_rotate %7 by %c240_i32_56 dim 1 : vector<16x256xf32>, i32 -> vector<16x256xf32>
    %c7_57 = arith.constant 7 : index
    %c0_58 = arith.constant 0 : index
    %83 = tpu.strided_load %arg8[%c7_57, %c0_58] {strides = array<i32: 0, 1>} : memref<9x256xf32, #tpu.memory_space<vmem>>, vector<16x256xf32>
    %84 = arith.mulf %82, %83 : vector<16x256xf32>
    %85 = arith.truncf %84 : vector<16x256xf32> to vector<16x256xbf16>
    %c112_59 = arith.constant 112 : index
    %c256_60 = arith.constant 256 : index
    %86 = vector.load %arg11[%c112_59, %c256_60] : memref<144x512xbf16, #tpu.memory_space<vmem>>, vector<16x256xbf16>
    tpu.vector_store %arg11[%c112_59, %c256_60], %85 {strides = array<i32>} : memref<144x512xbf16, #tpu.memory_space<vmem>>, vector<16x256xbf16>,
    %c239_i32_61 = arith.constant 239 : i32
    %87 = tpu.dynamic_rotate %7 by %c239_i32_61 dim 1 : vector<16x256xf32>, i32 -> vector<16x256xf32>
    %c8_62 = arith.constant 8 : index
    %c0_63 = arith.constant 0 : index
    %88 = tpu.strided_load %arg8[%c8_62, %c0_63] {strides = array<i32: 0, 1>} : memref<9x256xf32, #tpu.memory_space<vmem>>, vector<16x256xf32>
    %89 = arith.mulf %87, %88 : vector<16x256xf32>
    %90 = arith.truncf %89 : vector<16x256xf32> to vector<16x256xbf16>
    %c128_64 = arith.constant 128 : index
    %c256_65 = arith.constant 256 : index
    %91 = vector.load %arg11[%c128_64, %c256_65] : memref<144x512xbf16, #tpu.memory_space<vmem>>, vector<16x256xbf16>
    tpu.vector_store %arg11[%c128_64, %c256_65], %90 {strides = array<i32>} : memref<144x512xbf16, #tpu.memory_space<vmem>>, vector<16x256xbf16>,
    %c0_66 = arith.constant 0 : index
    %c0_67 = arith.constant 0 : index
    %92 = vector.load %arg2[%c0_66, %c0_67] : memref<8x144xbf16, #tpu.memory_space<vmem>>, vector<8x144xbf16>
    %c0_68 = arith.constant 0 : index
    %c0_69 = arith.constant 0 : index
    %93 = vector.load %arg11[%c0_68, %c0_69] : memref<144x512xbf16, #tpu.memory_space<vmem>>, vector<144x512xbf16>
    %cst_70 = arith.constant dense<0.000000e+00> : vector<8x512xf32>
    %94 = tpu.matmul %92, %93, %cst_70 {dimension_numbers = #tpu.dot_dimension_numbers<[1], [0], [0], [1], [0, 0, 1, 1], [], []>} : vector<8x144xbf16>, vector<144x512xbf16>, vector<8x512xf32> -> vector<8x512xf32>
    %c0_71 = arith.constant 0 : index
    %c0_72 = arith.constant 0 : index
    %95 = vector.load %arg3[%c0_71, %c0_72] : memref<8x1xf32, #tpu.memory_space<vmem>>, vector<8x1xf32>
    %96 = vector.broadcast %95 : vector<8x1xf32> to vector<8x512xf32>
    %97 = arith.addf %94, %96 : vector<8x512xf32>
    %cst_73 = arith.constant 2.000000e-01 : f32
    %98 = vector.broadcast %cst_73 : f32 to vector<8x512xf32>
    %99 = arith.mulf %98, %97 : vector<8x512xf32>
    %100 = arith.maximumf %97, %99 : vector<8x512xf32>
    %cst_74 = arith.constant 0.000000e+00 : f32
    %101 = vector.broadcast %cst_74 : f32 to vector<8x512xf32>
    %102 = tpu.concatenate %100, %101 in 0 : vector<8x512xf32>, vector<8x512xf32> -> vector<16x512xf32>
    %103 = vector.extract_strided_slice %102 {offsets = [0, 0], sizes = [16, 256], strides = [1, 1]} : vector<16x512xf32> to vector<16x256xf32>
    %104 = vector.extract_strided_slice %102 {offsets = [0, 256], sizes = [16, 256], strides = [1, 1]} : vector<16x512xf32> to vector<16x256xf32>
    %c17_i32_75 = arith.constant 17 : i32
    %105 = tpu.dynamic_rotate %103 by %c17_i32_75 dim 1 : vector<16x256xf32>, i32 -> vector<16x256xf32>
    %c0_76 = arith.constant 0 : index
    %c0_77 = arith.constant 0 : index
    %106 = tpu.strided_load %arg9[%c0_76, %c0_77] {strides = array<i32: 0, 1>} : memref<9x256xf32, #tpu.memory_space<vmem>>, vector<16x256xf32>
    %107 = arith.mulf %105, %106 : vector<16x256xf32>
    %108 = arith.truncf %107 : vector<16x256xf32> to vector<16x256xbf16>
    %c0_78 = arith.constant 0 : index
    %c0_79 = arith.constant 0 : index
    %109 = vector.load %arg12[%c0_78, %c0_79] : memref<144x512xbf16, #tpu.memory_space<vmem>>, vector<16x256xbf16>
    tpu.vector_store %arg12[%c0_78, %c0_79], %108 {strides = array<i32>} : memref<144x512xbf16, #tpu.memory_space<vmem>>, vector<16x256xbf16>,
    %c16_i32_80 = arith.constant 16 : i32
    %110 = tpu.dynamic_rotate %103 by %c16_i32_80 dim 1 : vector<16x256xf32>, i32 -> vector<16x256xf32>
    %c1_81 = arith.constant 1 : index
    %c0_82 = arith.constant 0 : index
    %111 = tpu.strided_load %arg9[%c1_81, %c0_82] {strides = array<i32: 0, 1>} : memref<9x256xf32, #tpu.memory_space<vmem>>, vector<16x256xf32>
    %112 = arith.mulf %110, %111 : vector<16x256xf32>
    %113 = arith.truncf %112 : vector<16x256xf32> to vector<16x256xbf16>
    %c16_83 = arith.constant 16 : index
    %c0_84 = arith.constant 0 : index
    %114 = vector.load %arg12[%c16_83, %c0_84] : memref<144x512xbf16, #tpu.memory_space<vmem>>, vector<16x256xbf16>
    tpu.vector_store %arg12[%c16_83, %c0_84], %113 {strides = array<i32>} : memref<144x512xbf16, #tpu.memory_space<vmem>>, vector<16x256xbf16>,
    %c15_i32_85 = arith.constant 15 : i32
    %115 = tpu.dynamic_rotate %103 by %c15_i32_85 dim 1 : vector<16x256xf32>, i32 -> vector<16x256xf32>
    %c2_86 = arith.constant 2 : index
    %c0_87 = arith.constant 0 : index
    %116 = tpu.strided_load %arg9[%c2_86, %c0_87] {strides = array<i32: 0, 1>} : memref<9x256xf32, #tpu.memory_space<vmem>>, vector<16x256xf32>
    %117 = arith.mulf %115, %116 : vector<16x256xf32>
    %118 = arith.truncf %117 : vector<16x256xf32> to vector<16x256xbf16>
    %c32_88 = arith.constant 32 : index
    %c0_89 = arith.constant 0 : index
    %119 = vector.load %arg12[%c32_88, %c0_89] : memref<144x512xbf16, #tpu.memory_space<vmem>>, vector<16x256xbf16>
    tpu.vector_store %arg12[%c32_88, %c0_89], %118 {strides = array<i32>} : memref<144x512xbf16, #tpu.memory_space<vmem>>, vector<16x256xbf16>,
    %c1_i32_90 = arith.constant 1 : i32
    %120 = tpu.dynamic_rotate %103 by %c1_i32_90 dim 1 : vector<16x256xf32>, i32 -> vector<16x256xf32>
    %c3_91 = arith.constant 3 : index
    %c0_92 = arith.constant 0 : index
    %121 = tpu.strided_load %arg9[%c3_91, %c0_92] {strides = array<i32: 0, 1>} : memref<9x256xf32, #tpu.memory_space<vmem>>, vector<16x256xf32>
    %122 = arith.mulf %120, %121 : vector<16x256xf32>
    %123 = arith.truncf %122 : vector<16x256xf32> to vector<16x256xbf16>
    %c48_93 = arith.constant 48 : index
    %c0_94 = arith.constant 0 : index
    %124 = vector.load %arg12[%c48_93, %c0_94] : memref<144x512xbf16, #tpu.memory_space<vmem>>, vector<16x256xbf16>
    tpu.vector_store %arg12[%c48_93, %c0_94], %123 {strides = array<i32>} : memref<144x512xbf16, #tpu.memory_space<vmem>>, vector<16x256xbf16>,
    %125 = arith.truncf %103 : vector<16x256xf32> to vector<16x256xbf16>
    %c64_95 = arith.constant 64 : index
    %c0_96 = arith.constant 0 : index
    %126 = vector.load %arg12[%c64_95, %c0_96] : memref<144x512xbf16, #tpu.memory_space<vmem>>, vector<16x256xbf16>
    tpu.vector_store %arg12[%c64_95, %c0_96], %125 {strides = array<i32>} : memref<144x512xbf16, #tpu.memory_space<vmem>>, vector<16x256xbf16>,
    %c255_i32_97 = arith.constant 255 : i32
    %127 = tpu.dynamic_rotate %103 by %c255_i32_97 dim 1 : vector<16x256xf32>, i32 -> vector<16x256xf32>
    %c5_98 = arith.constant 5 : index
    %c0_99 = arith.constant 0 : index
    %128 = tpu.strided_load %arg9[%c5_98, %c0_99] {strides = array<i32: 0, 1>} : memref<9x256xf32, #tpu.memory_space<vmem>>, vector<16x256xf32>
    %129 = arith.mulf %127, %128 : vector<16x256xf32>
    %130 = arith.truncf %129 : vector<16x256xf32> to vector<16x256xbf16>
    %c80_100 = arith.constant 80 : index
    %c0_101 = arith.constant 0 : index
    %131 = vector.load %arg12[%c80_100, %c0_101] : memref<144x512xbf16, #tpu.memory_space<vmem>>, vector<16x256xbf16>
    tpu.vector_store %arg12[%c80_100, %c0_101], %130 {strides = array<i32>} : memref<144x512xbf16, #tpu.memory_space<vmem>>, vector<16x256xbf16>,
    %c241_i32_102 = arith.constant 241 : i32
    %132 = tpu.dynamic_rotate %103 by %c241_i32_102 dim 1 : vector<16x256xf32>, i32 -> vector<16x256xf32>
    %c6_103 = arith.constant 6 : index
    %c0_104 = arith.constant 0 : index
    %133 = tpu.strided_load %arg9[%c6_103, %c0_104] {strides = array<i32: 0, 1>} : memref<9x256xf32, #tpu.memory_space<vmem>>, vector<16x256xf32>
    %134 = arith.mulf %132, %133 : vector<16x256xf32>
    %135 = arith.truncf %134 : vector<16x256xf32> to vector<16x256xbf16>
    %c96_105 = arith.constant 96 : index
    %c0_106 = arith.constant 0 : index
    %136 = vector.load %arg12[%c96_105, %c0_106] : memref<144x512xbf16, #tpu.memory_space<vmem>>, vector<16x256xbf16>
    tpu.vector_store %arg12[%c96_105, %c0_106], %135 {strides = array<i32>} : memref<144x512xbf16, #tpu.memory_space<vmem>>, vector<16x256xbf16>,
    %c240_i32_107 = arith.constant 240 : i32
    %137 = tpu.dynamic_rotate %103 by %c240_i32_107 dim 1 : vector<16x256xf32>, i32 -> vector<16x256xf32>
    %c7_108 = arith.constant 7 : index
    %c0_109 = arith.constant 0 : index
    %138 = tpu.strided_load %arg9[%c7_108, %c0_109] {strides = array<i32: 0, 1>} : memref<9x256xf32, #tpu.memory_space<vmem>>, vector<16x256xf32>
    %139 = arith.mulf %137, %138 : vector<16x256xf32>
    %140 = arith.truncf %139 : vector<16x256xf32> to vector<16x256xbf16>
    %c112_110 = arith.constant 112 : index
    %c0_111 = arith.constant 0 : index
    %141 = vector.load %arg12[%c112_110, %c0_111] : memref<144x512xbf16, #tpu.memory_space<vmem>>, vector<16x256xbf16>
    tpu.vector_store %arg12[%c112_110, %c0_111], %140 {strides = array<i32>} : memref<144x512xbf16, #tpu.memory_space<vmem>>, vector<16x256xbf16>,
    %c239_i32_112 = arith.constant 239 : i32
    %142 = tpu.dynamic_rotate %103 by %c239_i32_112 dim 1 : vector<16x256xf32>, i32 -> vector<16x256xf32>
    %c8_113 = arith.constant 8 : index
    %c0_114 = arith.constant 0 : index
    %143 = tpu.strided_load %arg9[%c8_113, %c0_114] {strides = array<i32: 0, 1>} : memref<9x256xf32, #tpu.memory_space<vmem>>, vector<16x256xf32>
    %144 = arith.mulf %142, %143 : vector<16x256xf32>
    %145 = arith.truncf %144 : vector<16x256xf32> to vector<16x256xbf16>
    %c128_115 = arith.constant 128 : index
    %c0_116 = arith.constant 0 : index
    %146 = vector.load %arg12[%c128_115, %c0_116] : memref<144x512xbf16, #tpu.memory_space<vmem>>, vector<16x256xbf16>
    tpu.vector_store %arg12[%c128_115, %c0_116], %145 {strides = array<i32>} : memref<144x512xbf16, #tpu.memory_space<vmem>>, vector<16x256xbf16>,
    %c17_i32_117 = arith.constant 17 : i32
    %147 = tpu.dynamic_rotate %104 by %c17_i32_117 dim 1 : vector<16x256xf32>, i32 -> vector<16x256xf32>
    %c0_118 = arith.constant 0 : index
    %c0_119 = arith.constant 0 : index
    %148 = tpu.strided_load %arg9[%c0_118, %c0_119] {strides = array<i32: 0, 1>} : memref<9x256xf32, #tpu.memory_space<vmem>>, vector<16x256xf32>
    %149 = arith.mulf %147, %148 : vector<16x256xf32>
    %150 = arith.truncf %149 : vector<16x256xf32> to vector<16x256xbf16>
    %c0_120 = arith.constant 0 : index
    %c256_121 = arith.constant 256 : index
    %151 = vector.load %arg12[%c0_120, %c256_121] : memref<144x512xbf16, #tpu.memory_space<vmem>>, vector<16x256xbf16>
    tpu.vector_store %arg12[%c0_120, %c256_121], %150 {strides = array<i32>} : memref<144x512xbf16, #tpu.memory_space<vmem>>, vector<16x256xbf16>,
    %c16_i32_122 = arith.constant 16 : i32
    %152 = tpu.dynamic_rotate %104 by %c16_i32_122 dim 1 : vector<16x256xf32>, i32 -> vector<16x256xf32>
    %c1_123 = arith.constant 1 : index
    %c0_124 = arith.constant 0 : index
    %153 = tpu.strided_load %arg9[%c1_123, %c0_124] {strides = array<i32: 0, 1>} : memref<9x256xf32, #tpu.memory_space<vmem>>, vector<16x256xf32>
    %154 = arith.mulf %152, %153 : vector<16x256xf32>
    %155 = arith.truncf %154 : vector<16x256xf32> to vector<16x256xbf16>
    %c16_125 = arith.constant 16 : index
    %c256_126 = arith.constant 256 : index
    %156 = vector.load %arg12[%c16_125, %c256_126] : memref<144x512xbf16, #tpu.memory_space<vmem>>, vector<16x256xbf16>
    tpu.vector_store %arg12[%c16_125, %c256_126], %155 {strides = array<i32>} : memref<144x512xbf16, #tpu.memory_space<vmem>>, vector<16x256xbf16>,
    %c15_i32_127 = arith.constant 15 : i32
    %157 = tpu.dynamic_rotate %104 by %c15_i32_127 dim 1 : vector<16x256xf32>, i32 -> vector<16x256xf32>
    %c2_128 = arith.constant 2 : index
    %c0_129 = arith.constant 0 : index
    %158 = tpu.strided_load %arg9[%c2_128, %c0_129] {strides = array<i32: 0, 1>} : memref<9x256xf32, #tpu.memory_space<vmem>>, vector<16x256xf32>
    %159 = arith.mulf %157, %158 : vector<16x256xf32>
    %160 = arith.truncf %159 : vector<16x256xf32> to vector<16x256xbf16>
    %c32_130 = arith.constant 32 : index
    %c256_131 = arith.constant 256 : index
    %161 = vector.load %arg12[%c32_130, %c256_131] : memref<144x512xbf16, #tpu.memory_space<vmem>>, vector<16x256xbf16>
    tpu.vector_store %arg12[%c32_130, %c256_131], %160 {strides = array<i32>} : memref<144x512xbf16, #tpu.memory_space<vmem>>, vector<16x256xbf16>,
    %c1_i32_132 = arith.constant 1 : i32
    %162 = tpu.dynamic_rotate %104 by %c1_i32_132 dim 1 : vector<16x256xf32>, i32 -> vector<16x256xf32>
    %c3_133 = arith.constant 3 : index
    %c0_134 = arith.constant 0 : index
    %163 = tpu.strided_load %arg9[%c3_133, %c0_134] {strides = array<i32: 0, 1>} : memref<9x256xf32, #tpu.memory_space<vmem>>, vector<16x256xf32>
    %164 = arith.mulf %162, %163 : vector<16x256xf32>
    %165 = arith.truncf %164 : vector<16x256xf32> to vector<16x256xbf16>
    %c48_135 = arith.constant 48 : index
    %c256_136 = arith.constant 256 : index
    %166 = vector.load %arg12[%c48_135, %c256_136] : memref<144x512xbf16, #tpu.memory_space<vmem>>, vector<16x256xbf16>
    tpu.vector_store %arg12[%c48_135, %c256_136], %165 {strides = array<i32>} : memref<144x512xbf16, #tpu.memory_space<vmem>>, vector<16x256xbf16>,
    %167 = arith.truncf %104 : vector<16x256xf32> to vector<16x256xbf16>
    %c64_137 = arith.constant 64 : index
    %c256_138 = arith.constant 256 : index
    %168 = vector.load %arg12[%c64_137, %c256_138] : memref<144x512xbf16, #tpu.memory_space<vmem>>, vector<16x256xbf16>
    tpu.vector_store %arg12[%c64_137, %c256_138], %167 {strides = array<i32>} : memref<144x512xbf16, #tpu.memory_space<vmem>>, vector<16x256xbf16>,
    %c255_i32_139 = arith.constant 255 : i32
    %169 = tpu.dynamic_rotate %104 by %c255_i32_139 dim 1 : vector<16x256xf32>, i32 -> vector<16x256xf32>
    %c5_140 = arith.constant 5 : index
    %c0_141 = arith.constant 0 : index
    %170 = tpu.strided_load %arg9[%c5_140, %c0_141] {strides = array<i32: 0, 1>} : memref<9x256xf32, #tpu.memory_space<vmem>>, vector<16x256xf32>
    %171 = arith.mulf %169, %170 : vector<16x256xf32>
    %172 = arith.truncf %171 : vector<16x256xf32> to vector<16x256xbf16>
    %c80_142 = arith.constant 80 : index
    %c256_143 = arith.constant 256 : index
    %173 = vector.load %arg12[%c80_142, %c256_143] : memref<144x512xbf16, #tpu.memory_space<vmem>>, vector<16x256xbf16>
    tpu.vector_store %arg12[%c80_142, %c256_143], %172 {strides = array<i32>} : memref<144x512xbf16, #tpu.memory_space<vmem>>, vector<16x256xbf16>,
    %c241_i32_144 = arith.constant 241 : i32
    %174 = tpu.dynamic_rotate %104 by %c241_i32_144 dim 1 : vector<16x256xf32>, i32 -> vector<16x256xf32>
    %c6_145 = arith.constant 6 : index
    %c0_146 = arith.constant 0 : index
    %175 = tpu.strided_load %arg9[%c6_145, %c0_146] {strides = array<i32: 0, 1>} : memref<9x256xf32, #tpu.memory_space<vmem>>, vector<16x256xf32>
    %176 = arith.mulf %174, %175 : vector<16x256xf32>
    %177 = arith.truncf %176 : vector<16x256xf32> to vector<16x256xbf16>
    %c96_147 = arith.constant 96 : index
    %c256_148 = arith.constant 256 : index
    %178 = vector.load %arg12[%c96_147, %c256_148] : memref<144x512xbf16, #tpu.memory_space<vmem>>, vector<16x256xbf16>
    tpu.vector_store %arg12[%c96_147, %c256_148], %177 {strides = array<i32>} : memref<144x512xbf16, #tpu.memory_space<vmem>>, vector<16x256xbf16>,
    %c240_i32_149 = arith.constant 240 : i32
    %179 = tpu.dynamic_rotate %104 by %c240_i32_149 dim 1 : vector<16x256xf32>, i32 -> vector<16x256xf32>
    %c7_150 = arith.constant 7 : index
    %c0_151 = arith.constant 0 : index
    %180 = tpu.strided_load %arg9[%c7_150, %c0_151] {strides = array<i32: 0, 1>} : memref<9x256xf32, #tpu.memory_space<vmem>>, vector<16x256xf32>
    %181 = arith.mulf %179, %180 : vector<16x256xf32>
    %182 = arith.truncf %181 : vector<16x256xf32> to vector<16x256xbf16>
    %c112_152 = arith.constant 112 : index
    %c256_153 = arith.constant 256 : index
    %183 = vector.load %arg12[%c112_152, %c256_153] : memref<144x512xbf16, #tpu.memory_space<vmem>>, vector<16x256xbf16>
    tpu.vector_store %arg12[%c112_152, %c256_153], %182 {strides = array<i32>} : memref<144x512xbf16, #tpu.memory_space<vmem>>, vector<16x256xbf16>,
    %c239_i32_154 = arith.constant 239 : i32
    %184 = tpu.dynamic_rotate %104 by %c239_i32_154 dim 1 : vector<16x256xf32>, i32 -> vector<16x256xf32>
    %c8_155 = arith.constant 8 : index
    %c0_156 = arith.constant 0 : index
    %185 = tpu.strided_load %arg9[%c8_155, %c0_156] {strides = array<i32: 0, 1>} : memref<9x256xf32, #tpu.memory_space<vmem>>, vector<16x256xf32>
    %186 = arith.mulf %184, %185 : vector<16x256xf32>
    %187 = arith.truncf %186 : vector<16x256xf32> to vector<16x256xbf16>
    %c128_157 = arith.constant 128 : index
    %c256_158 = arith.constant 256 : index
    %188 = vector.load %arg12[%c128_157, %c256_158] : memref<144x512xbf16, #tpu.memory_space<vmem>>, vector<16x256xbf16>
    tpu.vector_store %arg12[%c128_157, %c256_158], %187 {strides = array<i32>} : memref<144x512xbf16, #tpu.memory_space<vmem>>, vector<16x256xbf16>,
    %c0_159 = arith.constant 0 : index
    %c0_160 = arith.constant 0 : index
    %189 = vector.load %arg4[%c0_159, %c0_160] : memref<8x144xbf16, #tpu.memory_space<vmem>>, vector<8x144xbf16>
    %c0_161 = arith.constant 0 : index
    %c0_162 = arith.constant 0 : index
    %190 = vector.load %arg12[%c0_161, %c0_162] : memref<144x512xbf16, #tpu.memory_space<vmem>>, vector<144x512xbf16>
    %cst_163 = arith.constant dense<0.000000e+00> : vector<8x512xf32>
    %191 = tpu.matmul %189, %190, %cst_163 {dimension_numbers = #tpu.dot_dimension_numbers<[1], [0], [0], [1], [0, 0, 1, 1], [], []>} : vector<8x144xbf16>, vector<144x512xbf16>, vector<8x512xf32> -> vector<8x512xf32>
    %c0_164 = arith.constant 0 : index
    %c0_165 = arith.constant 0 : index
    %192 = vector.load %arg5[%c0_164, %c0_165] : memref<8x1xf32, #tpu.memory_space<vmem>>, vector<8x1xf32>
    %193 = vector.broadcast %192 : vector<8x1xf32> to vector<8x512xf32>
    %194 = arith.addf %191, %193 : vector<8x512xf32>
    %cst_166 = arith.constant 2.000000e-01 : f32
    %195 = vector.broadcast %cst_166 : f32 to vector<8x512xf32>
    %196 = arith.mulf %195, %194 : vector<8x512xf32>
    %197 = arith.maximumf %194, %196 : vector<8x512xf32>
    %c64_167 = arith.constant 64 : index
    %c0_168 = arith.constant 0 : index
    %198 = vector.load %arg11[%c64_167, %c0_168] : memref<144x512xbf16, #tpu.memory_space<vmem>>, vector<16x512xbf16>
    %c0_169 = arith.constant 0 : index
    %c0_170 = arith.constant 0 : index
    %199 = vector.load %arg6[%c0_169, %c0_170] : memref<8x16xbf16, #tpu.memory_space<vmem>>, vector<8x16xbf16>
    %cst_171 = arith.constant dense<0.000000e+00> : vector<8x512xf32>
    %200 = tpu.matmul %199, %198, %cst_171 {dimension_numbers = #tpu.dot_dimension_numbers<[1], [0], [0], [1], [0, 0, 1, 1], [], []>} : vector<8x16xbf16>, vector<16x512xbf16>, vector<8x512xf32> -> vector<8x512xf32>
    %c0_172 = arith.constant 0 : index
    %c0_173 = arith.constant 0 : index
    %201 = vector.load %arg7[%c0_172, %c0_173] : memref<8x1xf32, #tpu.memory_space<vmem>>, vector<8x1xf32>
    %202 = vector.broadcast %201 : vector<8x1xf32> to vector<8x512xf32>
    %203 = arith.addf %200, %202 : vector<8x512xf32>
    %204 = arith.addf %203, %197 : vector<8x512xf32>
    %cst_174 = arith.constant 0.707106769 : f32
    %205 = vector.broadcast %cst_174 : f32 to vector<8x512xf32>
    %206 = arith.mulf %204, %205 : vector<8x512xf32>
    %207 = vector.extract_strided_slice %206 {offsets = [0, 0], sizes = [8, 256], strides = [1, 1]} : vector<8x512xf32> to vector<8x256xf32>
    %c0_175 = arith.constant 0 : index
    %c0_176 = arith.constant 0 : index
    %c0_177 = arith.constant 0 : index
    %208 = vector.load %arg10[%c0_175, %c0_176, %c0_177] : memref<2x8x256xf32, #tpu.memory_space<vmem>>, vector<1x8x256xf32>
    %209 = vector.shape_cast %208 : vector<1x8x256xf32> to vector<8x256xf32>
    %210 = vector.shape_cast %207 : vector<8x256xf32> to vector<1x8x256xf32>
    tpu.vector_store %arg10[%c0_175, %c0_176, %c0_177], %210 {strides = array<i32>} : memref<2x8x256xf32, #tpu.memory_space<vmem>>, vector<1x8x256xf32>,
    %211 = vector.extract_strided_slice %206 {offsets = [0, 256], sizes = [8, 256], strides = [1, 1]} : vector<8x512xf32> to vector<8x256xf32>
    %c1_178 = arith.constant 1 : index
    %c0_179 = arith.constant 0 : index
    %c0_180 = arith.constant 0 : index
    %212 = vector.load %arg10[%c1_178, %c0_179, %c0_180] : memref<2x8x256xf32, #tpu.memory_space<vmem>>, vector<1x8x256xf32>
    %213 = vector.shape_cast %212 : vector<1x8x256xf32> to vector<8x256xf32>
    %214 = vector.shape_cast %211 : vector<8x256xf32> to vector<1x8x256xf32>
    tpu.vector_store %arg10[%c1_178, %c0_179, %c0_180], %214 {strides = array<i32>} : memref<2x8x256xf32, #tpu.memory_space<vmem>>, vector<1x8x256xf32>,
    return
  }
  func.func @transform_0(%arg0: i32) -> (i32, i32, i32) {
    %c0_i32 = arith.constant 0 : i32
    %c0_i32_0 = arith.constant 0 : i32
    %c0_i32_1 = arith.constant 0 : i32
    return %arg0, %c0_i32, %c0_i32_0 : i32, i32, i32
  }
  func.func @transform_1(%arg0: i32) -> (i32, i32) {
    %c0_i32 = arith.constant 0 : i32
    %c0_i32_0 = arith.constant 0 : i32
    %c0_i32_1 = arith.constant 0 : i32
    return %c0_i32, %c0_i32_0 : i32, i32
  }
  func.func @transform_2(%arg0: i32) -> (i32, i32) {
    %c0_i32 = arith.constant 0 : i32
    %c0_i32_0 = arith.constant 0 : i32
    %c0_i32_1 = arith.constant 0 : i32
    return %c0_i32, %c0_i32_0 : i32, i32
  }
  func.func @transform_3(%arg0: i32) -> (i32, i32) {
    %c0_i32 = arith.constant 0 : i32
    %c0_i32_0 = arith.constant 0 : i32
    %c0_i32_1 = arith.constant 0 : i32
    return %c0_i32, %c0_i32_0 : i32, i32
  }
  func.func @transform_4(%arg0: i32) -> (i32, i32) {
    %c0_i32 = arith.constant 0 : i32
    %c0_i32_0 = arith.constant 0 : i32
    %c0_i32_1 = arith.constant 0 : i32
    return %c0_i32, %c0_i32_0 : i32, i32
  }
  func.func @transform_5(%arg0: i32) -> (i32, i32) {
    %c0_i32 = arith.constant 0 : i32
    %c0_i32_0 = arith.constant 0 : i32
    %c0_i32_1 = arith.constant 0 : i32
    return %c0_i32, %c0_i32_0 : i32, i32
  }
  func.func @transform_6(%arg0: i32) -> (i32, i32) {
    %c0_i32 = arith.constant 0 : i32
    %c0_i32_0 = arith.constant 0 : i32
    %c0_i32_1 = arith.constant 0 : i32
    return %c0_i32, %c0_i32_0 : i32, i32
  }
  func.func @transform_7(%arg0: i32) -> (i32, i32) {
    %c0_i32 = arith.constant 0 : i32
    %c0_i32_0 = arith.constant 0 : i32
    %c0_i32_1 = arith.constant 0 : i32
    return %c0_i32, %c0_i32_0 : i32, i32
  }
  func.func @transform_8(%arg0: i32) -> (i32, i32) {
    %c0_i32 = arith.constant 0 : i32
    %c0_i32_0 = arith.constant 0 : i32
    %c0_i32_1 = arith.constant 0 : i32
    return %c0_i32, %c0_i32_0 : i32, i32
  }
  func.func @transform_9(%arg0: i32) -> (i32, i32, i32) {
    %c0_i32 = arith.constant 0 : i32
    %c0_i32_0 = arith.constant 0 : i32
    %c0_i32_1 = arith.constant 0 : i32
    return %arg0, %c0_i32, %c0_i32_0 : i32, i32, i32
  }
}

module attributes {stable_mosaic.version = 11 : i64} {
  func.func @kernel(%arg0: i32, %arg1: memref<2x4x256xf32, #tpu.memory_space<vmem>>, %arg2: memref<8x144xbf16, #tpu.memory_space<vmem>>, %arg3: memref<8x1xf32, #tpu.memory_space<vmem>>, %arg4: memref<8x144xbf16, #tpu.memory_space<vmem>>, %arg5: memref<8x1xf32, #tpu.memory_space<vmem>>, %arg6: memref<8x16xbf16, #tpu.memory_space<vmem>>, %arg7: memref<8x1xf32, #tpu.memory_space<vmem>>, %arg8: memref<9x256xf32, #tpu.memory_space<vmem>>, %arg9: memref<9x256xf32, #tpu.memory_space<vmem>>, %arg10: memref<2x8x256xf32, #tpu.memory_space<vmem>>, %arg11: memref<144x512xbf16, #tpu.memory_space<vmem>>, %arg12: memref<144x512xbf16, #tpu.memory_space<vmem>>) attributes {dimension_semantics = [#tpu.dimension_semantics<parallel>], iteration_bounds = array<i64: 2>, scalar_prefetch = 0 : i64, scratch_operands = 2 : i64, tpu.core_type = #tpu.core_type<tc>, window_params = [{transform_indices = @transform_0, window_bounds = array<i64: 2, 4, 256>}, {pipeline_mode = #tpu.pipeline_mode<synchronous>, transform_indices = @transform_1, window_bounds = array<i64: 8, 144>}, {pipeline_mode = #tpu.pipeline_mode<synchronous>, transform_indices = @transform_2, window_bounds = array<i64: 8, 1>}, {pipeline_mode = #tpu.pipeline_mode<synchronous>, transform_indices = @transform_3, window_bounds = array<i64: 8, 144>}, {pipeline_mode = #tpu.pipeline_mode<synchronous>, transform_indices = @transform_4, window_bounds = array<i64: 8, 1>}, {pipeline_mode = #tpu.pipeline_mode<synchronous>, transform_indices = @transform_5, window_bounds = array<i64: 8, 16>}, {pipeline_mode = #tpu.pipeline_mode<synchronous>, transform_indices = @transform_6, window_bounds = array<i64: 8, 1>}, {pipeline_mode = #tpu.pipeline_mode<synchronous>, transform_indices = @transform_7, window_bounds = array<i64: 9, 256>}, {pipeline_mode = #tpu.pipeline_mode<synchronous>, transform_indices = @transform_8, window_bounds = array<i64: 9, 256>}, {transform_indices = @transform_9, window_bounds = array<i64: 2, 8, 256>}]} {
    %c0 = arith.constant 0 : index
    %c0_0 = arith.constant 0 : index
    %c0_1 = arith.constant 0 : index
    %0 = vector.load %arg1[%c0, %c0_0, %c0_1] : memref<2x4x256xf32, #tpu.memory_space<vmem>>, vector<1x4x256xf32>
    %1 = vector.shape_cast %0 : vector<1x4x256xf32> to vector<4x256xf32>
    %cst = arith.constant 0.000000e+00 : f32
    %2 = vector.broadcast %cst : f32 to vector<12x256xf32>
    %3 = tpu.concatenate %1, %2 in 0 : vector<4x256xf32>, vector<12x256xf32> -> vector<16x256xf32>
    %c1 = arith.constant 1 : index
    %c0_2 = arith.constant 0 : index
    %c0_3 = arith.constant 0 : index
    %4 = vector.load %arg1[%c1, %c0_2, %c0_3] : memref<2x4x256xf32, #tpu.memory_space<vmem>>, vector<1x4x256xf32>
    %5 = vector.shape_cast %4 : vector<1x4x256xf32> to vector<4x256xf32>
    %cst_4 = arith.constant 0.000000e+00 : f32
    %6 = vector.broadcast %cst_4 : f32 to vector<12x256xf32>
    %7 = tpu.concatenate %5, %6 in 0 : vector<4x256xf32>, vector<12x256xf32> -> vector<16x256xf32>
    %c17_i32 = arith.constant 17 : i32
    %8 = tpu.dynamic_rotate %3 by %c17_i32 dim 1 : vector<16x256xf32>, i32 -> vector<16x256xf32>
    %c0_5 = arith.constant 0 : index
    %c0_6 = arith.constant 0 : index
    %9 = vector.load %arg8[%c0_5, %c0_6] : memref<9x256xf32, #tpu.memory_space<vmem>>, vector<1x256xf32>
    %10 = vector.broadcast %9 : vector<1x256xf32> to vector<16x256xf32>
    %11 = arith.mulf %8, %10 : vector<16x256xf32>
    %12 = arith.truncf %11 : vector<16x256xf32> to vector<16x256xbf16>
    %c0_7 = arith.constant 0 : index
    %c0_8 = arith.constant 0 : index
    %13 = vector.load %arg11[%c0_7, %c0_8] : memref<144x512xbf16, #tpu.memory_space<vmem>>, vector<16x256xbf16>
    tpu.vector_store %arg11[%c0_7, %c0_8], %12 {strides = array<i32>} : memref<144x512xbf16, #tpu.memory_space<vmem>>, vector<16x256xbf16>,
    %c16_i32 = arith.constant 16 : i32
    %14 = tpu.dynamic_rotate %3 by %c16_i32 dim 1 : vector<16x256xf32>, i32 -> vector<16x256xf32>
    %c1_9 = arith.constant 1 : index
    %c0_10 = arith.constant 0 : index
    %15 = vector.load %arg8[%c1_9, %c0_10] : memref<9x256xf32, #tpu.memory_space<vmem>>, vector<1x256xf32>
    %16 = vector.broadcast %15 : vector<1x256xf32> to vector<16x256xf32>
    %17 = arith.mulf %14, %16 : vector<16x256xf32>
    %18 = arith.truncf %17 : vector<16x256xf32> to vector<16x256xbf16>
    %c16 = arith.constant 16 : index
    %c0_11 = arith.constant 0 : index
    %19 = vector.load %arg11[%c16, %c0_11] : memref<144x512xbf16, #tpu.memory_space<vmem>>, vector<16x256xbf16>
    tpu.vector_store %arg11[%c16, %c0_11], %18 {strides = array<i32>} : memref<144x512xbf16, #tpu.memory_space<vmem>>, vector<16x256xbf16>,
    %c15_i32 = arith.constant 15 : i32
    %20 = tpu.dynamic_rotate %3 by %c15_i32 dim 1 : vector<16x256xf32>, i32 -> vector<16x256xf32>
    %c2 = arith.constant 2 : index
    %c0_12 = arith.constant 0 : index
    %21 = vector.load %arg8[%c2, %c0_12] : memref<9x256xf32, #tpu.memory_space<vmem>>, vector<1x256xf32>
    %22 = vector.broadcast %21 : vector<1x256xf32> to vector<16x256xf32>
    %23 = arith.mulf %20, %22 : vector<16x256xf32>
    %24 = arith.truncf %23 : vector<16x256xf32> to vector<16x256xbf16>
    %c32 = arith.constant 32 : index
    %c0_13 = arith.constant 0 : index
    %25 = vector.load %arg11[%c32, %c0_13] : memref<144x512xbf16, #tpu.memory_space<vmem>>, vector<16x256xbf16>
    tpu.vector_store %arg11[%c32, %c0_13], %24 {strides = array<i32>} : memref<144x512xbf16, #tpu.memory_space<vmem>>, vector<16x256xbf16>,
    %c1_i32 = arith.constant 1 : i32
    %26 = tpu.dynamic_rotate %3 by %c1_i32 dim 1 : vector<16x256xf32>, i32 -> vector<16x256xf32>
    %c3 = arith.constant 3 : index
    %c0_14 = arith.constant 0 : index
    %27 = vector.load %arg8[%c3, %c0_14] : memref<9x256xf32, #tpu.memory_space<vmem>>, vector<1x256xf32>
    %28 = vector.broadcast %27 : vector<1x256xf32> to vector<16x256xf32>
    %29 = arith.mulf %26, %28 : vector<16x256xf32>
    %30 = arith.truncf %29 : vector<16x256xf32> to vector<16x256xbf16>
    %c48 = arith.constant 48 : index
    %c0_15 = arith.constant 0 : index
    %31 = vector.load %arg11[%c48, %c0_15] : memref<144x512xbf16, #tpu.memory_space<vmem>>, vector<16x256xbf16>
    tpu.vector_store %arg11[%c48, %c0_15], %30 {strides = array<i32>} : memref<144x512xbf16, #tpu.memory_space<vmem>>, vector<16x256xbf16>,
    %32 = arith.truncf %3 : vector<16x256xf32> to vector<16x256xbf16>
    %c64 = arith.constant 64 : index
    %c0_16 = arith.constant 0 : index
    %33 = vector.load %arg11[%c64, %c0_16] : memref<144x512xbf16, #tpu.memory_space<vmem>>, vector<16x256xbf16>
    tpu.vector_store %arg11[%c64, %c0_16], %32 {strides = array<i32>} : memref<144x512xbf16, #tpu.memory_space<vmem>>, vector<16x256xbf16>,
    %c255_i32 = arith.constant 255 : i32
    %34 = tpu.dynamic_rotate %3 by %c255_i32 dim 1 : vector<16x256xf32>, i32 -> vector<16x256xf32>
    %c5 = arith.constant 5 : index
    %c0_17 = arith.constant 0 : index
    %35 = vector.load %arg8[%c5, %c0_17] : memref<9x256xf32, #tpu.memory_space<vmem>>, vector<1x256xf32>
    %36 = vector.broadcast %35 : vector<1x256xf32> to vector<16x256xf32>
    %37 = arith.mulf %34, %36 : vector<16x256xf32>
    %38 = arith.truncf %37 : vector<16x256xf32> to vector<16x256xbf16>
    %c80 = arith.constant 80 : index
    %c0_18 = arith.constant 0 : index
    %39 = vector.load %arg11[%c80, %c0_18] : memref<144x512xbf16, #tpu.memory_space<vmem>>, vector<16x256xbf16>
    tpu.vector_store %arg11[%c80, %c0_18], %38 {strides = array<i32>} : memref<144x512xbf16, #tpu.memory_space<vmem>>, vector<16x256xbf16>,
    %c241_i32 = arith.constant 241 : i32
    %40 = tpu.dynamic_rotate %3 by %c241_i32 dim 1 : vector<16x256xf32>, i32 -> vector<16x256xf32>
    %c6 = arith.constant 6 : index
    %c0_19 = arith.constant 0 : index
    %41 = vector.load %arg8[%c6, %c0_19] : memref<9x256xf32, #tpu.memory_space<vmem>>, vector<1x256xf32>
    %42 = vector.broadcast %41 : vector<1x256xf32> to vector<16x256xf32>
    %43 = arith.mulf %40, %42 : vector<16x256xf32>
    %44 = arith.truncf %43 : vector<16x256xf32> to vector<16x256xbf16>
    %c96 = arith.constant 96 : index
    %c0_20 = arith.constant 0 : index
    %45 = vector.load %arg11[%c96, %c0_20] : memref<144x512xbf16, #tpu.memory_space<vmem>>, vector<16x256xbf16>
    tpu.vector_store %arg11[%c96, %c0_20], %44 {strides = array<i32>} : memref<144x512xbf16, #tpu.memory_space<vmem>>, vector<16x256xbf16>,
    %c240_i32 = arith.constant 240 : i32
    %46 = tpu.dynamic_rotate %3 by %c240_i32 dim 1 : vector<16x256xf32>, i32 -> vector<16x256xf32>
    %c7 = arith.constant 7 : index
    %c0_21 = arith.constant 0 : index
    %47 = vector.load %arg8[%c7, %c0_21] : memref<9x256xf32, #tpu.memory_space<vmem>>, vector<1x256xf32>
    %48 = vector.broadcast %47 : vector<1x256xf32> to vector<16x256xf32>
    %49 = arith.mulf %46, %48 : vector<16x256xf32>
    %50 = arith.truncf %49 : vector<16x256xf32> to vector<16x256xbf16>
    %c112 = arith.constant 112 : index
    %c0_22 = arith.constant 0 : index
    %51 = vector.load %arg11[%c112, %c0_22] : memref<144x512xbf16, #tpu.memory_space<vmem>>, vector<16x256xbf16>
    tpu.vector_store %arg11[%c112, %c0_22], %50 {strides = array<i32>} : memref<144x512xbf16, #tpu.memory_space<vmem>>, vector<16x256xbf16>,
    %c239_i32 = arith.constant 239 : i32
    %52 = tpu.dynamic_rotate %3 by %c239_i32 dim 1 : vector<16x256xf32>, i32 -> vector<16x256xf32>
    %c8 = arith.constant 8 : index
    %c0_23 = arith.constant 0 : index
    %53 = vector.load %arg8[%c8, %c0_23] : memref<9x256xf32, #tpu.memory_space<vmem>>, vector<1x256xf32>
    %54 = vector.broadcast %53 : vector<1x256xf32> to vector<16x256xf32>
    %55 = arith.mulf %52, %54 : vector<16x256xf32>
    %56 = arith.truncf %55 : vector<16x256xf32> to vector<16x256xbf16>
    %c128 = arith.constant 128 : index
    %c0_24 = arith.constant 0 : index
    %57 = vector.load %arg11[%c128, %c0_24] : memref<144x512xbf16, #tpu.memory_space<vmem>>, vector<16x256xbf16>
    tpu.vector_store %arg11[%c128, %c0_24], %56 {strides = array<i32>} : memref<144x512xbf16, #tpu.memory_space<vmem>>, vector<16x256xbf16>,
    %c17_i32_25 = arith.constant 17 : i32
    %58 = tpu.dynamic_rotate %7 by %c17_i32_25 dim 1 : vector<16x256xf32>, i32 -> vector<16x256xf32>
    %c0_26 = arith.constant 0 : index
    %c0_27 = arith.constant 0 : index
    %59 = vector.load %arg8[%c0_26, %c0_27] : memref<9x256xf32, #tpu.memory_space<vmem>>, vector<1x256xf32>
    %60 = vector.broadcast %59 : vector<1x256xf32> to vector<16x256xf32>
    %61 = arith.mulf %58, %60 : vector<16x256xf32>
    %62 = arith.truncf %61 : vector<16x256xf32> to vector<16x256xbf16>
    %c0_28 = arith.constant 0 : index
    %c256 = arith.constant 256 : index
    %63 = vector.load %arg11[%c0_28, %c256] : memref<144x512xbf16, #tpu.memory_space<vmem>>, vector<16x256xbf16>
    tpu.vector_store %arg11[%c0_28, %c256], %62 {strides = array<i32>} : memref<144x512xbf16, #tpu.memory_space<vmem>>, vector<16x256xbf16>,
    %c16_i32_29 = arith.constant 16 : i32
    %64 = tpu.dynamic_rotate %7 by %c16_i32_29 dim 1 : vector<16x256xf32>, i32 -> vector<16x256xf32>
    %c1_30 = arith.constant 1 : index
    %c0_31 = arith.constant 0 : index
    %65 = vector.load %arg8[%c1_30, %c0_31] : memref<9x256xf32, #tpu.memory_space<vmem>>, vector<1x256xf32>
    %66 = vector.broadcast %65 : vector<1x256xf32> to vector<16x256xf32>
    %67 = arith.mulf %64, %66 : vector<16x256xf32>
    %68 = arith.truncf %67 : vector<16x256xf32> to vector<16x256xbf16>
    %c16_32 = arith.constant 16 : index
    %c256_33 = arith.constant 256 : index
    %69 = vector.load %arg11[%c16_32, %c256_33] : memref<144x512xbf16, #tpu.memory_space<vmem>>, vector<16x256xbf16>
    tpu.vector_store %arg11[%c16_32, %c256_33], %68 {strides = array<i32>} : memref<144x512xbf16, #tpu.memory_space<vmem>>, vector<16x256xbf16>,
    %c15_i32_34 = arith.constant 15 : i32
    %70 = tpu.dynamic_rotate %7 by %c15_i32_34 dim 1 : vector<16x256xf32>, i32 -> vector<16x256xf32>
    %c2_35 = arith.constant 2 : index
    %c0_36 = arith.constant 0 : index
    %71 = vector.load %arg8[%c2_35, %c0_36] : memref<9x256xf32, #tpu.memory_space<vmem>>, vector<1x256xf32>
    %72 = vector.broadcast %71 : vector<1x256xf32> to vector<16x256xf32>
    %73 = arith.mulf %70, %72 : vector<16x256xf32>
    %74 = arith.truncf %73 : vector<16x256xf32> to vector<16x256xbf16>
    %c32_37 = arith.constant 32 : index
    %c256_38 = arith.constant 256 : index
    %75 = vector.load %arg11[%c32_37, %c256_38] : memref<144x512xbf16, #tpu.memory_space<vmem>>, vector<16x256xbf16>
    tpu.vector_store %arg11[%c32_37, %c256_38], %74 {strides = array<i32>} : memref<144x512xbf16, #tpu.memory_space<vmem>>, vector<16x256xbf16>,
    %c1_i32_39 = arith.constant 1 : i32
    %76 = tpu.dynamic_rotate %7 by %c1_i32_39 dim 1 : vector<16x256xf32>, i32 -> vector<16x256xf32>
    %c3_40 = arith.constant 3 : index
    %c0_41 = arith.constant 0 : index
    %77 = vector.load %arg8[%c3_40, %c0_41] : memref<9x256xf32, #tpu.memory_space<vmem>>, vector<1x256xf32>
    %78 = vector.broadcast %77 : vector<1x256xf32> to vector<16x256xf32>
    %79 = arith.mulf %76, %78 : vector<16x256xf32>
    %80 = arith.truncf %79 : vector<16x256xf32> to vector<16x256xbf16>
    %c48_42 = arith.constant 48 : index
    %c256_43 = arith.constant 256 : index
    %81 = vector.load %arg11[%c48_42, %c256_43] : memref<144x512xbf16, #tpu.memory_space<vmem>>, vector<16x256xbf16>
    tpu.vector_store %arg11[%c48_42, %c256_43], %80 {strides = array<i32>} : memref<144x512xbf16, #tpu.memory_space<vmem>>, vector<16x256xbf16>,
    %82 = arith.truncf %7 : vector<16x256xf32> to vector<16x256xbf16>
    %c64_44 = arith.constant 64 : index
    %c256_45 = arith.constant 256 : index
    %83 = vector.load %arg11[%c64_44, %c256_45] : memref<144x512xbf16, #tpu.memory_space<vmem>>, vector<16x256xbf16>
    tpu.vector_store %arg11[%c64_44, %c256_45], %82 {strides = array<i32>} : memref<144x512xbf16, #tpu.memory_space<vmem>>, vector<16x256xbf16>,
    %c255_i32_46 = arith.constant 255 : i32
    %84 = tpu.dynamic_rotate %7 by %c255_i32_46 dim 1 : vector<16x256xf32>, i32 -> vector<16x256xf32>
    %c5_47 = arith.constant 5 : index
    %c0_48 = arith.constant 0 : index
    %85 = vector.load %arg8[%c5_47, %c0_48] : memref<9x256xf32, #tpu.memory_space<vmem>>, vector<1x256xf32>
    %86 = vector.broadcast %85 : vector<1x256xf32> to vector<16x256xf32>
    %87 = arith.mulf %84, %86 : vector<16x256xf32>
    %88 = arith.truncf %87 : vector<16x256xf32> to vector<16x256xbf16>
    %c80_49 = arith.constant 80 : index
    %c256_50 = arith.constant 256 : index
    %89 = vector.load %arg11[%c80_49, %c256_50] : memref<144x512xbf16, #tpu.memory_space<vmem>>, vector<16x256xbf16>
    tpu.vector_store %arg11[%c80_49, %c256_50], %88 {strides = array<i32>} : memref<144x512xbf16, #tpu.memory_space<vmem>>, vector<16x256xbf16>,
    %c241_i32_51 = arith.constant 241 : i32
    %90 = tpu.dynamic_rotate %7 by %c241_i32_51 dim 1 : vector<16x256xf32>, i32 -> vector<16x256xf32>
    %c6_52 = arith.constant 6 : index
    %c0_53 = arith.constant 0 : index
    %91 = vector.load %arg8[%c6_52, %c0_53] : memref<9x256xf32, #tpu.memory_space<vmem>>, vector<1x256xf32>
    %92 = vector.broadcast %91 : vector<1x256xf32> to vector<16x256xf32>
    %93 = arith.mulf %90, %92 : vector<16x256xf32>
    %94 = arith.truncf %93 : vector<16x256xf32> to vector<16x256xbf16>
    %c96_54 = arith.constant 96 : index
    %c256_55 = arith.constant 256 : index
    %95 = vector.load %arg11[%c96_54, %c256_55] : memref<144x512xbf16, #tpu.memory_space<vmem>>, vector<16x256xbf16>
    tpu.vector_store %arg11[%c96_54, %c256_55], %94 {strides = array<i32>} : memref<144x512xbf16, #tpu.memory_space<vmem>>, vector<16x256xbf16>,
    %c240_i32_56 = arith.constant 240 : i32
    %96 = tpu.dynamic_rotate %7 by %c240_i32_56 dim 1 : vector<16x256xf32>, i32 -> vector<16x256xf32>
    %c7_57 = arith.constant 7 : index
    %c0_58 = arith.constant 0 : index
    %97 = vector.load %arg8[%c7_57, %c0_58] : memref<9x256xf32, #tpu.memory_space<vmem>>, vector<1x256xf32>
    %98 = vector.broadcast %97 : vector<1x256xf32> to vector<16x256xf32>
    %99 = arith.mulf %96, %98 : vector<16x256xf32>
    %100 = arith.truncf %99 : vector<16x256xf32> to vector<16x256xbf16>
    %c112_59 = arith.constant 112 : index
    %c256_60 = arith.constant 256 : index
    %101 = vector.load %arg11[%c112_59, %c256_60] : memref<144x512xbf16, #tpu.memory_space<vmem>>, vector<16x256xbf16>
    tpu.vector_store %arg11[%c112_59, %c256_60], %100 {strides = array<i32>} : memref<144x512xbf16, #tpu.memory_space<vmem>>, vector<16x256xbf16>,
    %c239_i32_61 = arith.constant 239 : i32
    %102 = tpu.dynamic_rotate %7 by %c239_i32_61 dim 1 : vector<16x256xf32>, i32 -> vector<16x256xf32>
    %c8_62 = arith.constant 8 : index
    %c0_63 = arith.constant 0 : index
    %103 = vector.load %arg8[%c8_62, %c0_63] : memref<9x256xf32, #tpu.memory_space<vmem>>, vector<1x256xf32>
    %104 = vector.broadcast %103 : vector<1x256xf32> to vector<16x256xf32>
    %105 = arith.mulf %102, %104 : vector<16x256xf32>
    %106 = arith.truncf %105 : vector<16x256xf32> to vector<16x256xbf16>
    %c128_64 = arith.constant 128 : index
    %c256_65 = arith.constant 256 : index
    %107 = vector.load %arg11[%c128_64, %c256_65] : memref<144x512xbf16, #tpu.memory_space<vmem>>, vector<16x256xbf16>
    tpu.vector_store %arg11[%c128_64, %c256_65], %106 {strides = array<i32>} : memref<144x512xbf16, #tpu.memory_space<vmem>>, vector<16x256xbf16>,
    %c0_66 = arith.constant 0 : index
    %c0_67 = arith.constant 0 : index
    %108 = vector.load %arg2[%c0_66, %c0_67] : memref<8x144xbf16, #tpu.memory_space<vmem>>, vector<8x144xbf16>
    %c0_68 = arith.constant 0 : index
    %c0_69 = arith.constant 0 : index
    %109 = vector.load %arg11[%c0_68, %c0_69] : memref<144x512xbf16, #tpu.memory_space<vmem>>, vector<144x512xbf16>
    %cst_70 = arith.constant dense<0.000000e+00> : vector<8x512xf32>
    %110 = tpu.matmul %108, %109, %cst_70 {dimension_numbers = #tpu.dot_dimension_numbers<[1], [0], [0], [1], [0, 0, 1, 1], [], []>} : vector<8x144xbf16>, vector<144x512xbf16>, vector<8x512xf32> -> vector<8x512xf32>
    %c0_71 = arith.constant 0 : index
    %c0_72 = arith.constant 0 : index
    %111 = vector.load %arg3[%c0_71, %c0_72] : memref<8x1xf32, #tpu.memory_space<vmem>>, vector<8x1xf32>
    %112 = vector.broadcast %111 : vector<8x1xf32> to vector<8x512xf32>
    %113 = arith.addf %110, %112 : vector<8x512xf32>
    %cst_73 = arith.constant 2.000000e-01 : f32
    %114 = vector.broadcast %cst_73 : f32 to vector<8x512xf32>
    %115 = arith.mulf %114, %113 : vector<8x512xf32>
    %116 = arith.maximumf %113, %115 : vector<8x512xf32>
    %cst_74 = arith.constant 0.000000e+00 : f32
    %117 = vector.broadcast %cst_74 : f32 to vector<8x512xf32>
    %118 = tpu.concatenate %116, %117 in 0 : vector<8x512xf32>, vector<8x512xf32> -> vector<16x512xf32>
    %119 = vector.extract_strided_slice %118 {offsets = [0, 0], sizes = [16, 256], strides = [1, 1]} : vector<16x512xf32> to vector<16x256xf32>
    %120 = vector.extract_strided_slice %118 {offsets = [0, 256], sizes = [16, 256], strides = [1, 1]} : vector<16x512xf32> to vector<16x256xf32>
    %c17_i32_75 = arith.constant 17 : i32
    %121 = tpu.dynamic_rotate %119 by %c17_i32_75 dim 1 : vector<16x256xf32>, i32 -> vector<16x256xf32>
    %c0_76 = arith.constant 0 : index
    %c0_77 = arith.constant 0 : index
    %122 = vector.load %arg9[%c0_76, %c0_77] : memref<9x256xf32, #tpu.memory_space<vmem>>, vector<1x256xf32>
    %123 = vector.broadcast %122 : vector<1x256xf32> to vector<16x256xf32>
    %124 = arith.mulf %121, %123 : vector<16x256xf32>
    %125 = arith.truncf %124 : vector<16x256xf32> to vector<16x256xbf16>
    %c0_78 = arith.constant 0 : index
    %c0_79 = arith.constant 0 : index
    %126 = vector.load %arg12[%c0_78, %c0_79] : memref<144x512xbf16, #tpu.memory_space<vmem>>, vector<16x256xbf16>
    tpu.vector_store %arg12[%c0_78, %c0_79], %125 {strides = array<i32>} : memref<144x512xbf16, #tpu.memory_space<vmem>>, vector<16x256xbf16>,
    %c16_i32_80 = arith.constant 16 : i32
    %127 = tpu.dynamic_rotate %119 by %c16_i32_80 dim 1 : vector<16x256xf32>, i32 -> vector<16x256xf32>
    %c1_81 = arith.constant 1 : index
    %c0_82 = arith.constant 0 : index
    %128 = vector.load %arg9[%c1_81, %c0_82] : memref<9x256xf32, #tpu.memory_space<vmem>>, vector<1x256xf32>
    %129 = vector.broadcast %128 : vector<1x256xf32> to vector<16x256xf32>
    %130 = arith.mulf %127, %129 : vector<16x256xf32>
    %131 = arith.truncf %130 : vector<16x256xf32> to vector<16x256xbf16>
    %c16_83 = arith.constant 16 : index
    %c0_84 = arith.constant 0 : index
    %132 = vector.load %arg12[%c16_83, %c0_84] : memref<144x512xbf16, #tpu.memory_space<vmem>>, vector<16x256xbf16>
    tpu.vector_store %arg12[%c16_83, %c0_84], %131 {strides = array<i32>} : memref<144x512xbf16, #tpu.memory_space<vmem>>, vector<16x256xbf16>,
    %c15_i32_85 = arith.constant 15 : i32
    %133 = tpu.dynamic_rotate %119 by %c15_i32_85 dim 1 : vector<16x256xf32>, i32 -> vector<16x256xf32>
    %c2_86 = arith.constant 2 : index
    %c0_87 = arith.constant 0 : index
    %134 = vector.load %arg9[%c2_86, %c0_87] : memref<9x256xf32, #tpu.memory_space<vmem>>, vector<1x256xf32>
    %135 = vector.broadcast %134 : vector<1x256xf32> to vector<16x256xf32>
    %136 = arith.mulf %133, %135 : vector<16x256xf32>
    %137 = arith.truncf %136 : vector<16x256xf32> to vector<16x256xbf16>
    %c32_88 = arith.constant 32 : index
    %c0_89 = arith.constant 0 : index
    %138 = vector.load %arg12[%c32_88, %c0_89] : memref<144x512xbf16, #tpu.memory_space<vmem>>, vector<16x256xbf16>
    tpu.vector_store %arg12[%c32_88, %c0_89], %137 {strides = array<i32>} : memref<144x512xbf16, #tpu.memory_space<vmem>>, vector<16x256xbf16>,
    %c1_i32_90 = arith.constant 1 : i32
    %139 = tpu.dynamic_rotate %119 by %c1_i32_90 dim 1 : vector<16x256xf32>, i32 -> vector<16x256xf32>
    %c3_91 = arith.constant 3 : index
    %c0_92 = arith.constant 0 : index
    %140 = vector.load %arg9[%c3_91, %c0_92] : memref<9x256xf32, #tpu.memory_space<vmem>>, vector<1x256xf32>
    %141 = vector.broadcast %140 : vector<1x256xf32> to vector<16x256xf32>
    %142 = arith.mulf %139, %141 : vector<16x256xf32>
    %143 = arith.truncf %142 : vector<16x256xf32> to vector<16x256xbf16>
    %c48_93 = arith.constant 48 : index
    %c0_94 = arith.constant 0 : index
    %144 = vector.load %arg12[%c48_93, %c0_94] : memref<144x512xbf16, #tpu.memory_space<vmem>>, vector<16x256xbf16>
    tpu.vector_store %arg12[%c48_93, %c0_94], %143 {strides = array<i32>} : memref<144x512xbf16, #tpu.memory_space<vmem>>, vector<16x256xbf16>,
    %145 = arith.truncf %119 : vector<16x256xf32> to vector<16x256xbf16>
    %c64_95 = arith.constant 64 : index
    %c0_96 = arith.constant 0 : index
    %146 = vector.load %arg12[%c64_95, %c0_96] : memref<144x512xbf16, #tpu.memory_space<vmem>>, vector<16x256xbf16>
    tpu.vector_store %arg12[%c64_95, %c0_96], %145 {strides = array<i32>} : memref<144x512xbf16, #tpu.memory_space<vmem>>, vector<16x256xbf16>,
    %c255_i32_97 = arith.constant 255 : i32
    %147 = tpu.dynamic_rotate %119 by %c255_i32_97 dim 1 : vector<16x256xf32>, i32 -> vector<16x256xf32>
    %c5_98 = arith.constant 5 : index
    %c0_99 = arith.constant 0 : index
    %148 = vector.load %arg9[%c5_98, %c0_99] : memref<9x256xf32, #tpu.memory_space<vmem>>, vector<1x256xf32>
    %149 = vector.broadcast %148 : vector<1x256xf32> to vector<16x256xf32>
    %150 = arith.mulf %147, %149 : vector<16x256xf32>
    %151 = arith.truncf %150 : vector<16x256xf32> to vector<16x256xbf16>
    %c80_100 = arith.constant 80 : index
    %c0_101 = arith.constant 0 : index
    %152 = vector.load %arg12[%c80_100, %c0_101] : memref<144x512xbf16, #tpu.memory_space<vmem>>, vector<16x256xbf16>
    tpu.vector_store %arg12[%c80_100, %c0_101], %151 {strides = array<i32>} : memref<144x512xbf16, #tpu.memory_space<vmem>>, vector<16x256xbf16>,
    %c241_i32_102 = arith.constant 241 : i32
    %153 = tpu.dynamic_rotate %119 by %c241_i32_102 dim 1 : vector<16x256xf32>, i32 -> vector<16x256xf32>
    %c6_103 = arith.constant 6 : index
    %c0_104 = arith.constant 0 : index
    %154 = vector.load %arg9[%c6_103, %c0_104] : memref<9x256xf32, #tpu.memory_space<vmem>>, vector<1x256xf32>
    %155 = vector.broadcast %154 : vector<1x256xf32> to vector<16x256xf32>
    %156 = arith.mulf %153, %155 : vector<16x256xf32>
    %157 = arith.truncf %156 : vector<16x256xf32> to vector<16x256xbf16>
    %c96_105 = arith.constant 96 : index
    %c0_106 = arith.constant 0 : index
    %158 = vector.load %arg12[%c96_105, %c0_106] : memref<144x512xbf16, #tpu.memory_space<vmem>>, vector<16x256xbf16>
    tpu.vector_store %arg12[%c96_105, %c0_106], %157 {strides = array<i32>} : memref<144x512xbf16, #tpu.memory_space<vmem>>, vector<16x256xbf16>,
    %c240_i32_107 = arith.constant 240 : i32
    %159 = tpu.dynamic_rotate %119 by %c240_i32_107 dim 1 : vector<16x256xf32>, i32 -> vector<16x256xf32>
    %c7_108 = arith.constant 7 : index
    %c0_109 = arith.constant 0 : index
    %160 = vector.load %arg9[%c7_108, %c0_109] : memref<9x256xf32, #tpu.memory_space<vmem>>, vector<1x256xf32>
    %161 = vector.broadcast %160 : vector<1x256xf32> to vector<16x256xf32>
    %162 = arith.mulf %159, %161 : vector<16x256xf32>
    %163 = arith.truncf %162 : vector<16x256xf32> to vector<16x256xbf16>
    %c112_110 = arith.constant 112 : index
    %c0_111 = arith.constant 0 : index
    %164 = vector.load %arg12[%c112_110, %c0_111] : memref<144x512xbf16, #tpu.memory_space<vmem>>, vector<16x256xbf16>
    tpu.vector_store %arg12[%c112_110, %c0_111], %163 {strides = array<i32>} : memref<144x512xbf16, #tpu.memory_space<vmem>>, vector<16x256xbf16>,
    %c239_i32_112 = arith.constant 239 : i32
    %165 = tpu.dynamic_rotate %119 by %c239_i32_112 dim 1 : vector<16x256xf32>, i32 -> vector<16x256xf32>
    %c8_113 = arith.constant 8 : index
    %c0_114 = arith.constant 0 : index
    %166 = vector.load %arg9[%c8_113, %c0_114] : memref<9x256xf32, #tpu.memory_space<vmem>>, vector<1x256xf32>
    %167 = vector.broadcast %166 : vector<1x256xf32> to vector<16x256xf32>
    %168 = arith.mulf %165, %167 : vector<16x256xf32>
    %169 = arith.truncf %168 : vector<16x256xf32> to vector<16x256xbf16>
    %c128_115 = arith.constant 128 : index
    %c0_116 = arith.constant 0 : index
    %170 = vector.load %arg12[%c128_115, %c0_116] : memref<144x512xbf16, #tpu.memory_space<vmem>>, vector<16x256xbf16>
    tpu.vector_store %arg12[%c128_115, %c0_116], %169 {strides = array<i32>} : memref<144x512xbf16, #tpu.memory_space<vmem>>, vector<16x256xbf16>,
    %c17_i32_117 = arith.constant 17 : i32
    %171 = tpu.dynamic_rotate %120 by %c17_i32_117 dim 1 : vector<16x256xf32>, i32 -> vector<16x256xf32>
    %c0_118 = arith.constant 0 : index
    %c0_119 = arith.constant 0 : index
    %172 = vector.load %arg9[%c0_118, %c0_119] : memref<9x256xf32, #tpu.memory_space<vmem>>, vector<1x256xf32>
    %173 = vector.broadcast %172 : vector<1x256xf32> to vector<16x256xf32>
    %174 = arith.mulf %171, %173 : vector<16x256xf32>
    %175 = arith.truncf %174 : vector<16x256xf32> to vector<16x256xbf16>
    %c0_120 = arith.constant 0 : index
    %c256_121 = arith.constant 256 : index
    %176 = vector.load %arg12[%c0_120, %c256_121] : memref<144x512xbf16, #tpu.memory_space<vmem>>, vector<16x256xbf16>
    tpu.vector_store %arg12[%c0_120, %c256_121], %175 {strides = array<i32>} : memref<144x512xbf16, #tpu.memory_space<vmem>>, vector<16x256xbf16>,
    %c16_i32_122 = arith.constant 16 : i32
    %177 = tpu.dynamic_rotate %120 by %c16_i32_122 dim 1 : vector<16x256xf32>, i32 -> vector<16x256xf32>
    %c1_123 = arith.constant 1 : index
    %c0_124 = arith.constant 0 : index
    %178 = vector.load %arg9[%c1_123, %c0_124] : memref<9x256xf32, #tpu.memory_space<vmem>>, vector<1x256xf32>
    %179 = vector.broadcast %178 : vector<1x256xf32> to vector<16x256xf32>
    %180 = arith.mulf %177, %179 : vector<16x256xf32>
    %181 = arith.truncf %180 : vector<16x256xf32> to vector<16x256xbf16>
    %c16_125 = arith.constant 16 : index
    %c256_126 = arith.constant 256 : index
    %182 = vector.load %arg12[%c16_125, %c256_126] : memref<144x512xbf16, #tpu.memory_space<vmem>>, vector<16x256xbf16>
    tpu.vector_store %arg12[%c16_125, %c256_126], %181 {strides = array<i32>} : memref<144x512xbf16, #tpu.memory_space<vmem>>, vector<16x256xbf16>,
    %c15_i32_127 = arith.constant 15 : i32
    %183 = tpu.dynamic_rotate %120 by %c15_i32_127 dim 1 : vector<16x256xf32>, i32 -> vector<16x256xf32>
    %c2_128 = arith.constant 2 : index
    %c0_129 = arith.constant 0 : index
    %184 = vector.load %arg9[%c2_128, %c0_129] : memref<9x256xf32, #tpu.memory_space<vmem>>, vector<1x256xf32>
    %185 = vector.broadcast %184 : vector<1x256xf32> to vector<16x256xf32>
    %186 = arith.mulf %183, %185 : vector<16x256xf32>
    %187 = arith.truncf %186 : vector<16x256xf32> to vector<16x256xbf16>
    %c32_130 = arith.constant 32 : index
    %c256_131 = arith.constant 256 : index
    %188 = vector.load %arg12[%c32_130, %c256_131] : memref<144x512xbf16, #tpu.memory_space<vmem>>, vector<16x256xbf16>
    tpu.vector_store %arg12[%c32_130, %c256_131], %187 {strides = array<i32>} : memref<144x512xbf16, #tpu.memory_space<vmem>>, vector<16x256xbf16>,
    %c1_i32_132 = arith.constant 1 : i32
    %189 = tpu.dynamic_rotate %120 by %c1_i32_132 dim 1 : vector<16x256xf32>, i32 -> vector<16x256xf32>
    %c3_133 = arith.constant 3 : index
    %c0_134 = arith.constant 0 : index
    %190 = vector.load %arg9[%c3_133, %c0_134] : memref<9x256xf32, #tpu.memory_space<vmem>>, vector<1x256xf32>
    %191 = vector.broadcast %190 : vector<1x256xf32> to vector<16x256xf32>
    %192 = arith.mulf %189, %191 : vector<16x256xf32>
    %193 = arith.truncf %192 : vector<16x256xf32> to vector<16x256xbf16>
    %c48_135 = arith.constant 48 : index
    %c256_136 = arith.constant 256 : index
    %194 = vector.load %arg12[%c48_135, %c256_136] : memref<144x512xbf16, #tpu.memory_space<vmem>>, vector<16x256xbf16>
    tpu.vector_store %arg12[%c48_135, %c256_136], %193 {strides = array<i32>} : memref<144x512xbf16, #tpu.memory_space<vmem>>, vector<16x256xbf16>,
    %195 = arith.truncf %120 : vector<16x256xf32> to vector<16x256xbf16>
    %c64_137 = arith.constant 64 : index
    %c256_138 = arith.constant 256 : index
    %196 = vector.load %arg12[%c64_137, %c256_138] : memref<144x512xbf16, #tpu.memory_space<vmem>>, vector<16x256xbf16>
    tpu.vector_store %arg12[%c64_137, %c256_138], %195 {strides = array<i32>} : memref<144x512xbf16, #tpu.memory_space<vmem>>, vector<16x256xbf16>,
    %c255_i32_139 = arith.constant 255 : i32
    %197 = tpu.dynamic_rotate %120 by %c255_i32_139 dim 1 : vector<16x256xf32>, i32 -> vector<16x256xf32>
    %c5_140 = arith.constant 5 : index
    %c0_141 = arith.constant 0 : index
    %198 = vector.load %arg9[%c5_140, %c0_141] : memref<9x256xf32, #tpu.memory_space<vmem>>, vector<1x256xf32>
    %199 = vector.broadcast %198 : vector<1x256xf32> to vector<16x256xf32>
    %200 = arith.mulf %197, %199 : vector<16x256xf32>
    %201 = arith.truncf %200 : vector<16x256xf32> to vector<16x256xbf16>
    %c80_142 = arith.constant 80 : index
    %c256_143 = arith.constant 256 : index
    %202 = vector.load %arg12[%c80_142, %c256_143] : memref<144x512xbf16, #tpu.memory_space<vmem>>, vector<16x256xbf16>
    tpu.vector_store %arg12[%c80_142, %c256_143], %201 {strides = array<i32>} : memref<144x512xbf16, #tpu.memory_space<vmem>>, vector<16x256xbf16>,
    %c241_i32_144 = arith.constant 241 : i32
    %203 = tpu.dynamic_rotate %120 by %c241_i32_144 dim 1 : vector<16x256xf32>, i32 -> vector<16x256xf32>
    %c6_145 = arith.constant 6 : index
    %c0_146 = arith.constant 0 : index
    %204 = vector.load %arg9[%c6_145, %c0_146] : memref<9x256xf32, #tpu.memory_space<vmem>>, vector<1x256xf32>
    %205 = vector.broadcast %204 : vector<1x256xf32> to vector<16x256xf32>
    %206 = arith.mulf %203, %205 : vector<16x256xf32>
    %207 = arith.truncf %206 : vector<16x256xf32> to vector<16x256xbf16>
    %c96_147 = arith.constant 96 : index
    %c256_148 = arith.constant 256 : index
    %208 = vector.load %arg12[%c96_147, %c256_148] : memref<144x512xbf16, #tpu.memory_space<vmem>>, vector<16x256xbf16>
    tpu.vector_store %arg12[%c96_147, %c256_148], %207 {strides = array<i32>} : memref<144x512xbf16, #tpu.memory_space<vmem>>, vector<16x256xbf16>,
    %c240_i32_149 = arith.constant 240 : i32
    %209 = tpu.dynamic_rotate %120 by %c240_i32_149 dim 1 : vector<16x256xf32>, i32 -> vector<16x256xf32>
    %c7_150 = arith.constant 7 : index
    %c0_151 = arith.constant 0 : index
    %210 = vector.load %arg9[%c7_150, %c0_151] : memref<9x256xf32, #tpu.memory_space<vmem>>, vector<1x256xf32>
    %211 = vector.broadcast %210 : vector<1x256xf32> to vector<16x256xf32>
    %212 = arith.mulf %209, %211 : vector<16x256xf32>
    %213 = arith.truncf %212 : vector<16x256xf32> to vector<16x256xbf16>
    %c112_152 = arith.constant 112 : index
    %c256_153 = arith.constant 256 : index
    %214 = vector.load %arg12[%c112_152, %c256_153] : memref<144x512xbf16, #tpu.memory_space<vmem>>, vector<16x256xbf16>
    tpu.vector_store %arg12[%c112_152, %c256_153], %213 {strides = array<i32>} : memref<144x512xbf16, #tpu.memory_space<vmem>>, vector<16x256xbf16>,
    %c239_i32_154 = arith.constant 239 : i32
    %215 = tpu.dynamic_rotate %120 by %c239_i32_154 dim 1 : vector<16x256xf32>, i32 -> vector<16x256xf32>
    %c8_155 = arith.constant 8 : index
    %c0_156 = arith.constant 0 : index
    %216 = vector.load %arg9[%c8_155, %c0_156] : memref<9x256xf32, #tpu.memory_space<vmem>>, vector<1x256xf32>
    %217 = vector.broadcast %216 : vector<1x256xf32> to vector<16x256xf32>
    %218 = arith.mulf %215, %217 : vector<16x256xf32>
    %219 = arith.truncf %218 : vector<16x256xf32> to vector<16x256xbf16>
    %c128_157 = arith.constant 128 : index
    %c256_158 = arith.constant 256 : index
    %220 = vector.load %arg12[%c128_157, %c256_158] : memref<144x512xbf16, #tpu.memory_space<vmem>>, vector<16x256xbf16>
    tpu.vector_store %arg12[%c128_157, %c256_158], %219 {strides = array<i32>} : memref<144x512xbf16, #tpu.memory_space<vmem>>, vector<16x256xbf16>,
    %c0_159 = arith.constant 0 : index
    %c0_160 = arith.constant 0 : index
    %221 = vector.load %arg4[%c0_159, %c0_160] : memref<8x144xbf16, #tpu.memory_space<vmem>>, vector<8x144xbf16>
    %c0_161 = arith.constant 0 : index
    %c0_162 = arith.constant 0 : index
    %222 = vector.load %arg12[%c0_161, %c0_162] : memref<144x512xbf16, #tpu.memory_space<vmem>>, vector<144x512xbf16>
    %cst_163 = arith.constant dense<0.000000e+00> : vector<8x512xf32>
    %223 = tpu.matmul %221, %222, %cst_163 {dimension_numbers = #tpu.dot_dimension_numbers<[1], [0], [0], [1], [0, 0, 1, 1], [], []>} : vector<8x144xbf16>, vector<144x512xbf16>, vector<8x512xf32> -> vector<8x512xf32>
    %c0_164 = arith.constant 0 : index
    %c0_165 = arith.constant 0 : index
    %224 = vector.load %arg5[%c0_164, %c0_165] : memref<8x1xf32, #tpu.memory_space<vmem>>, vector<8x1xf32>
    %225 = vector.broadcast %224 : vector<8x1xf32> to vector<8x512xf32>
    %226 = arith.addf %223, %225 : vector<8x512xf32>
    %cst_166 = arith.constant 2.000000e-01 : f32
    %227 = vector.broadcast %cst_166 : f32 to vector<8x512xf32>
    %228 = arith.mulf %227, %226 : vector<8x512xf32>
    %229 = arith.maximumf %226, %228 : vector<8x512xf32>
    %c64_167 = arith.constant 64 : index
    %c0_168 = arith.constant 0 : index
    %230 = vector.load %arg11[%c64_167, %c0_168] : memref<144x512xbf16, #tpu.memory_space<vmem>>, vector<16x512xbf16>
    %c0_169 = arith.constant 0 : index
    %c0_170 = arith.constant 0 : index
    %231 = vector.load %arg6[%c0_169, %c0_170] : memref<8x16xbf16, #tpu.memory_space<vmem>>, vector<8x16xbf16>
    %cst_171 = arith.constant dense<0.000000e+00> : vector<8x512xf32>
    %232 = tpu.matmul %231, %230, %cst_171 {dimension_numbers = #tpu.dot_dimension_numbers<[1], [0], [0], [1], [0, 0, 1, 1], [], []>} : vector<8x16xbf16>, vector<16x512xbf16>, vector<8x512xf32> -> vector<8x512xf32>
    %c0_172 = arith.constant 0 : index
    %c0_173 = arith.constant 0 : index
    %233 = vector.load %arg7[%c0_172, %c0_173] : memref<8x1xf32, #tpu.memory_space<vmem>>, vector<8x1xf32>
    %234 = vector.broadcast %233 : vector<8x1xf32> to vector<8x512xf32>
    %235 = arith.addf %232, %234 : vector<8x512xf32>
    %236 = arith.addf %235, %229 : vector<8x512xf32>
    %cst_174 = arith.constant 0.707106769 : f32
    %237 = vector.broadcast %cst_174 : f32 to vector<8x512xf32>
    %238 = arith.mulf %236, %237 : vector<8x512xf32>
    %239 = vector.extract_strided_slice %238 {offsets = [0, 0], sizes = [8, 256], strides = [1, 1]} : vector<8x512xf32> to vector<8x256xf32>
    %c0_175 = arith.constant 0 : index
    %c0_176 = arith.constant 0 : index
    %c0_177 = arith.constant 0 : index
    %240 = vector.load %arg10[%c0_175, %c0_176, %c0_177] : memref<2x8x256xf32, #tpu.memory_space<vmem>>, vector<1x8x256xf32>
    %241 = vector.shape_cast %240 : vector<1x8x256xf32> to vector<8x256xf32>
    %242 = vector.shape_cast %239 : vector<8x256xf32> to vector<1x8x256xf32>
    tpu.vector_store %arg10[%c0_175, %c0_176, %c0_177], %242 {strides = array<i32>} : memref<2x8x256xf32, #tpu.memory_space<vmem>>, vector<1x8x256xf32>,
    %243 = vector.extract_strided_slice %238 {offsets = [0, 256], sizes = [8, 256], strides = [1, 1]} : vector<8x512xf32> to vector<8x256xf32>
    %c1_178 = arith.constant 1 : index
    %c0_179 = arith.constant 0 : index
    %c0_180 = arith.constant 0 : index
    %244 = vector.load %arg10[%c1_178, %c0_179, %c0_180] : memref<2x8x256xf32, #tpu.memory_space<vmem>>, vector<1x8x256xf32>
    %245 = vector.shape_cast %244 : vector<1x8x256xf32> to vector<8x256xf32>
    %246 = vector.shape_cast %243 : vector<8x256xf32> to vector<1x8x256xf32>
    tpu.vector_store %arg10[%c1_178, %c0_179, %c0_180], %246 {strides = array<i32>} : memref<2x8x256xf32, #tpu.memory_space<vmem>>, vector<1x8x256xf32>,
    return
  }
  func.func @transform_0(%arg0: i32) -> (i32, i32, i32) {
    %c0_i32 = arith.constant 0 : i32
    %c0_i32_0 = arith.constant 0 : i32
    %c0_i32_1 = arith.constant 0 : i32
    return %arg0, %c0_i32, %c0_i32_0 : i32, i32, i32
  }
  func.func @transform_1(%arg0: i32) -> (i32, i32) {
    %c0_i32 = arith.constant 0 : i32
    %c0_i32_0 = arith.constant 0 : i32
    %c0_i32_1 = arith.constant 0 : i32
    return %c0_i32, %c0_i32_0 : i32, i32
  }
  func.func @transform_2(%arg0: i32) -> (i32, i32) {
    %c0_i32 = arith.constant 0 : i32
    %c0_i32_0 = arith.constant 0 : i32
    %c0_i32_1 = arith.constant 0 : i32
    return %c0_i32, %c0_i32_0 : i32, i32
  }
  func.func @transform_3(%arg0: i32) -> (i32, i32) {
    %c0_i32 = arith.constant 0 : i32
    %c0_i32_0 = arith.constant 0 : i32
    %c0_i32_1 = arith.constant 0 : i32
    return %c0_i32, %c0_i32_0 : i32, i32
  }
  func.func @transform_4(%arg0: i32) -> (i32, i32) {
    %c0_i32 = arith.constant 0 : i32
    %c0_i32_0 = arith.constant 0 : i32
    %c0_i32_1 = arith.constant 0 : i32
    return %c0_i32, %c0_i32_0 : i32, i32
  }
  func.func @transform_5(%arg0: i32) -> (i32, i32) {
    %c0_i32 = arith.constant 0 : i32
    %c0_i32_0 = arith.constant 0 : i32
    %c0_i32_1 = arith.constant 0 : i32
    return %c0_i32, %c0_i32_0 : i32, i32
  }
  func.func @transform_6(%arg0: i32) -> (i32, i32) {
    %c0_i32 = arith.constant 0 : i32
    %c0_i32_0 = arith.constant 0 : i32
    %c0_i32_1 = arith.constant 0 : i32
    return %c0_i32, %c0_i32_0 : i32, i32
  }
  func.func @transform_7(%arg0: i32) -> (i32, i32) {
    %c0_i32 = arith.constant 0 : i32
    %c0_i32_0 = arith.constant 0 : i32
    %c0_i32_1 = arith.constant 0 : i32
    return %c0_i32, %c0_i32_0 : i32, i32
  }
  func.func @transform_8(%arg0: i32) -> (i32, i32) {
    %c0_i32 = arith.constant 0 : i32
    %c0_i32_0 = arith.constant 0 : i32
    %c0_i32_1 = arith.constant 0 : i32
    return %c0_i32, %c0_i32_0 : i32, i32
  }
  func.func @transform_9(%arg0: i32) -> (i32, i32, i32) {
    %c0_i32 = arith.constant 0 : i32
    %c0_i32_0 = arith.constant 0 : i32
    %c0_i32_1 = arith.constant 0 : i32
    return %arg0, %c0_i32, %c0_i32_0 : i32, i32, i32
  }
}

</mosaic_0001>

<llo_original>
// kernel: tpu_custom_call.1
$region0: #{tpu_custom_call.1}
  #allocation0 [shape = 'u32[]', space=smem, size = 0x4, offset = 0x4, fixed_abs, tag = 'smem constant byte address 0x4 - core index']
  #allocation1 [shape = 'u32[72,128]{1,0:T(1,128)}', space=vmem, size = 0x9000, scoped, tag = 'internal scratch']
  #allocation2 [shape = 'bf16[144,512]{1,0:T(8,128)(2,1)}', space=vmem, size = 0x24000, scoped, tag = 'scratch operand']
  #allocation3 [shape = 'bf16[144,512]{1,0:T(8,128)(2,1)}', space=vmem, size = 0x24000, scoped, tag = 'scratch operand']
  %s0 = inlined_call_operand.hbm [shape: f32[4,4,256], index: 0, kind: input, shape index: {}]
  %s1 = inlined_call_operand.vmem [shape: bf16[8,144], index: 1, kind: input, shape index: {}]
  %s2 = inlined_call_operand.vmem [shape: f32[8,1], index: 2, kind: input, shape index: {}]
  %s3 = inlined_call_operand.vmem [shape: bf16[8,144], index: 3, kind: input, shape index: {}]
  %s4 = inlined_call_operand.vmem [shape: f32[8,1], index: 4, kind: input, shape index: {}]
  %s5 = inlined_call_operand.vmem [shape: bf16[8,16], index: 5, kind: input, shape index: {}]
  %s6 = inlined_call_operand.vmem [shape: f32[8,1], index: 6, kind: input, shape index: {}]
  %s7 = inlined_call_operand.hbm [shape: f32[9,256], index: 7, kind: input, shape index: {}]
  %s8 = inlined_call_operand.hbm [shape: f32[9,256], index: 8, kind: input, shape index: {}]
  %s9 = inlined_call_operand.hbm [shape: f32[4,8,256], index: 9, kind: output, shape index: {}]
  %s10 = sld [smem:[#allocation0]]
  $region81: #{tpu_custom_call.1} parent=0
    _
  %s12 = ssub.s32 1, %s10
  %s13 = scalar_select 0, %s12, %s10
  $region1: #{tpu_custom_call.1} parent=0
    #allocation4 [shape = 'u8[16384]{0}', space=vmem, size = 0x4000, scoped, tag = 'input window, operand 0']
    #allocation5 [shape = 's32[2]{0}', space=sflag, size = 0x8, scoped, tag = 'scoped memory for tpu_custom_call.1']
    #allocation6 [shape = 's32[2]{0}', space=sflag, size = 0x8, scoped, tag = 'scoped memory for tpu_custom_call.1']
    #allocation7 [shape = 'u8[16384]{0}', space=vmem, size = 0x4000, scoped, tag = 'input window, operand 7, single buffered']
    #allocation8 [shape = 's32[1]{0}', space=sflag, size = 0x4, scoped, tag = 'scoped memory for tpu_custom_call.1']
    #allocation9 [shape = 'u8[16384]{0}', space=vmem, size = 0x4000, scoped, tag = 'input window, operand 8, single buffered']
    #allocation10 [shape = 'u8[32768]{0}', space=vmem, size = 0x8000, scoped, tag = 'output window, operand 0']
    %14 = vsyncpa [#allocation5], 0
    %s15 = scalar_lea.sflag [#allocation5], 1
    %16 = vsyncpa %s15, 0
    %17 = vsyncpa [#allocation8], 0
    %18 = vsyncpa [#allocation6], 0
    %s19 = scalar_lea.sflag [#allocation6], 1
    %20 = vsyncpa %s19, 0
    loop: start=0, step=1, limit=4
    $region2: #{tpu_custom_call.1} parent=1 // loop_pre_header
      _
    $region3: #{tpu_custom_call.1} parent=1 // loop_header
      %s22 = sphi 0, %s26
      %p23 = scmp.ge.s32.totalorder %s22, 4
      %s32 = sphi 0, %s34
      %s35 = sphi 0, %s32
      %s36 = sphi 0, %s35
      %s52 = sphi 0, %s36
      %s56 = sphi 0, %s56
      %s58 = sphi 0, %s56
      %s59 = sphi 0, %s58
      %s73 = sphi 0, %s59
      %s77 = sphi 0, %s77
      %s79 = sphi 0, %s77
      %s80 = sphi 0, %s79
      %s94 = sphi 0, %s80
      %s98 = sphi 0, %s98
      %s100 = sphi 0, %s98
      %s101 = sphi 0, %s100
      %s115 = sphi 0, %s101
      %s119 = sphi 0, %s119
      %s121 = sphi 0, %s119
      %s122 = sphi 0, %s121
      %s136 = sphi 0, %s122
      %s140 = sphi 0, %s140
      %s142 = sphi 0, %s140
      %s143 = sphi 0, %s142
      %s157 = sphi 0, %s143
      %s161 = sphi 0, %s161
      %s163 = sphi 0, %s161
      %s164 = sphi 0, %s163
      %s178 = sphi 0, %s164
      %s182 = sphi 0, %s182
      %s184 = sphi 0, %s182
      %s185 = sphi 0, %s184
      %s199 = sphi 0, %s185
      %s203 = sphi 0, %s203
      %s205 = sphi 0, %s203
      %s206 = sphi 0, %s205
      %s220 = sphi 0, %s206
      %s226 = sphi 0, %s228
      %s229 = sphi 0, %s226
      %s230 = sphi 0, %s229
      %s246 = sphi 0, %s230
    $region4: #{tpu_custom_call.1} parent=1 // loop_header_branch
      %25 = sbr.rel (%p23) target = $region8
    $region5: #{tpu_custom_call.1} parent=1 // loop_body
      %s27 = ssub.s32 %s22, 1
      %s28 = ssub.s32 %s22, 2
      %s29 = sadd.s32 %s22, 1
      %s30 = ssub.s32 %s22, %s29
      %p31 = scmp.eq.s32.totalorder %s30, 0
      %s33 = sadd.s32 %s32, 1
      %s34 = scalar_select %p31, %s32, %s33
      %p37 = pneg %p31
      %p38 = scmp.eq.s32.totalorder %s22, 1
      %p39 = por %p37, %p38
      %p40 = scmp.ne.s32.totalorder %s32, %s35
      %p41 = scmp.eq.s32.totalorder %s22, 0
      %p42 = por %p40, %p41
      %p43 = scmp.ne.s32.totalorder %s32, %s35
      %p44 = scmp.eq.s32.totalorder %s27, 1
      %p45 = por %p43, %p44
      %p46 = scmp.ne.s32.totalorder %s35, %s36
      %p47 = scmp.eq.s32.totalorder %s27, 0
      %p48 = por %p46, %p47
      %p49 = scmp.ne.s32.totalorder %s35, %s36
      %p50 = scmp.eq.s32.totalorder %s28, 1
      %p51 = por %p49, %p50
      %p53 = scmp.ne.s32.totalorder %s36, %s52
      %p54 = scmp.eq.s32.totalorder %s28, 0
      %p55 = por %p53, %p54
      %s57 = sadd.s32 %s56, 1
      %p60 = scmp.eq.s32.totalorder %s22, 1
      %p61 = scmp.ne.s32.totalorder %s56, %s58
      %p62 = scmp.eq.s32.totalorder %s22, 0
      %p63 = por %p61, %p62
      %p64 = scmp.ne.s32.totalorder %s56, %s58
      %p65 = scmp.eq.s32.totalorder %s27, 1
      %p66 = por %p64, %p65
      %p67 = scmp.ne.s32.totalorder %s58, %s59
      %p68 = scmp.eq.s32.totalorder %s27, 0
      %p69 = por %p67, %p68
      %p70 = scmp.ne.s32.totalorder %s58, %s59
      %p71 = scmp.eq.s32.totalorder %s28, 1
      %p72 = por %p70, %p71
      %p74 = scmp.ne.s32.totalorder %s59, %s73
      %p75 = scmp.eq.s32.totalorder %s28, 0
      %p76 = por %p74, %p75
      %s78 = sadd.s32 %s77, 1
      %p81 = scmp.eq.s32.totalorder %s22, 1
      %p82 = scmp.ne.s32.totalorder %s77, %s79
      %p83 = scmp.eq.s32.totalorder %s22, 0
      %p84 = por %p82, %p83
      %p85 = scmp.ne.s32.totalorder %s77, %s79
      %p86 = scmp.eq.s32.totalorder %s27, 1
      %p87 = por %p85, %p86
      %p88 = scmp.ne.s32.totalorder %s79, %s80
      %p89 = scmp.eq.s32.totalorder %s27, 0
      %p90 = por %p88, %p89
      %p91 = scmp.ne.s32.totalorder %s79, %s80
      %p92 = scmp.eq.s32.totalorder %s28, 1
      %p93 = por %p91, %p92
      %p95 = scmp.ne.s32.totalorder %s80, %s94
      %p96 = scmp.eq.s32.totalorder %s28, 0
      %p97 = por %p95, %p96
      %s99 = sadd.s32 %s98, 1
      %p102 = scmp.eq.s32.totalorder %s22, 1
      %p103 = scmp.ne.s32.totalorder %s98, %s100
      %p104 = scmp.eq.s32.totalorder %s22, 0
      %p105 = por %p103, %p104
      %p106 = scmp.ne.s32.totalorder %s98, %s100
      %p107 = scmp.eq.s32.totalorder %s27, 1
      %p108 = por %p106, %p107
      %p109 = scmp.ne.s32.totalorder %s100, %s101
      %p110 = scmp.eq.s32.totalorder %s27, 0
      %p111 = por %p109, %p110
      %p112 = scmp.ne.s32.totalorder %s100, %s101
      %p113 = scmp.eq.s32.totalorder %s28, 1
      %p114 = por %p112, %p113
      %p116 = scmp.ne.s32.totalorder %s101, %s115
      %p117 = scmp.eq.s32.totalorder %s28, 0
      %p118 = por %p116, %p117
      %s120 = sadd.s32 %s119, 1
      %p123 = scmp.eq.s32.totalorder %s22, 1
      %p124 = scmp.ne.s32.totalorder %s119, %s121
      %p125 = scmp.eq.s32.totalorder %s22, 0
      %p126 = por %p124, %p125
      %p127 = scmp.ne.s32.totalorder %s119, %s121
      %p128 = scmp.eq.s32.totalorder %s27, 1
      %p129 = por %p127, %p128
      %p130 = scmp.ne.s32.totalorder %s121, %s122
      %p131 = scmp.eq.s32.totalorder %s27, 0
      %p132 = por %p130, %p131
      %p133 = scmp.ne.s32.totalorder %s121, %s122
      %p134 = scmp.eq.s32.totalorder %s28, 1
      %p135 = por %p133, %p134
      %p137 = scmp.ne.s32.totalorder %s122, %s136
      %p138 = scmp.eq.s32.totalorder %s28, 0
      %p139 = por %p137, %p138
      %s141 = sadd.s32 %s140, 1
      %p144 = scmp.eq.s32.totalorder %s22, 1
      %p145 = scmp.ne.s32.totalorder %s140, %s142
      %p146 = scmp.eq.s32.totalorder %s22, 0
      %p147 = por %p145, %p146
      %p148 = scmp.ne.s32.totalorder %s140, %s142
      %p149 = scmp.eq.s32.totalorder %s27, 1
      %p150 = por %p148, %p149
      %p151 = scmp.ne.s32.totalorder %s142, %s143
      %p152 = scmp.eq.s32.totalorder %s27, 0
      %p153 = por %p151, %p152
      %p154 = scmp.ne.s32.totalorder %s142, %s143
      %p155 = scmp.eq.s32.totalorder %s28, 1
      %p156 = por %p154, %p155
      %p158 = scmp.ne.s32.totalorder %s143, %s157
      %p159 = scmp.eq.s32.totalorder %s28, 0
      %p160 = por %p158, %p159
      %s162 = sadd.s32 %s161, 1
      %p165 = scmp.eq.s32.totalorder %s22, 1
      %p166 = scmp.ne.s32.totalorder %s161, %s163
      %p167 = scmp.eq.s32.totalorder %s22, 0
      %p168 = por %p166, %p167
      %p169 = scmp.ne.s32.totalorder %s161, %s163
      %p170 = scmp.eq.s32.totalorder %s27, 1
      %p171 = por %p169, %p170
      %p172 = scmp.ne.s32.totalorder %s163, %s164
      %p173 = scmp.eq.s32.totalorder %s27, 0
      %p174 = por %p172, %p173
      %p175 = scmp.ne.s32.totalorder %s163, %s164
      %p176 = scmp.eq.s32.totalorder %s28, 1
      %p177 = por %p175, %p176
      %p179 = scmp.ne.s32.totalorder %s164, %s178
      %p180 = scmp.eq.s32.totalorder %s28, 0
      %p181 = por %p179, %p180
      %s183 = sadd.s32 %s182, 1
      %p186 = scmp.eq.s32.totalorder %s22, 1
      %p187 = scmp.ne.s32.totalorder %s182, %s184
      %p188 = scmp.eq.s32.totalorder %s22, 0
      %p189 = por %p187, %p188
      %p190 = scmp.ne.s32.totalorder %s182, %s184
      %p191 = scmp.eq.s32.totalorder %s27, 1
      %p192 = por %p190, %p191
      %p193 = scmp.ne.s32.totalorder %s184, %s185
      %p194 = scmp.eq.s32.totalorder %s27, 0
      %p195 = por %p193, %p194
      %p196 = scmp.ne.s32.totalorder %s184, %s185
      %p197 = scmp.eq.s32.totalorder %s28, 1
      %p198 = por %p196, %p197
      %p200 = scmp.ne.s32.totalorder %s185, %s199
      %p201 = scmp.eq.s32.totalorder %s28, 0
      %p202 = por %p200, %p201
      %s204 = sadd.s32 %s203, 1
      %p207 = scmp.eq.s32.totalorder %s22, 1
      %p208 = scmp.ne.s32.totalorder %s203, %s205
      %p209 = scmp.eq.s32.totalorder %s22, 0
      %p210 = por %p208, %p209
      %p211 = scmp.ne.s32.totalorder %s203, %s205
      %p212 = scmp.eq.s32.totalorder %s27, 1
      %p213 = por %p211, %p212
      %p214 = scmp.ne.s32.totalorder %s205, %s206
      %p215 = scmp.eq.s32.totalorder %s27, 0
      %p216 = por %p214, %p215
      %p217 = scmp.ne.s32.totalorder %s205, %s206
      %p218 = scmp.eq.s32.totalorder %s28, 1
      %p219 = por %p217, %p218
      %p221 = scmp.ne.s32.totalorder %s206, %s220
      %p222 = scmp.eq.s32.totalorder %s28, 0
      %p223 = por %p221, %p222
      %s224 = ssub.s32 %s22, %s29
      %p225 = scmp.eq.s32.totalorder %s224, 0
      %s227 = sadd.s32 %s226, 1
      %s228 = scalar_select %p225, %s226, %s227
      %p231 = pneg %p225
      %p232 = scmp.eq.s32.totalorder %s22, 1
      %p233 = por %p231, %p232
      %p234 = scmp.ne.s32.totalorder %s226, %s229
      %p235 = scmp.eq.s32.totalorder %s22, 0
      %p236 = por %p234, %p235
      %p237 = scmp.ne.s32.totalorder %s226, %s229
      %p238 = scmp.eq.s32.totalorder %s27, 1
      %p239 = por %p237, %p238
      %p240 = scmp.ne.s32.totalorder %s229, %s230
      %p241 = scmp.eq.s32.totalorder %s27, 0
      %p242 = por %p240, %p241
      %p243 = scmp.ne.s32.totalorder %s229, %s230
      %p244 = scmp.eq.s32.totalorder %s28, 1
      %p245 = por %p243, %p244
      %p247 = scmp.ne.s32.totalorder %s230, %s246
      %p248 = scmp.eq.s32.totalorder %s28, 0
      %p249 = por %p247, %p248
      %p250 = scmp.le.s32.totalorder 1, %s22
      %p251 = scmp.lt.s32.totalorder %s22, 3
      %p252 = pnand %p250, %p251
      %p253 = pneg %p252
      // Predicated region
      $region9: #{tpu_custom_call.1} parent=5 // pred_check
        _
      $region10: #{tpu_custom_call.1} parent=5 // pred_check_branch
        %255 = sbr.rel (%p252) target = $region12
      $region11: #{tpu_custom_call.1} parent=5 // pred_region
        %s256 = ssub.s32 %s22, 1
        // Predicated region
        $region13: #{tpu_custom_call.1} parent=11 // pred_check
          %p257 = pneg %p69
        $region14: #{tpu_custom_call.1} parent=11 // pred_check_branch
          %259 = sbr.rel (%p257) target = $region16
        $region15: #{tpu_custom_call.1} parent=11 // pred_region
          _
        $region16: #{tpu_custom_call.1} parent=11 // pred_fallthru
          _
        // Predicated region
        $region17: #{tpu_custom_call.1} parent=11 // pred_check
          %p260 = pneg %p90
        $region18: #{tpu_custom_call.1} parent=11 // pred_check_branch
          %262 = sbr.rel (%p260) target = $region20
        $region19: #{tpu_custom_call.1} parent=11 // pred_region
          _
        $region20: #{tpu_custom_call.1} parent=11 // pred_fallthru
          _
        // Predicated region
        $region21: #{tpu_custom_call.1} parent=11 // pred_check
          %p263 = pneg %p111
        $region22: #{tpu_custom_call.1} parent=11 // pred_check_branch
          %265 = sbr.rel (%p263) target = $region24
        $region23: #{tpu_custom_call.1} parent=11 // pred_region
          _
        $region24: #{tpu_custom_call.1} parent=11 // pred_fallthru
          _
        // Predicated region
        $region25: #{tpu_custom_call.1} parent=11 // pred_check
          %p266 = pneg %p132
        $region26: #{tpu_custom_call.1} parent=11 // pred_check_branch
          %268 = sbr.rel (%p266) target = $region28
        $region27: #{tpu_custom_call.1} parent=11 // pred_region
          _
        $region28: #{tpu_custom_call.1} parent=11 // pred_fallthru
          _
        // Predicated region
        $region29: #{tpu_custom_call.1} parent=11 // pred_check
          %p269 = pneg %p153
        $region30: #{tpu_custom_call.1} parent=11 // pred_check_branch
          %271 = sbr.rel (%p269) target = $region32
        $region31: #{tpu_custom_call.1} parent=11 // pred_region
          _
        $region32: #{tpu_custom_call.1} parent=11 // pred_fallthru
          _
        // Predicated region
        $region33: #{tpu_custom_call.1} parent=11 // pred_check
          %p272 = pneg %p174
        $region34: #{tpu_custom_call.1} parent=11 // pred_check_branch
          %274 = sbr.rel (%p272) target = $region36
        $region35: #{tpu_custom_call.1} parent=11 // pred_region
          _
        $region36: #{tpu_custom_call.1} parent=11 // pred_fallthru
          _
        // Predicated region
        $region37: #{tpu_custom_call.1} parent=11 // pred_check
          %p275 = pneg %p195
        $region38: #{tpu_custom_call.1} parent=11 // pred_check_branch
          %277 = sbr.rel (%p275) target = $region40
        $region39: #{tpu_custom_call.1} parent=11 // pred_region
          %279 = vsyncadd [#allocation8], 0
          %s280 = sshll.u32 %s7, 4
          %s281 = int_to_ptr.hbm [resolvable:$true] %s280
          %s282 = sshll.u32 [#allocation7], 4
          %s283 = int_to_ptr.vmem [resolvable:$true] %s282
          %288 = dma.hbm_to_vmem [thread:$0]  %s281, 512, %s283, [#allocation8], 256, 256, 16
        $region40: #{tpu_custom_call.1} parent=11 // pred_fallthru
          _
        // Predicated region
        $region41: #{tpu_custom_call.1} parent=11 // pred_check
          %p289 = pneg %p216
        $region42: #{tpu_custom_call.1} parent=11 // pred_check_branch
          %291 = sbr.rel (%p289) target = $region44
        $region43: #{tpu_custom_call.1} parent=11 // pred_region
          %293 = vsyncadd [#allocation8], 0
          %s294 = sshll.u32 %s8, 4
          %s295 = int_to_ptr.hbm [resolvable:$true] %s294
          %s296 = sshll.u32 [#allocation9], 4
          %s297 = int_to_ptr.vmem [resolvable:$true] %s296
          %302 = dma.hbm_to_vmem [thread:$0]  %s295, 512, %s297, [#allocation8], 256, 256, 16
        $region44: #{tpu_custom_call.1} parent=11 // pred_fallthru
          _
      $region12: #{tpu_custom_call.1} parent=5 // pred_fallthru
        _
      %p303 = scmp.lt.s32.totalorder %s22, 2
      // Predicated region
      $region45: #{tpu_custom_call.1} parent=5 // pred_check
        %p304 = pneg %p303
      $region46: #{tpu_custom_call.1} parent=5 // pred_check_branch
        %306 = sbr.rel (%p304) target = $region48
      $region47: #{tpu_custom_call.1} parent=5 // pred_region
        // Predicated region
        $region49: #{tpu_custom_call.1} parent=47 // pred_check
          %p307 = pneg %p42
        $region50: #{tpu_custom_call.1} parent=47 // pred_check_branch
          %309 = sbr.rel (%p307) target = $region52
        $region51: #{tpu_custom_call.1} parent=47 // pred_region
          %s310 = sand.u32 %s32, 1
          %s311 = scalar_lea.sflag [#allocation5], %s310
          %s312 = sand.u32 %s32, 1
          %s313 = smul.addr %s312, 16
          %s314 = scalar_lea.vmem [#allocation4], %s313
          %s315 = smul.u32 2, %s22
          %317 = vsyncadd %s311, 0
          %s318 = smul.addr %s315, 2
          %s319 = smul.addr %s318, 4
          %s320 = scalar_lea.hbm %s0, %s319
          %s321 = sshll.u32 %s320, 4
          %s322 = int_to_ptr.hbm [resolvable:$true] %s321
          %s323 = sshll.u32 %s314, 4
          %s324 = int_to_ptr.vmem [resolvable:$true] %s323
          %329 = dma.hbm_to_vmem [thread:$0]  %s322, 256, %s324, %s311, 128, 128, 8
        $region52: #{tpu_custom_call.1} parent=47 // pred_fallthru
          _
      $region48: #{tpu_custom_call.1} parent=5 // pred_fallthru
        _
      %p330 = scmp.le.s32.totalorder 1, %s22
      %p331 = scmp.lt.s32.totalorder %s22, 3
      %p332 = pnand %p330, %p331
      %p333 = pneg %p332
      // Predicated region
      $region53: #{tpu_custom_call.1} parent=5 // pred_check
        _
      $region54: #{tpu_custom_call.1} parent=5 // pred_check_branch
        %335 = sbr.rel (%p332) target = $region56
      $region55: #{tpu_custom_call.1} parent=5 // pred_region
        %s336 = ssub.s32 %s22, 1
        %s337 = sand.u32 %s35, 1
        %s338 = scalar_lea.sflag [#allocation5], %s337
        %s339 = sand.u32 %s35, 1
        %s340 = smul.addr %s339, 16
        %s341 = scalar_lea.vmem [#allocation4], %s340
        // Predicated region
        $region57: #{tpu_custom_call.1} parent=55 // pred_check
          %p342 = pneg %p48
        $region58: #{tpu_custom_call.1} parent=55 // pred_check_branch
          %344 = sbr.rel (%p342) target = $region60
        $region59: #{tpu_custom_call.1} parent=55 // pred_region
          %346 = dma.done %s338, 256
        $region60: #{tpu_custom_call.1} parent=55 // pred_fallthru
          _
        // Predicated region
        $region61: #{tpu_custom_call.1} parent=55 // pred_check
          %p347 = pneg %p195
        $region62: #{tpu_custom_call.1} parent=55 // pred_check_branch
          %349 = sbr.rel (%p347) target = $region64
        $region63: #{tpu_custom_call.1} parent=55 // pred_region
          %351 = dma.done [#allocation8], 512
        $region64: #{tpu_custom_call.1} parent=55 // pred_fallthru
          _
        // Predicated region
        $region65: #{tpu_custom_call.1} parent=55 // pred_check
          %p352 = pneg %p216
        $region66: #{tpu_custom_call.1} parent=55 // pred_check_branch
          %354 = sbr.rel (%p352) target = $region68
        $region67: #{tpu_custom_call.1} parent=55 // pred_region
          %356 = dma.done [#allocation8], 512
        $region68: #{tpu_custom_call.1} parent=55 // pred_fallthru
          _
        %s357 = sand.u32 %s35, 1
        %s358 = scalar_lea.sflag [#allocation5], %s357
        %s359 = sand.u32 %s35, 1
        %s360 = smul.addr %s359, 16
        %s361 = scalar_lea.vmem [#allocation4], %s360
        %p362 = pneg %p48
        %p363 = pneg %p45
        %p364 = pneg %p69
        %p365 = pneg %p66
        %p366 = pneg %p90
        %p367 = pneg %p87
        %p368 = pneg %p111
        %p369 = pneg %p108
        %p370 = pneg %p132
        %p371 = pneg %p129
        %p372 = pneg %p153
        %p373 = pneg %p150
        %p374 = pneg %p174
        %p375 = pneg %p171
        %p376 = pneg %p195
        %p377 = pneg %p192
        %p378 = pneg %p216
        %p379 = pneg %p213
        %p380 = pneg %p242
        %p381 = pneg %p239
        %s382 = sand.u32 %s229, 1
        %s383 = scalar_lea.sflag [#allocation6], %s382
        %s384 = sand.u32 %s229, 1
        %s385 = smul.addr %s384, 32
        %s386 = scalar_lea.vmem [#allocation10], %s385
        %s387 = smul.u32 2, %s27
        %s388 = smul.u32 2, %s27
        %v390 = vld [vmem:[%s341] sm:$0xff]
        %392 = vst [vmem:[#allocation1] ss:$2 sm:$0xff] %v390
        %v393 = vld.sshfl [vmem:[#allocation1] sm:$0xff pattern:$0x75316420]
        %v394 = vld.sshfl [vmem:[#allocation1 + $0x8] sm:$0xff pattern:$0x75316420]
        %vm397 = vcmask 1043456
        %v398 = vsel %vm397, %v393, 0.0
        %v399 = vsel %vm397, %v394, 0.0
        %s400 = scalar_lea.vmem %s341, 8 [#allocation4]
        %v401 = vld [vmem:[%s400] sm:$0xff]
        %403 = vst [vmem:[#allocation1] ss:$2 sm:$0xff] %v401
        %v404 = vld.sshfl [vmem:[#allocation1] sm:$0xff pattern:$0x75316420]
        %v405 = vld.sshfl [vmem:[#allocation1 + $0x8] sm:$0xff pattern:$0x75316420]
        %v408 = vsel %vm397, %v404, 0.0
        %v409 = vsel %vm397, %v405, 0.0
        %410 = vrot.lane.b32.xlu0 %v398, 17
        %v411 = vpop.permute.xlu0 %410
        %412 = vrot.lane.b32.xlu0 0.0, 17
        %v413 = vpop.permute.xlu0 %412
        %414 = vrot.lane.b32.xlu0 %v399, 17
        %v415 = vpop.permute.xlu0 %414
        %v416 = vlaneseq
        %v417 = vand.u32 %v416, 127
        %vm418 = vcmp.lt.s32.totalorder %v417, 17
        %v419 = vsel %vm418, %v411, %v415
        %v420 = vsel %vm418, %v415, %v411
        %v421 = vld [vmem:[#allocation7] ss:$8 sm:$0x3]
        %v423 = vperm.slane %v421, 0
        %v424 = vperm.slane %v421, 1
        %v427 = vmul.f32 %v420, %v423
        %v428 = vmul.f32 %v419, %v424
        %v429 = vmul.f32 %v413, %v423
        %v430 = vmul.f32 %v413, %v424
        %v431 = vpack.c.bf16 %v428, %v427
        %v432 = vpack.c.bf16 %v430, %v429
        %433 = vst [vmem:[#allocation2] sm:$0xff] %v431
        %434 = vst [vmem:[#allocation2 + $0x10] sm:$0xff] %v432
        %435 = vrot.lane.b32.xlu0 %v398, 16
        %v436 = vpop.permute.xlu0 %435
        %437 = vrot.lane.b32.xlu0 0.0, 16
        %v438 = vpop.permute.xlu0 %437
        %439 = vrot.lane.b32.xlu0 %v399, 16
        %v440 = vpop.permute.xlu0 %439
        %vm441 = vcmp.lt.s32.totalorder %v417, 16
        %v442 = vsel %vm441, %v436, %v440
        %v443 = vsel %vm441, %v440, %v436
        %s444 = scalar_lea.vmem [#allocation7], 1
        %v445 = vld [vmem:[%s444] ss:$8 sm:$0x3]
        %v447 = vperm.slane %v445, 0
        %v448 = vperm.slane %v445, 1
        %v451 = vmul.f32 %v443, %v447
        %v452 = vmul.f32 %v442, %v448
        %v453 = vmul.f32 %v438, %v447
        %v454 = vmul.f32 %v438, %v448
        %v455 = vpack.c.bf16 %v452, %v451
        %v456 = vpack.c.bf16 %v454, %v453
        %457 = vst [vmem:[#allocation2 + $0x20] sm:$0xff] %v455
        %458 = vst [vmem:[#allocation2 + $0x30] sm:$0xff] %v456
        %459 = vrot.lane.b32.xlu0 %v398, 15
        %v460 = vpop.permute.xlu0 %459
        %461 = vrot.lane.b32.xlu0 0.0, 15
        %v462 = vpop.permute.xlu0 %461
        %463 = vrot.lane.b32.xlu0 %v399, 15
        %v464 = vpop.permute.xlu0 %463
        %vm465 = vcmp.lt.s32.totalorder %v417, 15
        %v466 = vsel %vm465, %v460, %v464
        %v467 = vsel %vm465, %v464, %v460
        %s468 = scalar_lea.vmem [#allocation7], 2
        %v469 = vld [vmem:[%s468] ss:$8 sm:$0x3]
        %v471 = vperm.slane %v469, 0
        %v472 = vperm.slane %v469, 1
        %v475 = vmul.f32 %v467, %v471
        %v476 = vmul.f32 %v466, %v472
        %v477 = vmul.f32 %v462, %v471
        %v478 = vmul.f32 %v462, %v472
        %v479 = vpack.c.bf16 %v476, %v475
        %v480 = vpack.c.bf16 %v478, %v477
        %481 = vst [vmem:[#allocation2 + $0x40] sm:$0xff] %v479
        %482 = vst [vmem:[#allocation2 + $0x50] sm:$0xff] %v480
        %483 = vrot.lane.b32.xlu0 %v398, 1
        %v484 = vpop.permute.xlu0 %483
        %485 = vrot.lane.b32.xlu0 0.0, 1
        %v486 = vpop.permute.xlu0 %485
        %487 = vrot.lane.b32.xlu0 %v399, 1
        %v488 = vpop.permute.xlu0 %487
        %vm489 = vcmp.lt.s32.totalorder %v417, 1
        %v490 = vsel %vm489, %v484, %v488
        %v491 = vsel %vm489, %v488, %v484
        %s492 = scalar_lea.vmem [#allocation7], 3
        %v493 = vld [vmem:[%s492] ss:$8 sm:$0x3]
        %v495 = vperm.slane %v493, 0
        %v496 = vperm.slane %v493, 1
        %v499 = vmul.f32 %v491, %v495
        %v500 = vmul.f32 %v490, %v496
        %v501 = vmul.f32 %v486, %v495
        %v502 = vmul.f32 %v486, %v496
        %v503 = vpack.c.bf16 %v500, %v499
        %v504 = vpack.c.bf16 %v502, %v501
        %505 = vst [vmem:[#allocation2 + $0x60] sm:$0xff] %v503
        %506 = vst [vmem:[#allocation2 + $0x70] sm:$0xff] %v504
        %v507 = vpack.c.bf16 %v399, %v398
        %v508 = vpack.c.bf16 0.0, 0.0
        %509 = vst [vmem:[#allocation2 + $0x80] sm:$0xff] %v507
        %510 = vst [vmem:[#allocation2 + $0x90] sm:$0xff] %v508
        %511 = vrot.lane.b32.xlu0 %v398, 127
        %v512 = vpop.permute.xlu0 %511
        %513 = vrot.lane.b32.xlu0 0.0, 127
        %v514 = vpop.permute.xlu0 %513
        %515 = vrot.lane.b32.xlu0 %v399, 127
        %v516 = vpop.permute.xlu0 %515
        %vm517 = vcmp.lt.s32.totalorder %v417, 127
        %v518 = vsel %vm517, %v512, %v516
        %v519 = vsel %vm517, %v516, %v512
        %s520 = scalar_lea.vmem [#allocation7], 5
        %v521 = vld [vmem:[%s520] ss:$8 sm:$0x3]
        %v523 = vperm.slane %v521, 0
        %v524 = vperm.slane %v521, 1
        %v527 = vmul.f32 %v518, %v523
        %v528 = vmul.f32 %v519, %v524
        %v529 = vmul.f32 %v514, %v523
        %v530 = vmul.f32 %v514, %v524
        %v531 = vpack.c.bf16 %v528, %v527
        %v532 = vpack.c.bf16 %v530, %v529
        %533 = vst [vmem:[#allocation2 + $0xa0] sm:$0xff] %v531
        %534 = vst [vmem:[#allocation2 + $0xb0] sm:$0xff] %v532
        %535 = vrot.lane.b32.xlu0 %v398, 113
        %v536 = vpop.permute.xlu0 %535
        %537 = vrot.lane.b32.xlu0 0.0, 113
        %v538 = vpop.permute.xlu0 %537
        %539 = vrot.lane.b32.xlu0 %v399, 113
        %v540 = vpop.permute.xlu0 %539
        %vm541 = vcmp.lt.s32.totalorder %v417, 113
        %v542 = vsel %vm541, %v536, %v540
        %v543 = vsel %vm541, %v540, %v536
        %s544 = scalar_lea.vmem [#allocation7], 6
        %v545 = vld [vmem:[%s544] ss:$8 sm:$0x3]
        %v547 = vperm.slane %v545, 0
        %v548 = vperm.slane %v545, 1
        %v551 = vmul.f32 %v542, %v547
        %v552 = vmul.f32 %v543, %v548
        %v553 = vmul.f32 %v538, %v547
        %v554 = vmul.f32 %v538, %v548
        %v555 = vpack.c.bf16 %v552, %v551
        %v556 = vpack.c.bf16 %v554, %v553
        %557 = vst [vmem:[#allocation2 + $0xc0] sm:$0xff] %v555
        %558 = vst [vmem:[#allocation2 + $0xd0] sm:$0xff] %v556
        %559 = vrot.lane.b32.xlu0 %v398, 112
        %v560 = vpop.permute.xlu0 %559
        %561 = vrot.lane.b32.xlu0 0.0, 112
        %v562 = vpop.permute.xlu0 %561
        %563 = vrot.lane.b32.xlu0 %v399, 112
        %v564 = vpop.permute.xlu0 %563
        %vm565 = vcmp.lt.s32.totalorder %v417, 112
        %v566 = vsel %vm565, %v560, %v564
        %v567 = vsel %vm565, %v564, %v560
        %s568 = scalar_lea.vmem [#allocation7], 7
        %v569 = vld [vmem:[%s568] ss:$8 sm:$0x3]
        %v571 = vperm.slane %v569, 0
        %v572 = vperm.slane %v569, 1
        %v575 = vmul.f32 %v566, %v571
        %v576 = vmul.f32 %v567, %v572
        %v577 = vmul.f32 %v562, %v571
        %v578 = vmul.f32 %v562, %v572
        %v579 = vpack.c.bf16 %v576, %v575
        %v580 = vpack.c.bf16 %v578, %v577
        %581 = vst [vmem:[#allocation2 + $0xe0] sm:$0xff] %v579
        %582 = vst [vmem:[#allocation2 + $0xf0] sm:$0xff] %v580
        %583 = vrot.lane.b32.xlu0 %v398, 111
        %v584 = vpop.permute.xlu0 %583
        %585 = vrot.lane.b32.xlu0 0.0, 111
        %v586 = vpop.permute.xlu0 %585
        %587 = vrot.lane.b32.xlu0 %v399, 111
        %v588 = vpop.permute.xlu0 %587
        %vm589 = vcmp.lt.s32.totalorder %v417, 111
        %v590 = vsel %vm589, %v584, %v588
        %v591 = vsel %vm589, %v588, %v584
        %s592 = scalar_lea.vmem [#allocation7], 16
        %v593 = vld [vmem:[%s592] ss:$8 sm:$0x3]
        %v595 = vperm.slane %v593, 0
        %v596 = vperm.slane %v593, 1
        %v599 = vmul.f32 %v590, %v595
        %v600 = vmul.f32 %v591, %v596
        %v601 = vmul.f32 %v586, %v595
        %v602 = vmul.f32 %v586, %v596
        %v603 = vpack.c.bf16 %v600, %v599
        %v604 = vpack.c.bf16 %v602, %v601
        %605 = vst [vmem:[#allocation2 + $0x100] sm:$0xff] %v603
        %606 = vst [vmem:[#allocation2 + $0x110] sm:$0xff] %v604
        %607 = vrot.lane.b32.xlu0 %v408, 17
        %v608 = vpop.permute.xlu0 %607
        %609 = vrot.lane.b32.xlu0 %v409, 17
        %v610 = vpop.permute.xlu0 %609
        %v611 = vsel %vm418, %v608, %v610
        %v612 = vsel %vm418, %v610, %v608
        %v613 = vld [vmem:[#allocation7] ss:$8 sm:$0x3]
        %v615 = vperm.slane %v613, 0
        %v616 = vperm.slane %v613, 1
        %v619 = vmul.f32 %v612, %v615
        %v620 = vmul.f32 %v611, %v616
        %v621 = vmul.f32 %v413, %v615
        %v622 = vmul.f32 %v413, %v616
        %v623 = vpack.c.bf16 %v620, %v619
        %v624 = vpack.c.bf16 %v622, %v621
        %625 = vst [vmem:[#allocation2 + $0x8] sm:$0xff] %v623
        %626 = vst [vmem:[#allocation2 + $0x18] sm:$0xff] %v624
        %627 = vrot.lane.b32.xlu0 %v408, 16
        %v628 = vpop.permute.xlu0 %627
        %629 = vrot.lane.b32.xlu0 %v409, 16
        %v630 = vpop.permute.xlu0 %629
        %v631 = vsel %vm441, %v628, %v630
        %v632 = vsel %vm441, %v630, %v628
        %v633 = vld [vmem:[%s444] ss:$8 sm:$0x3]
        %v635 = vperm.slane %v633, 0
        %v636 = vperm.slane %v633, 1
        %v639 = vmul.f32 %v632, %v635
        %v640 = vmul.f32 %v631, %v636
        %v641 = vmul.f32 %v438, %v635
        %v642 = vmul.f32 %v438, %v636
        %v643 = vpack.c.bf16 %v640, %v639
        %v644 = vpack.c.bf16 %v642, %v641
        %645 = vst [vmem:[#allocation2 + $0x28] sm:$0xff] %v643
        %646 = vst [vmem:[#allocation2 + $0x38] sm:$0xff] %v644
        %647 = vrot.lane.b32.xlu0 %v408, 15
        %v648 = vpop.permute.xlu0 %647
        %649 = vrot.lane.b32.xlu0 %v409, 15
        %v650 = vpop.permute.xlu0 %649
        %v651 = vsel %vm465, %v648, %v650
        %v652 = vsel %vm465, %v650, %v648
        %v653 = vld [vmem:[%s468] ss:$8 sm:$0x3]
        %v655 = vperm.slane %v653, 0
        %v656 = vperm.slane %v653, 1
        %v659 = vmul.f32 %v652, %v655
        %v660 = vmul.f32 %v651, %v656
        %v661 = vmul.f32 %v462, %v655
        %v662 = vmul.f32 %v462, %v656
        %v663 = vpack.c.bf16 %v660, %v659
        %v664 = vpack.c.bf16 %v662, %v661
        %665 = vst [vmem:[#allocation2 + $0x48] sm:$0xff] %v663
        %666 = vst [vmem:[#allocation2 + $0x58] sm:$0xff] %v664
        %667 = vrot.lane.b32.xlu0 %v408, 1
        %v668 = vpop.permute.xlu0 %667
        %669 = vrot.lane.b32.xlu0 %v409, 1
        %v670 = vpop.permute.xlu0 %669
        %v671 = vsel %vm489, %v668, %v670
        %v672 = vsel %vm489, %v670, %v668
        %v673 = vld [vmem:[%s492] ss:$8 sm:$0x3]
        %v675 = vperm.slane %v673, 0
        %v676 = vperm.slane %v673, 1
        %v679 = vmul.f32 %v672, %v675
        %v680 = vmul.f32 %v671, %v676
        %v681 = vmul.f32 %v486, %v675
        %v682 = vmul.f32 %v486, %v676
        %v683 = vpack.c.bf16 %v680, %v679
        %v684 = vpack.c.bf16 %v682, %v681
        %685 = vst [vmem:[#allocation2 + $0x68] sm:$0xff] %v683
        %686 = vst [vmem:[#allocation2 + $0x78] sm:$0xff] %v684
        %v687 = vpack.c.bf16 %v409, %v408
        %688 = vst [vmem:[#allocation2 + $0x88] sm:$0xff] %v687
        %689 = vst [vmem:[#allocation2 + $0x98] sm:$0xff] %v508
        %690 = vrot.lane.b32.xlu0 %v408, 127
        %v691 = vpop.permute.xlu0 %690
        %692 = vrot.lane.b32.xlu0 %v409, 127
        %v693 = vpop.permute.xlu0 %692
        %v694 = vsel %vm517, %v691, %v693
        %v695 = vsel %vm517, %v693, %v691
        %v696 = vld [vmem:[%s520] ss:$8 sm:$0x3]
        %v698 = vperm.slane %v696, 0
        %v699 = vperm.slane %v696, 1
        %v702 = vmul.f32 %v694, %v698
        %v703 = vmul.f32 %v695, %v699
        %v704 = vmul.f32 %v514, %v698
        %v705 = vmul.f32 %v514, %v699
        %v706 = vpack.c.bf16 %v703, %v702
        %v707 = vpack.c.bf16 %v705, %v704
        %708 = vst [vmem:[#allocation2 + $0xa8] sm:$0xff] %v706
        %709 = vst [vmem:[#allocation2 + $0xb8] sm:$0xff] %v707
        %710 = vrot.lane.b32.xlu0 %v408, 113
        %v711 = vpop.permute.xlu0 %710
        %712 = vrot.lane.b32.xlu0 %v409, 113
        %v713 = vpop.permute.xlu0 %712
        %v714 = vsel %vm541, %v711, %v713
        %v715 = vsel %vm541, %v713, %v711
        %v716 = vld [vmem:[%s544] ss:$8 sm:$0x3]
        %v718 = vperm.slane %v716, 0
        %v719 = vperm.slane %v716, 1
        %v722 = vmul.f32 %v714, %v718
        %v723 = vmul.f32 %v715, %v719
        %v724 = vmul.f32 %v538, %v718
        %v725 = vmul.f32 %v538, %v719
        %v726 = vpack.c.bf16 %v723, %v722
        %v727 = vpack.c.bf16 %v725, %v724
        %728 = vst [vmem:[#allocation2 + $0xc8] sm:$0xff] %v726
        %729 = vst [vmem:[#allocation2 + $0xd8] sm:$0xff] %v727
        %730 = vrot.lane.b32.xlu0 %v408, 112
        %v731 = vpop.permute.xlu0 %730
        %732 = vrot.lane.b32.xlu0 %v409, 112
        %v733 = vpop.permute.xlu0 %732
        %v734 = vsel %vm565, %v731, %v733
        %v735 = vsel %vm565, %v733, %v731
        %v736 = vld [vmem:[%s568] ss:$8 sm:$0x3]
        %v738 = vperm.slane %v736, 0
        %v739 = vperm.slane %v736, 1
        %v742 = vmul.f32 %v734, %v738
        %v743 = vmul.f32 %v735, %v739
        %v744 = vmul.f32 %v562, %v738
        %v745 = vmul.f32 %v562, %v739
        %v746 = vpack.c.bf16 %v743, %v742
        %v747 = vpack.c.bf16 %v745, %v744
        %748 = vst [vmem:[#allocation2 + $0xe8] sm:$0xff] %v746
        %749 = vst [vmem:[#allocation2 + $0xf8] sm:$0xff] %v747
        %750 = vrot.lane.b32.xlu0 %v408, 111
        %v751 = vpop.permute.xlu0 %750
        %752 = vrot.lane.b32.xlu0 %v409, 111
        %v753 = vpop.permute.xlu0 %752
        %v754 = vsel %vm589, %v751, %v753
        %v755 = vsel %vm589, %v753, %v751
        %v756 = vld [vmem:[%s592] ss:$8 sm:$0x3]
        %v758 = vperm.slane %v756, 0
        %v759 = vperm.slane %v756, 1
        %v762 = vmul.f32 %v754, %v758
        %v763 = vmul.f32 %v755, %v759
        %v764 = vmul.f32 %v586, %v758
        %v765 = vmul.f32 %v586, %v759
        %v766 = vpack.c.bf16 %v763, %v762
        %v767 = vpack.c.bf16 %v765, %v764
        %768 = vst [vmem:[#allocation2 + $0x108] sm:$0xff] %v766
        %769 = vst [vmem:[#allocation2 + $0x118] sm:$0xff] %v767
        %v770 = vld [vmem:[%s1] sm:$0xff]
        %v771 = vld [vmem:[#allocation2] sm:$0xff]
        %v772 = vld [vmem:[#allocation2 + $0x8] sm:$0xff]
        %v773 = vld [vmem:[#allocation2 + $0x10] sm:$0xff]
        %v774 = vld [vmem:[#allocation2 + $0x18] sm:$0xff]
        %v775 = vld [vmem:[#allocation2 + $0x20] sm:$0xff]
        %v776 = vld [vmem:[#allocation2 + $0x28] sm:$0xff]
        %v777 = vld [vmem:[#allocation2 + $0x30] sm:$0xff]
        %v778 = vld [vmem:[#allocation2 + $0x38] sm:$0xff]
        %v779 = vld [vmem:[#allocation2 + $0x40] sm:$0xff]
        %v780 = vld [vmem:[#allocation2 + $0x48] sm:$0xff]
        %v781 = vld [vmem:[#allocation2 + $0x50] sm:$0xff]
        %v782 = vld [vmem:[#allocation2 + $0x58] sm:$0xff]
        %v783 = vld [vmem:[#allocation2 + $0x60] sm:$0xff]
        %v784 = vld [vmem:[#allocation2 + $0x68] sm:$0xff]
        %v785 = vld [vmem:[#allocation2 + $0x70] sm:$0xff]
        %v786 = vld [vmem:[#allocation2 + $0x78] sm:$0xff]
        %v787 = vld [vmem:[#allocation2 + $0x80] sm:$0xff]
        %v788 = vld [vmem:[#allocation2 + $0x88] sm:$0xff]
        %v789 = vld [vmem:[#allocation2 + $0x90] sm:$0xff]
        %v790 = vld [vmem:[#allocation2 + $0x98] sm:$0xff]
        %v791 = vld [vmem:[#allocation2 + $0xa0] sm:$0xff]
        %v792 = vld [vmem:[#allocation2 + $0xa8] sm:$0xff]
        %v793 = vld [vmem:[#allocation2 + $0xb0] sm:$0xff]
        %v794 = vld [vmem:[#allocation2 + $0xb8] sm:$0xff]
        %v795 = vld [vmem:[#allocation2 + $0xc0] sm:$0xff]
        %v796 = vld [vmem:[#allocation2 + $0xc8] sm:$0xff]
        %v797 = vld [vmem:[#allocation2 + $0xd0] sm:$0xff]
        %v798 = vld [vmem:[#allocation2 + $0xd8] sm:$0xff]
        %v799 = vld [vmem:[#allocation2 + $0xe0] sm:$0xff]
        %v800 = vld [vmem:[#allocation2 + $0xe8] sm:$0xff]
        %v801 = vld [vmem:[#allocation2 + $0xf0] sm:$0xff]
        %v802 = vld [vmem:[#allocation2 + $0xf8] sm:$0xff]
        %v803 = vld [vmem:[#allocation2 + $0x100] sm:$0xff]
        %v804 = vld [vmem:[#allocation2 + $0x108] sm:$0xff]
        %v805 = vld [vmem:[#allocation2 + $0x110] sm:$0xff]
        %v806 = vld [vmem:[#allocation2 + $0x118] sm:$0xff]
        %v807 = vld [vmem:[%s2] sm:$0xff]
        %809 = vset.pattern.permute.xlu0 0
        %810 = vperm.xlu0 %809, %v807
        %v811 = vpop.permute.xlu0 %810
        %v814 = vunpack.c.l.b16 %v770
        %v815 = vunpack.c.h.b16 %v770
        %v816 = vpack.c.b16 %v814, %v814
        %v817 = vpack.c.b16 %v815, %v815
        %v855 = vunpack.c.l.b16 %v771
        %v856 = vunpack.c.h.b16 %v771
        %v857 = vunpack.c.l.b16 %v772
        %v858 = vunpack.c.h.b16 %v772
        %v859 = vunpack.c.l.b16 %v773
        %v860 = vunpack.c.h.b16 %v773
        %v861 = vunpack.c.l.b16 %v774
        %v862 = vunpack.c.h.b16 %v774
        %v863 = vunpack.c.l.b16 %v775
        %v864 = vunpack.c.h.b16 %v775
        %v865 = vunpack.c.l.b16 %v776
        %v866 = vunpack.c.h.b16 %v776
        %v867 = vunpack.c.l.b16 %v777
        %v868 = vunpack.c.h.b16 %v777
        %v869 = vunpack.c.l.b16 %v778
        %v870 = vunpack.c.h.b16 %v778
        %v871 = vunpack.c.l.b16 %v779
        %v872 = vunpack.c.h.b16 %v779
        %v873 = vunpack.c.l.b16 %v780
        %v874 = vunpack.c.h.b16 %v780
        %v875 = vunpack.c.l.b16 %v781
        %v876 = vunpack.c.h.b16 %v781
        %v877 = vunpack.c.l.b16 %v782
        %v878 = vunpack.c.h.b16 %v782
        %v879 = vunpack.c.l.b16 %v783
        %v880 = vunpack.c.h.b16 %v783
        %v881 = vunpack.c.l.b16 %v784
        %v882 = vunpack.c.h.b16 %v784
        %v883 = vunpack.c.l.b16 %v785
        %v884 = vunpack.c.h.b16 %v785
        %v885 = vunpack.c.l.b16 %v786
        %v886 = vunpack.c.h.b16 %v786
        %v887 = vunpack.c.l.b16 %v787
        %v888 = vunpack.c.h.b16 %v787
        %v889 = vunpack.c.l.b16 %v788
        %v890 = vunpack.c.h.b16 %v788
        %v891 = vunpack.c.l.b16 %v789
        %v892 = vunpack.c.h.b16 %v789
        %v893 = vunpack.c.l.b16 %v790
        %v894 = vunpack.c.h.b16 %v790
        %v895 = vunpack.c.l.b16 %v791
        %v896 = vunpack.c.h.b16 %v791
        %v897 = vunpack.c.l.b16 %v792
        %v898 = vunpack.c.h.b16 %v792
        %v899 = vunpack.c.l.b16 %v793
        %v900 = vunpack.c.h.b16 %v793
        %v901 = vunpack.c.l.b16 %v794
        %v902 = vunpack.c.h.b16 %v794
        %v903 = vunpack.c.l.b16 %v795
        %v904 = vunpack.c.h.b16 %v795
        %v905 = vunpack.c.l.b16 %v796
        %v906 = vunpack.c.h.b16 %v796
        %v907 = vunpack.c.l.b16 %v797
        %v908 = vunpack.c.h.b16 %v797
        %v909 = vunpack.c.l.b16 %v798
        %v910 = vunpack.c.h.b16 %v798
        %v911 = vunpack.c.l.b16 %v799
        %v912 = vunpack.c.h.b16 %v799
        %v913 = vunpack.c.l.b16 %v800
        %v914 = vunpack.c.h.b16 %v800
        %v915 = vunpack.c.l.b16 %v801
        %v916 = vunpack.c.h.b16 %v801
        %v917 = vunpack.c.l.b16 %v802
        %v918 = vunpack.c.h.b16 %v802
        %v919 = vunpack.c.l.b16 %v803
        %v920 = vunpack.c.h.b16 %v803
        %v921 = vunpack.c.l.b16 %v804
        %v922 = vunpack.c.h.b16 %v804
        %v923 = vunpack.c.l.b16 %v805
        %v924 = vunpack.c.h.b16 %v805
        %v925 = vunpack.c.l.b16 %v806
        %v926 = vunpack.c.h.b16 %v806
        %v927 = vpack.c.b16 %v859, %v855
        %v928 = vpack.c.b16 %v860, %v856
        %v929 = vpack.c.b16 %v861, %v857
        %v930 = vpack.c.b16 %v862, %v858
        %v931 = vpack.c.b16 %v867, %v863
        %v932 = vpack.c.b16 %v868, %v864
        %v933 = vpack.c.b16 %v869, %v865
        %v934 = vpack.c.b16 %v870, %v866
        %v935 = vpack.c.b16 %v875, %v871
        %v936 = vpack.c.b16 %v876, %v872
        %v937 = vpack.c.b16 %v877, %v873
        %v938 = vpack.c.b16 %v878, %v874
        %v939 = vpack.c.b16 %v883, %v879
        %v940 = vpack.c.b16 %v884, %v880
        %v941 = vpack.c.b16 %v885, %v881
        %v942 = vpack.c.b16 %v886, %v882
        %v943 = vpack.c.b16 %v891, %v887
        %v944 = vpack.c.b16 %v892, %v888
        %v945 = vpack.c.b16 %v893, %v889
        %v946 = vpack.c.b16 %v894, %v890
        %v947 = vpack.c.b16 %v899, %v895
        %v948 = vpack.c.b16 %v900, %v896
        %v949 = vpack.c.b16 %v901, %v897
        %v950 = vpack.c.b16 %v902, %v898
        %v951 = vpack.c.b16 %v907, %v903
        %v952 = vpack.c.b16 %v908, %v904
        %v953 = vpack.c.b16 %v909, %v905
        %v954 = vpack.c.b16 %v910, %v906
        %v955 = vpack.c.b16 %v915, %v911
        %v956 = vpack.c.b16 %v916, %v912
        %v957 = vpack.c.b16 %v917, %v913
        %v958 = vpack.c.b16 %v918, %v914
        %v959 = vpack.c.b16 %v923, %v919
        %v960 = vpack.c.b16 %v924, %v920
        %v961 = vpack.c.b16 %v925, %v921
        %v962 = vpack.c.b16 %v926, %v922
        %vm999 = vcmask 130048
        %v1001 = vsel %vm999, %v817, 0
        %1003 = vmatpush.bf16.msra.mxu0 %v955
        %1004 = vmatpush.bf16.msra.mxu0 %v951
        %1005 = vmatpush.bf16.msra.mxu0 %v947
        %1006 = vmatpush.bf16.msra.mxu0 %v943
        %1007 = vmatpush.bf16.msra.mxu0 %v939
        %1008 = vmatpush.bf16.msra.mxu0 %v935
        %1009 = vmatpush.bf16.msra.mxu0 %v931
        %1010 = vmatpush.bf16.msra.mxu0 %v927
        %1011 = vmatmul.bf16.gmra.mxu0 %v816
        %v1012 = vpop.f32.mrf.mxu0
        %v1013 = vadd.f32 %v811, %v1012
        %v1014 = vpop.f32.mrf.mxu0
        %1015 = vdwg.mxu0
        %1016 = vmatpush.bf16.msra.mxu0 0
        %1017 = vmatpush.bf16.msra.mxu0 0
        %1018 = vmatpush.bf16.msra.mxu0 0
        %1019 = vmatpush.bf16.msra.mxu0 0
        %1020 = vmatpush.bf16.msra.mxu0 0
        %1021 = vmatpush.bf16.msra.mxu0 0
        %1022 = vmatpush.bf16.msra.mxu0 0
        %1023 = vmatpush.bf16.msra.mxu0 %v959
        %1024 = vmatmul.bf16.gmra.mxu0 %v1001
        %v1025 = vpop.f32.mrf.mxu0
        %v1026 = vadd.f32 %v1013, %v1025
        %v1027 = vpop.f32.mrf.mxu0
        %1028 = vdwg.mxu0
        %1029 = vmatpush.bf16.msra.mxu0 %v956
        %1030 = vmatpush.bf16.msra.mxu0 %v952
        %1031 = vmatpush.bf16.msra.mxu0 %v948
        %1032 = vmatpush.bf16.msra.mxu0 %v944
        %1033 = vmatpush.bf16.msra.mxu0 %v940
        %1034 = vmatpush.bf16.msra.mxu0 %v936
        %1035 = vmatpush.bf16.msra.mxu0 %v932
        %1036 = vmatpush.bf16.msra.mxu0 %v928
        %1037 = vmatmul.bf16.gmra.mxu0 %v816
        %v1038 = vpop.f32.mrf.mxu0
        %v1039 = vadd.f32 %v811, %v1038
        %v1040 = vpop.f32.mrf.mxu0
        %1041 = vdwg.mxu0
        %1042 = vmatpush.bf16.msra.mxu0 0
        %1043 = vmatpush.bf16.msra.mxu0 0
        %1044 = vmatpush.bf16.msra.mxu0 0
        %1045 = vmatpush.bf16.msra.mxu0 0
        %1046 = vmatpush.bf16.msra.mxu0 0
        %1047 = vmatpush.bf16.msra.mxu0 0
        %1048 = vmatpush.bf16.msra.mxu0 0
        %1049 = vmatpush.bf16.msra.mxu0 %v960
        %1050 = vmatmul.bf16.gmra.mxu0 %v1001
        %v1051 = vpop.f32.mrf.mxu0
        %v1052 = vadd.f32 %v1039, %v1051
        %v1053 = vpop.f32.mrf.mxu0
        %1054 = vdwg.mxu0
        %1055 = vmatpush.bf16.msra.mxu0 %v957
        %1056 = vmatpush.bf16.msra.mxu0 %v953
        %1057 = vmatpush.bf16.msra.mxu0 %v949
        %1058 = vmatpush.bf16.msra.mxu0 %v945
        %1059 = vmatpush.bf16.msra.mxu0 %v941
        %1060 = vmatpush.bf16.msra.mxu0 %v937
        %1061 = vmatpush.bf16.msra.mxu0 %v933
        %1062 = vmatpush.bf16.msra.mxu0 %v929
        %1063 = vmatmul.bf16.gmra.mxu0 %v816
        %v1064 = vpop.f32.mrf.mxu0
        %v1065 = vadd.f32 %v811, %v1064
        %v1066 = vpop.f32.mrf.mxu0
        %1067 = vdwg.mxu0
        %1068 = vmatpush.bf16.msra.mxu0 0
        %1069 = vmatpush.bf16.msra.mxu0 0
        %1070 = vmatpush.bf16.msra.mxu0 0
        %1071 = vmatpush.bf16.msra.mxu0 0
        %1072 = vmatpush.bf16.msra.mxu0 0
        %1073 = vmatpush.bf16.msra.mxu0 0
        %1074 = vmatpush.bf16.msra.mxu0 0
        %1075 = vmatpush.bf16.msra.mxu0 %v961
        %1076 = vmatmul.bf16.gmra.mxu0 %v1001
        %v1077 = vpop.f32.mrf.mxu0
        %v1078 = vadd.f32 %v1065, %v1077
        %v1079 = vpop.f32.mrf.mxu0
        %1080 = vdwg.mxu0
        %1081 = vmatpush.bf16.msra.mxu0 %v958
        %1082 = vmatpush.bf16.msra.mxu0 %v954
        %1083 = vmatpush.bf16.msra.mxu0 %v950
        %1084 = vmatpush.bf16.msra.mxu0 %v946
        %1085 = vmatpush.bf16.msra.mxu0 %v942
        %1086 = vmatpush.bf16.msra.mxu0 %v938
        %1087 = vmatpush.bf16.msra.mxu0 %v934
        %1088 = vmatpush.bf16.msra.mxu0 %v930
        %1089 = vmatmul.bf16.gmra.mxu0 %v816
        %v1090 = vpop.f32.mrf.mxu0
        %v1091 = vadd.f32 %v811, %v1090
        %v1092 = vpop.f32.mrf.mxu0
        %1093 = vdwg.mxu0
        %1094 = vmatpush.bf16.msra.mxu0 0
        %1095 = vmatpush.bf16.msra.mxu0 0
        %1096 = vmatpush.bf16.msra.mxu0 0
        %1097 = vmatpush.bf16.msra.mxu0 0
        %1098 = vmatpush.bf16.msra.mxu0 0
        %1099 = vmatpush.bf16.msra.mxu0 0
        %1100 = vmatpush.bf16.msra.mxu0 0
        %1101 = vmatpush.bf16.msra.mxu0 %v962
        %1102 = vmatmul.bf16.gmra.mxu0 %v1001
        %v1103 = vpop.f32.mrf.mxu0
        %v1104 = vadd.f32 %v1091, %v1103
        %v1105 = vpop.f32.mrf.mxu0
        %1106 = vdwg.mxu0
        %v1107 = vmul.f32 %v1026, 0.2
        %v1108 = vmul.f32 %v1052, 0.2
        %v1109 = vmul.f32 %v1078, 0.2
        %v1110 = vmul.f32 %v1104, 0.2
        %v1111 = vmax.f32 %v1026, %v1107
        %v1112 = vmax.f32 %v1052, %v1108
        %v1113 = vmax.f32 %v1078, %v1109
        %v1114 = vmax.f32 %v1104, %v1110
        %1115 = vrot.lane.b32.xlu0 %v1111, 17
        %v1116 = vpop.permute.xlu0 %1115
        %1117 = vrot.lane.b32.xlu0 %v1112, 17
        %v1118 = vpop.permute.xlu0 %1117
        %v1119 = vsel %vm418, %v1116, %v1118
        %v1120 = vsel %vm418, %v1118, %v1116
        %v1121 = vld [vmem:[#allocation9] ss:$8 sm:$0x3]
        %v1123 = vperm.slane %v1121, 0
        %v1124 = vperm.slane %v1121, 1
        %v1127 = vmul.f32 %v1120, %v1123
        %v1128 = vmul.f32 %v1119, %v1124
        %v1129 = vmul.f32 %v413, %v1123
        %v1130 = vmul.f32 %v413, %v1124
        %v1131 = vpack.c.bf16 %v1128, %v1127
        %v1132 = vpack.c.bf16 %v1130, %v1129
        %1133 = vst [vmem:[#allocation3] sm:$0xff] %v1131
        %1134 = vst [vmem:[#allocation3 + $0x10] sm:$0xff] %v1132
        %1135 = vrot.lane.b32.xlu0 %v1111, 16
        %v1136 = vpop.permute.xlu0 %1135
        %1137 = vrot.lane.b32.xlu0 %v1112, 16
        %v1138 = vpop.permute.xlu0 %1137
        %v1139 = vsel %vm441, %v1136, %v1138
        %v1140 = vsel %vm441, %v1138, %v1136
        %s1141 = scalar_lea.vmem [#allocation9], 1
        %v1142 = vld [vmem:[%s1141] ss:$8 sm:$0x3]
        %v1144 = vperm.slane %v1142, 0
        %v1145 = vperm.slane %v1142, 1
        %v1148 = vmul.f32 %v1140, %v1144
        %v1149 = vmul.f32 %v1139, %v1145
        %v1150 = vmul.f32 %v438, %v1144
        %v1151 = vmul.f32 %v438, %v1145
        %v1152 = vpack.c.bf16 %v1149, %v1148
        %v1153 = vpack.c.bf16 %v1151, %v1150
        %1154 = vst [vmem:[#allocation3 + $0x20] sm:$0xff] %v1152
        %1155 = vst [vmem:[#allocation3 + $0x30] sm:$0xff] %v1153
        %1156 = vrot.lane.b32.xlu0 %v1111, 15
        %v1157 = vpop.permute.xlu0 %1156
        %1158 = vrot.lane.b32.xlu0 %v1112, 15
        %v1159 = vpop.permute.xlu0 %1158
        %v1160 = vsel %vm465, %v1157, %v1159
        %v1161 = vsel %vm465, %v1159, %v1157
        %s1162 = scalar_lea.vmem [#allocation9], 2
        %v1163 = vld [vmem:[%s1162] ss:$8 sm:$0x3]
        %v1165 = vperm.slane %v1163, 0
        %v1166 = vperm.slane %v1163, 1
        %v1169 = vmul.f32 %v1161, %v1165
        %v1170 = vmul.f32 %v1160, %v1166
        %v1171 = vmul.f32 %v462, %v1165
        %v1172 = vmul.f32 %v462, %v1166
        %v1173 = vpack.c.bf16 %v1170, %v1169
        %v1174 = vpack.c.bf16 %v1172, %v1171
        %1175 = vst [vmem:[#allocation3 + $0x40] sm:$0xff] %v1173
        %1176 = vst [vmem:[#allocation3 + $0x50] sm:$0xff] %v1174
        %1177 = vrot.lane.b32.xlu0 %v1111, 1
        %v1178 = vpop.permute.xlu0 %1177
        %1179 = vrot.lane.b32.xlu0 %v1112, 1
        %v1180 = vpop.permute.xlu0 %1179
        %v1181 = vsel %vm489, %v1178, %v1180
        %v1182 = vsel %vm489, %v1180, %v1178
        %s1183 = scalar_lea.vmem [#allocation9], 3
        %v1184 = vld [vmem:[%s1183] ss:$8 sm:$0x3]
        %v1186 = vperm.slane %v1184, 0
        %v1187 = vperm.slane %v1184, 1
        %v1190 = vmul.f32 %v1182, %v1186
        %v1191 = vmul.f32 %v1181, %v1187
        %v1192 = vmul.f32 %v486, %v1186
        %v1193 = vmul.f32 %v486, %v1187
        %v1194 = vpack.c.bf16 %v1191, %v1190
        %v1195 = vpack.c.bf16 %v1193, %v1192
        %1196 = vst [vmem:[#allocation3 + $0x60] sm:$0xff] %v1194
        %1197 = vst [vmem:[#allocation3 + $0x70] sm:$0xff] %v1195
        %v1198 = vpack.c.bf16 %v1112, %v1111
        %1199 = vst [vmem:[#allocation3 + $0x80] sm:$0xff] %v1198
        %1200 = vst [vmem:[#allocation3 + $0x90] sm:$0xff] %v508
        %1201 = vrot.lane.b32.xlu0 %v1111, 127
        %v1202 = vpop.permute.xlu0 %1201
        %1203 = vrot.lane.b32.xlu0 %v1112, 127
        %v1204 = vpop.permute.xlu0 %1203
        %v1205 = vsel %vm517, %v1202, %v1204
        %v1206 = vsel %vm517, %v1204, %v1202
        %s1207 = scalar_lea.vmem [#allocation9], 5
        %v1208 = vld [vmem:[%s1207] ss:$8 sm:$0x3]
        %v1210 = vperm.slane %v1208, 0
        %v1211 = vperm.slane %v1208, 1
        %v1214 = vmul.f32 %v1205, %v1210
        %v1215 = vmul.f32 %v1206, %v1211
        %v1216 = vmul.f32 %v514, %v1210
        %v1217 = vmul.f32 %v514, %v1211
        %v1218 = vpack.c.bf16 %v1215, %v1214
        %v1219 = vpack.c.bf16 %v1217, %v1216
        %1220 = vst [vmem:[#allocation3 + $0xa0] sm:$0xff] %v1218
        %1221 = vst [vmem:[#allocation3 + $0xb0] sm:$0xff] %v1219
        %1222 = vrot.lane.b32.xlu0 %v1111, 113
        %v1223 = vpop.permute.xlu0 %1222
        %1224 = vrot.lane.b32.xlu0 %v1112, 113
        %v1225 = vpop.permute.xlu0 %1224
        %v1226 = vsel %vm541, %v1223, %v1225
        %v1227 = vsel %vm541, %v1225, %v1223
        %s1228 = scalar_lea.vmem [#allocation9], 6
        %v1229 = vld [vmem:[%s1228] ss:$8 sm:$0x3]
        %v1231 = vperm.slane %v1229, 0
        %v1232 = vperm.slane %v1229, 1
        %v1235 = vmul.f32 %v1226, %v1231
        %v1236 = vmul.f32 %v1227, %v1232
        %v1237 = vmul.f32 %v538, %v1231
        %v1238 = vmul.f32 %v538, %v1232
        %v1239 = vpack.c.bf16 %v1236, %v1235
        %v1240 = vpack.c.bf16 %v1238, %v1237
        %1241 = vst [vmem:[#allocation3 + $0xc0] sm:$0xff] %v1239
        %1242 = vst [vmem:[#allocation3 + $0xd0] sm:$0xff] %v1240
        %1243 = vrot.lane.b32.xlu0 %v1111, 112
        %v1244 = vpop.permute.xlu0 %1243
        %1245 = vrot.lane.b32.xlu0 %v1112, 112
        %v1246 = vpop.permute.xlu0 %1245
        %v1247 = vsel %vm565, %v1244, %v1246
        %v1248 = vsel %vm565, %v1246, %v1244
        %s1249 = scalar_lea.vmem [#allocation9], 7
        %v1250 = vld [vmem:[%s1249] ss:$8 sm:$0x3]
        %v1252 = vperm.slane %v1250, 0
        %v1253 = vperm.slane %v1250, 1
        %v1256 = vmul.f32 %v1247, %v1252
        %v1257 = vmul.f32 %v1248, %v1253
        %v1258 = vmul.f32 %v562, %v1252
        %v1259 = vmul.f32 %v562, %v1253
        %v1260 = vpack.c.bf16 %v1257, %v1256
        %v1261 = vpack.c.bf16 %v1259, %v1258
        %1262 = vst [vmem:[#allocation3 + $0xe0] sm:$0xff] %v1260
        %1263 = vst [vmem:[#allocation3 + $0xf0] sm:$0xff] %v1261
        %1264 = vrot.lane.b32.xlu0 %v1111, 111
        %v1265 = vpop.permute.xlu0 %1264
        %1266 = vrot.lane.b32.xlu0 %v1112, 111
        %v1267 = vpop.permute.xlu0 %1266
        %v1268 = vsel %vm589, %v1265, %v1267
        %v1269 = vsel %vm589, %v1267, %v1265
        %s1270 = scalar_lea.vmem [#allocation9], 16
        %v1271 = vld [vmem:[%s1270] ss:$8 sm:$0x3]
        %v1273 = vperm.slane %v1271, 0
        %v1274 = vperm.slane %v1271, 1
        %v1277 = vmul.f32 %v1268, %v1273
        %v1278 = vmul.f32 %v1269, %v1274
        %v1279 = vmul.f32 %v586, %v1273
        %v1280 = vmul.f32 %v586, %v1274
        %v1281 = vpack.c.bf16 %v1278, %v1277
        %v1282 = vpack.c.bf16 %v1280, %v1279
        %1283 = vst [vmem:[#allocation3 + $0x100] sm:$0xff] %v1281
        %1284 = vst [vmem:[#allocation3 + $0x110] sm:$0xff] %v1282
        %1285 = vrot.lane.b32.xlu0 %v1113, 17
        %v1286 = vpop.permute.xlu0 %1285
        %1287 = vrot.lane.b32.xlu0 %v1114, 17
        %v1288 = vpop.permute.xlu0 %1287
        %v1289 = vsel %vm418, %v1286, %v1288
        %v1290 = vsel %vm418, %v1288, %v1286
        %v1291 = vld [vmem:[#allocation9] ss:$8 sm:$0x3]
        %v1293 = vperm.slane %v1291, 0
        %v1294 = vperm.slane %v1291, 1
        %v1297 = vmul.f32 %v1290, %v1293
        %v1298 = vmul.f32 %v1289, %v1294
        %v1299 = vmul.f32 %v413, %v1293
        %v1300 = vmul.f32 %v413, %v1294
        %v1301 = vpack.c.bf16 %v1298, %v1297
        %v1302 = vpack.c.bf16 %v1300, %v1299
        %1303 = vst [vmem:[#allocation3 + $0x8] sm:$0xff] %v1301
        %1304 = vst [vmem:[#allocation3 + $0x18] sm:$0xff] %v1302
        %1305 = vrot.lane.b32.xlu0 %v1113, 16
        %v1306 = vpop.permute.xlu0 %1305
        %1307 = vrot.lane.b32.xlu0 %v1114, 16
        %v1308 = vpop.permute.xlu0 %1307
        %v1309 = vsel %vm441, %v1306, %v1308
        %v1310 = vsel %vm441, %v1308, %v1306
        %v1311 = vld [vmem:[%s1141] ss:$8 sm:$0x3]
        %v1313 = vperm.slane %v1311, 0
        %v1314 = vperm.slane %v1311, 1
        %v1317 = vmul.f32 %v1310, %v1313
        %v1318 = vmul.f32 %v1309, %v1314
        %v1319 = vmul.f32 %v438, %v1313
        %v1320 = vmul.f32 %v438, %v1314
        %v1321 = vpack.c.bf16 %v1318, %v1317
        %v1322 = vpack.c.bf16 %v1320, %v1319
        %1323 = vst [vmem:[#allocation3 + $0x28] sm:$0xff] %v1321
        %1324 = vst [vmem:[#allocation3 + $0x38] sm:$0xff] %v1322
        %1325 = vrot.lane.b32.xlu0 %v1113, 15
        %v1326 = vpop.permute.xlu0 %1325
        %1327 = vrot.lane.b32.xlu0 %v1114, 15
        %v1328 = vpop.permute.xlu0 %1327
        %v1329 = vsel %vm465, %v1326, %v1328
        %v1330 = vsel %vm465, %v1328, %v1326
        %v1331 = vld [vmem:[%s1162] ss:$8 sm:$0x3]
        %v1333 = vperm.slane %v1331, 0
        %v1334 = vperm.slane %v1331, 1
        %v1337 = vmul.f32 %v1330, %v1333
        %v1338 = vmul.f32 %v1329, %v1334
        %v1339 = vmul.f32 %v462, %v1333
        %v1340 = vmul.f32 %v462, %v1334
        %v1341 = vpack.c.bf16 %v1338, %v1337
        %v1342 = vpack.c.bf16 %v1340, %v1339
        %1343 = vst [vmem:[#allocation3 + $0x48] sm:$0xff] %v1341
        %1344 = vst [vmem:[#allocation3 + $0x58] sm:$0xff] %v1342
        %1345 = vrot.lane.b32.xlu0 %v1113, 1
        %v1346 = vpop.permute.xlu0 %1345
        %1347 = vrot.lane.b32.xlu0 %v1114, 1
        %v1348 = vpop.permute.xlu0 %1347
        %v1349 = vsel %vm489, %v1346, %v1348
        %v1350 = vsel %vm489, %v1348, %v1346
        %v1351 = vld [vmem:[%s1183] ss:$8 sm:$0x3]
        %v1353 = vperm.slane %v1351, 0
        %v1354 = vperm.slane %v1351, 1
        %v1357 = vmul.f32 %v1350, %v1353
        %v1358 = vmul.f32 %v1349, %v1354
        %v1359 = vmul.f32 %v486, %v1353
        %v1360 = vmul.f32 %v486, %v1354
        %v1361 = vpack.c.bf16 %v1358, %v1357
        %v1362 = vpack.c.bf16 %v1360, %v1359
        %1363 = vst [vmem:[#allocation3 + $0x68] sm:$0xff] %v1361
        %1364 = vst [vmem:[#allocation3 + $0x78] sm:$0xff] %v1362
        %v1365 = vpack.c.bf16 %v1114, %v1113
        %1366 = vst [vmem:[#allocation3 + $0x88] sm:$0xff] %v1365
        %1367 = vst [vmem:[#allocation3 + $0x98] sm:$0xff] %v508
        %1368 = vrot.lane.b32.xlu0 %v1113, 127
        %v1369 = vpop.permute.xlu0 %1368
        %1370 = vrot.lane.b32.xlu0 %v1114, 127
        %v1371 = vpop.permute.xlu0 %1370
        %v1372 = vsel %vm517, %v1369, %v1371
        %v1373 = vsel %vm517, %v1371, %v1369
        %v1374 = vld [vmem:[%s1207] ss:$8 sm:$0x3]
        %v1376 = vperm.slane %v1374, 0
        %v1377 = vperm.slane %v1374, 1
        %v1380 = vmul.f32 %v1372, %v1376
        %v1381 = vmul.f32 %v1373, %v1377
        %v1382 = vmul.f32 %v514, %v1376
        %v1383 = vmul.f32 %v514, %v1377
        %v1384 = vpack.c.bf16 %v1381, %v1380
        %v1385 = vpack.c.bf16 %v1383, %v1382
        %1386 = vst [vmem:[#allocation3 + $0xa8] sm:$0xff] %v1384
        %1387 = vst [vmem:[#allocation3 + $0xb8] sm:$0xff] %v1385
        %1388 = vrot.lane.b32.xlu0 %v1113, 113
        %v1389 = vpop.permute.xlu0 %1388
        %1390 = vrot.lane.b32.xlu0 %v1114, 113
        %v1391 = vpop.permute.xlu0 %1390
        %v1392 = vsel %vm541, %v1389, %v1391
        %v1393 = vsel %vm541, %v1391, %v1389
        %v1394 = vld [vmem:[%s1228] ss:$8 sm:$0x3]
        %v1396 = vperm.slane %v1394, 0
        %v1397 = vperm.slane %v1394, 1
        %v1400 = vmul.f32 %v1392, %v1396
        %v1401 = vmul.f32 %v1393, %v1397
        %v1402 = vmul.f32 %v538, %v1396
        %v1403 = vmul.f32 %v538, %v1397
        %v1404 = vpack.c.bf16 %v1401, %v1400
        %v1405 = vpack.c.bf16 %v1403, %v1402
        %1406 = vst [vmem:[#allocation3 + $0xc8] sm:$0xff] %v1404
        %1407 = vst [vmem:[#allocation3 + $0xd8] sm:$0xff] %v1405
        %1408 = vrot.lane.b32.xlu0 %v1113, 112
        %v1409 = vpop.permute.xlu0 %1408
        %1410 = vrot.lane.b32.xlu0 %v1114, 112
        %v1411 = vpop.permute.xlu0 %1410
        %v1412 = vsel %vm565, %v1409, %v1411
        %v1413 = vsel %vm565, %v1411, %v1409
        %v1414 = vld [vmem:[%s1249] ss:$8 sm:$0x3]
        %v1416 = vperm.slane %v1414, 0
        %v1417 = vperm.slane %v1414, 1
        %v1420 = vmul.f32 %v1412, %v1416
        %v1421 = vmul.f32 %v1413, %v1417
        %v1422 = vmul.f32 %v562, %v1416
        %v1423 = vmul.f32 %v562, %v1417
        %v1424 = vpack.c.bf16 %v1421, %v1420
        %v1425 = vpack.c.bf16 %v1423, %v1422
        %1426 = vst [vmem:[#allocation3 + $0xe8] sm:$0xff] %v1424
        %1427 = vst [vmem:[#allocation3 + $0xf8] sm:$0xff] %v1425
        %1428 = vrot.lane.b32.xlu0 %v1113, 111
        %v1429 = vpop.permute.xlu0 %1428
        %1430 = vrot.lane.b32.xlu0 %v1114, 111
        %v1431 = vpop.permute.xlu0 %1430
        %v1432 = vsel %vm589, %v1429, %v1431
        %v1433 = vsel %vm589, %v1431, %v1429
        %v1434 = vld [vmem:[%s1270] ss:$8 sm:$0x3]
        %v1436 = vperm.slane %v1434, 0
        %v1437 = vperm.slane %v1434, 1
        %v1440 = vmul.f32 %v1432, %v1436
        %v1441 = vmul.f32 %v1433, %v1437
        %v1442 = vmul.f32 %v586, %v1436
        %v1443 = vmul.f32 %v586, %v1437
        %v1444 = vpack.c.bf16 %v1441, %v1440
        %v1445 = vpack.c.bf16 %v1443, %v1442
        %1446 = vst [vmem:[#allocation3 + $0x108] sm:$0xff] %v1444
        %1447 = vst [vmem:[#allocation3 + $0x118] sm:$0xff] %v1445
        %v1448 = vld [vmem:[%s3] sm:$0xff]
        %v1449 = vld [vmem:[#allocation3] sm:$0xff]
        %v1450 = vld [vmem:[#allocation3 + $0x8] sm:$0xff]
        %v1451 = vld [vmem:[#allocation3 + $0x10] sm:$0xff]
        %v1452 = vld [vmem:[#allocation3 + $0x18] sm:$0xff]
        %v1453 = vld [vmem:[#allocation3 + $0x20] sm:$0xff]
        %v1454 = vld [vmem:[#allocation3 + $0x28] sm:$0xff]
        %v1455 = vld [vmem:[#allocation3 + $0x30] sm:$0xff]
        %v1456 = vld [vmem:[#allocation3 + $0x38] sm:$0xff]
        %v1457 = vld [vmem:[#allocation3 + $0x40] sm:$0xff]
        %v1458 = vld [vmem:[#allocation3 + $0x48] sm:$0xff]
        %v1459 = vld [vmem:[#allocation3 + $0x50] sm:$0xff]
        %v1460 = vld [vmem:[#allocation3 + $0x58] sm:$0xff]
        %v1461 = vld [vmem:[#allocation3 + $0x60] sm:$0xff]
        %v1462 = vld [vmem:[#allocation3 + $0x68] sm:$0xff]
        %v1463 = vld [vmem:[#allocation3 + $0x70] sm:$0xff]
        %v1464 = vld [vmem:[#allocation3 + $0x78] sm:$0xff]
        %v1465 = vld [vmem:[#allocation3 + $0x80] sm:$0xff]
        %v1466 = vld [vmem:[#allocation3 + $0x88] sm:$0xff]
        %v1467 = vld [vmem:[#allocation3 + $0x90] sm:$0xff]
        %v1468 = vld [vmem:[#allocation3 + $0x98] sm:$0xff]
        %v1469 = vld [vmem:[#allocation3 + $0xa0] sm:$0xff]
        %v1470 = vld [vmem:[#allocation3 + $0xa8] sm:$0xff]
        %v1471 = vld [vmem:[#allocation3 + $0xb0] sm:$0xff]
        %v1472 = vld [vmem:[#allocation3 + $0xb8] sm:$0xff]
        %v1473 = vld [vmem:[#allocation3 + $0xc0] sm:$0xff]
        %v1474 = vld [vmem:[#allocation3 + $0xc8] sm:$0xff]
        %v1475 = vld [vmem:[#allocation3 + $0xd0] sm:$0xff]
        %v1476 = vld [vmem:[#allocation3 + $0xd8] sm:$0xff]
        %v1477 = vld [vmem:[#allocation3 + $0xe0] sm:$0xff]
        %v1478 = vld [vmem:[#allocation3 + $0xe8] sm:$0xff]
        %v1479 = vld [vmem:[#allocation3 + $0xf0] sm:$0xff]
        %v1480 = vld [vmem:[#allocation3 + $0xf8] sm:$0xff]
        %v1481 = vld [vmem:[#allocation3 + $0x100] sm:$0xff]
        %v1482 = vld [vmem:[#allocation3 + $0x108] sm:$0xff]
        %v1483 = vld [vmem:[#allocation3 + $0x110] sm:$0xff]
        %v1484 = vld [vmem:[#allocation3 + $0x118] sm:$0xff]
        %v1485 = vld [vmem:[%s4] sm:$0xff]
        %1487 = vset.pattern.permute.xlu0 0
        %1488 = vperm.xlu0 %1487, %v1485
        %v1489 = vpop.permute.xlu0 %1488
        %v1492 = vunpack.c.l.b16 %v1448
        %v1493 = vunpack.c.h.b16 %v1448
        %v1494 = vpack.c.b16 %v1492, %v1492
        %v1495 = vpack.c.b16 %v1493, %v1493
        %v1533 = vunpack.c.l.b16 %v1449
        %v1534 = vunpack.c.h.b16 %v1449
        %v1535 = vunpack.c.l.b16 %v1450
        %v1536 = vunpack.c.h.b16 %v1450
        %v1537 = vunpack.c.l.b16 %v1451
        %v1538 = vunpack.c.h.b16 %v1451
        %v1539 = vunpack.c.l.b16 %v1452
        %v1540 = vunpack.c.h.b16 %v1452
        %v1541 = vunpack.c.l.b16 %v1453
        %v1542 = vunpack.c.h.b16 %v1453
        %v1543 = vunpack.c.l.b16 %v1454
        %v1544 = vunpack.c.h.b16 %v1454
        %v1545 = vunpack.c.l.b16 %v1455
        %v1546 = vunpack.c.h.b16 %v1455
        %v1547 = vunpack.c.l.b16 %v1456
        %v1548 = vunpack.c.h.b16 %v1456
        %v1549 = vunpack.c.l.b16 %v1457
        %v1550 = vunpack.c.h.b16 %v1457
        %v1551 = vunpack.c.l.b16 %v1458
        %v1552 = vunpack.c.h.b16 %v1458
        %v1553 = vunpack.c.l.b16 %v1459
        %v1554 = vunpack.c.h.b16 %v1459
        %v1555 = vunpack.c.l.b16 %v1460
        %v1556 = vunpack.c.h.b16 %v1460
        %v1557 = vunpack.c.l.b16 %v1461
        %v1558 = vunpack.c.h.b16 %v1461
        %v1559 = vunpack.c.l.b16 %v1462
        %v1560 = vunpack.c.h.b16 %v1462
        %v1561 = vunpack.c.l.b16 %v1463
        %v1562 = vunpack.c.h.b16 %v1463
        %v1563 = vunpack.c.l.b16 %v1464
        %v1564 = vunpack.c.h.b16 %v1464
        %v1565 = vunpack.c.l.b16 %v1465
        %v1566 = vunpack.c.h.b16 %v1465
        %v1567 = vunpack.c.l.b16 %v1466
        %v1568 = vunpack.c.h.b16 %v1466
        %v1569 = vunpack.c.l.b16 %v1467
        %v1570 = vunpack.c.h.b16 %v1467
        %v1571 = vunpack.c.l.b16 %v1468
        %v1572 = vunpack.c.h.b16 %v1468
        %v1573 = vunpack.c.l.b16 %v1469
        %v1574 = vunpack.c.h.b16 %v1469
        %v1575 = vunpack.c.l.b16 %v1470
        %v1576 = vunpack.c.h.b16 %v1470
        %v1577 = vunpack.c.l.b16 %v1471
        %v1578 = vunpack.c.h.b16 %v1471
        %v1579 = vunpack.c.l.b16 %v1472
        %v1580 = vunpack.c.h.b16 %v1472
        %v1581 = vunpack.c.l.b16 %v1473
        %v1582 = vunpack.c.h.b16 %v1473
        %v1583 = vunpack.c.l.b16 %v1474
        %v1584 = vunpack.c.h.b16 %v1474
        %v1585 = vunpack.c.l.b16 %v1475
        %v1586 = vunpack.c.h.b16 %v1475
        %v1587 = vunpack.c.l.b16 %v1476
        %v1588 = vunpack.c.h.b16 %v1476
        %v1589 = vunpack.c.l.b16 %v1477
        %v1590 = vunpack.c.h.b16 %v1477
        %v1591 = vunpack.c.l.b16 %v1478
        %v1592 = vunpack.c.h.b16 %v1478
        %v1593 = vunpack.c.l.b16 %v1479
        %v1594 = vunpack.c.h.b16 %v1479
        %v1595 = vunpack.c.l.b16 %v1480
        %v1596 = vunpack.c.h.b16 %v1480
        %v1597 = vunpack.c.l.b16 %v1481
        %v1598 = vunpack.c.h.b16 %v1481
        %v1599 = vunpack.c.l.b16 %v1482
        %v1600 = vunpack.c.h.b16 %v1482
        %v1601 = vunpack.c.l.b16 %v1483
        %v1602 = vunpack.c.h.b16 %v1483
        %v1603 = vunpack.c.l.b16 %v1484
        %v1604 = vunpack.c.h.b16 %v1484
        %v1605 = vpack.c.b16 %v1537, %v1533
        %v1606 = vpack.c.b16 %v1538, %v1534
        %v1607 = vpack.c.b16 %v1539, %v1535
        %v1608 = vpack.c.b16 %v1540, %v1536
        %v1609 = vpack.c.b16 %v1545, %v1541
        %v1610 = vpack.c.b16 %v1546, %v1542
        %v1611 = vpack.c.b16 %v1547, %v1543
        %v1612 = vpack.c.b16 %v1548, %v1544
        %v1613 = vpack.c.b16 %v1553, %v1549
        %v1614 = vpack.c.b16 %v1554, %v1550
        %v1615 = vpack.c.b16 %v1555, %v1551
        %v1616 = vpack.c.b16 %v1556, %v1552
        %v1617 = vpack.c.b16 %v1561, %v1557
        %v1618 = vpack.c.b16 %v1562, %v1558
        %v1619 = vpack.c.b16 %v1563, %v1559
        %v1620 = vpack.c.b16 %v1564, %v1560
        %v1621 = vpack.c.b16 %v1569, %v1565
        %v1622 = vpack.c.b16 %v1570, %v1566
        %v1623 = vpack.c.b16 %v1571, %v1567
        %v1624 = vpack.c.b16 %v1572, %v1568
        %v1625 = vpack.c.b16 %v1577, %v1573
        %v1626 = vpack.c.b16 %v1578, %v1574
        %v1627 = vpack.c.b16 %v1579, %v1575
        %v1628 = vpack.c.b16 %v1580, %v1576
        %v1629 = vpack.c.b16 %v1585, %v1581
        %v1630 = vpack.c.b16 %v1586, %v1582
        %v1631 = vpack.c.b16 %v1587, %v1583
        %v1632 = vpack.c.b16 %v1588, %v1584
        %v1633 = vpack.c.b16 %v1593, %v1589
        %v1634 = vpack.c.b16 %v1594, %v1590
        %v1635 = vpack.c.b16 %v1595, %v1591
        %v1636 = vpack.c.b16 %v1596, %v1592
        %v1637 = vpack.c.b16 %v1601, %v1597
        %v1638 = vpack.c.b16 %v1602, %v1598
        %v1639 = vpack.c.b16 %v1603, %v1599
        %v1640 = vpack.c.b16 %v1604, %v1600
        %v1678 = vsel %vm999, %v1495, 0
        %1680 = vmatpush.bf16.msra.mxu0 %v1633
        %1681 = vmatpush.bf16.msra.mxu0 %v1629
        %1682 = vmatpush.bf16.msra.mxu0 %v1625
        %1683 = vmatpush.bf16.msra.mxu0 %v1621
        %1684 = vmatpush.bf16.msra.mxu0 %v1617
        %1685 = vmatpush.bf16.msra.mxu0 %v1613
        %1686 = vmatpush.bf16.msra.mxu0 %v1609
        %1687 = vmatpush.bf16.msra.mxu0 %v1605
        %1688 = vmatmul.bf16.gmra.mxu0 %v1494
        %v1689 = vpop.f32.mrf.mxu0
        %v1690 = vadd.f32 %v1489, %v1689
        %v1691 = vpop.f32.mrf.mxu0
        %1692 = vdwg.mxu0
        %1693 = vmatpush.bf16.msra.mxu0 0
        %1694 = vmatpush.bf16.msra.mxu0 0
        %1695 = vmatpush.bf16.msra.mxu0 0
        %1696 = vmatpush.bf16.msra.mxu0 0
        %1697 = vmatpush.bf16.msra.mxu0 0
        %1698 = vmatpush.bf16.msra.mxu0 0
        %1699 = vmatpush.bf16.msra.mxu0 0
        %1700 = vmatpush.bf16.msra.mxu0 %v1637
        %1701 = vmatmul.bf16.gmra.mxu0 %v1678
        %v1702 = vpop.f32.mrf.mxu0
        %v1703 = vadd.f32 %v1690, %v1702
        %v1704 = vpop.f32.mrf.mxu0
        %1705 = vdwg.mxu0
        %1706 = vmatpush.bf16.msra.mxu0 %v1634
        %1707 = vmatpush.bf16.msra.mxu0 %v1630
        %1708 = vmatpush.bf16.msra.mxu0 %v1626
        %1709 = vmatpush.bf16.msra.mxu0 %v1622
        %1710 = vmatpush.bf16.msra.mxu0 %v1618
        %1711 = vmatpush.bf16.msra.mxu0 %v1614
        %1712 = vmatpush.bf16.msra.mxu0 %v1610
        %1713 = vmatpush.bf16.msra.mxu0 %v1606
        %1714 = vmatmul.bf16.gmra.mxu0 %v1494
        %v1715 = vpop.f32.mrf.mxu0
        %v1716 = vadd.f32 %v1489, %v1715
        %v1717 = vpop.f32.mrf.mxu0
        %1718 = vdwg.mxu0
        %1719 = vmatpush.bf16.msra.mxu0 0
        %1720 = vmatpush.bf16.msra.mxu0 0
        %1721 = vmatpush.bf16.msra.mxu0 0
        %1722 = vmatpush.bf16.msra.mxu0 0
        %1723 = vmatpush.bf16.msra.mxu0 0
        %1724 = vmatpush.bf16.msra.mxu0 0
        %1725 = vmatpush.bf16.msra.mxu0 0
        %1726 = vmatpush.bf16.msra.mxu0 %v1638
        %1727 = vmatmul.bf16.gmra.mxu0 %v1678
        %v1728 = vpop.f32.mrf.mxu0
        %v1729 = vadd.f32 %v1716, %v1728
        %v1730 = vpop.f32.mrf.mxu0
        %1731 = vdwg.mxu0
        %1732 = vmatpush.bf16.msra.mxu0 %v1635
        %1733 = vmatpush.bf16.msra.mxu0 %v1631
        %1734 = vmatpush.bf16.msra.mxu0 %v1627
        %1735 = vmatpush.bf16.msra.mxu0 %v1623
        %1736 = vmatpush.bf16.msra.mxu0 %v1619
        %1737 = vmatpush.bf16.msra.mxu0 %v1615
        %1738 = vmatpush.bf16.msra.mxu0 %v1611
        %1739 = vmatpush.bf16.msra.mxu0 %v1607
        %1740 = vmatmul.bf16.gmra.mxu0 %v1494
        %v1741 = vpop.f32.mrf.mxu0
        %v1742 = vadd.f32 %v1489, %v1741
        %v1743 = vpop.f32.mrf.mxu0
        %1744 = vdwg.mxu0
        %1745 = vmatpush.bf16.msra.mxu0 0
        %1746 = vmatpush.bf16.msra.mxu0 0
        %1747 = vmatpush.bf16.msra.mxu0 0
        %1748 = vmatpush.bf16.msra.mxu0 0
        %1749 = vmatpush.bf16.msra.mxu0 0
        %1750 = vmatpush.bf16.msra.mxu0 0
        %1751 = vmatpush.bf16.msra.mxu0 0
        %1752 = vmatpush.bf16.msra.mxu0 %v1639
        %1753 = vmatmul.bf16.gmra.mxu0 %v1678
        %v1754 = vpop.f32.mrf.mxu0
        %v1755 = vadd.f32 %v1742, %v1754
        %v1756 = vpop.f32.mrf.mxu0
        %1757 = vdwg.mxu0
        %1758 = vmatpush.bf16.msra.mxu0 %v1636
        %1759 = vmatpush.bf16.msra.mxu0 %v1632
        %1760 = vmatpush.bf16.msra.mxu0 %v1628
        %1761 = vmatpush.bf16.msra.mxu0 %v1624
        %1762 = vmatpush.bf16.msra.mxu0 %v1620
        %1763 = vmatpush.bf16.msra.mxu0 %v1616
        %1764 = vmatpush.bf16.msra.mxu0 %v1612
        %1765 = vmatpush.bf16.msra.mxu0 %v1608
        %1766 = vmatmul.bf16.gmra.mxu0 %v1494
        %v1767 = vpop.f32.mrf.mxu0
        %v1768 = vadd.f32 %v1489, %v1767
        %v1769 = vpop.f32.mrf.mxu0
        %1770 = vdwg.mxu0
        %1771 = vmatpush.bf16.msra.mxu0 0
        %1772 = vmatpush.bf16.msra.mxu0 0
        %1773 = vmatpush.bf16.msra.mxu0 0
        %1774 = vmatpush.bf16.msra.mxu0 0
        %1775 = vmatpush.bf16.msra.mxu0 0
        %1776 = vmatpush.bf16.msra.mxu0 0
        %1777 = vmatpush.bf16.msra.mxu0 0
        %1778 = vmatpush.bf16.msra.mxu0 %v1640
        %1779 = vmatmul.bf16.gmra.mxu0 %v1678
        %v1780 = vpop.f32.mrf.mxu0
        %v1781 = vadd.f32 %v1768, %v1780
        %v1782 = vpop.f32.mrf.mxu0
        %1783 = vdwg.mxu0
        %v1784 = vmul.f32 %v1703, 0.2
        %v1785 = vmul.f32 %v1729, 0.2
        %v1786 = vmul.f32 %v1755, 0.2
        %v1787 = vmul.f32 %v1781, 0.2
        %v1788 = vmax.f32 %v1703, %v1784
        %v1789 = vmax.f32 %v1729, %v1785
        %v1790 = vmax.f32 %v1755, %v1786
        %v1791 = vmax.f32 %v1781, %v1787
        %v1792 = vld [vmem:[#allocation2 + $0x80] sm:$0xff]
        %v1793 = vld [vmem:[#allocation2 + $0x88] sm:$0xff]
        %v1794 = vld [vmem:[#allocation2 + $0x90] sm:$0xff]
        %v1795 = vld [vmem:[#allocation2 + $0x98] sm:$0xff]
        %v1796 = vld [vmem:[%s5] sm:$0xf]
        %v1797 = vld [vmem:[%s6] sm:$0xff]
        %1799 = vset.pattern.permute.xlu0 0
        %1800 = vperm.xlu0 %1799, %v1797
        %v1801 = vpop.permute.xlu0 %1800
        %v1807 = vunpack.c.l.b16 %v1792
        %v1808 = vunpack.c.h.b16 %v1792
        %v1809 = vunpack.c.l.b16 %v1793
        %v1810 = vunpack.c.h.b16 %v1793
        %v1811 = vunpack.c.l.b16 %v1794
        %v1812 = vunpack.c.h.b16 %v1794
        %v1813 = vunpack.c.l.b16 %v1795
        %v1814 = vunpack.c.h.b16 %v1795
        %v1815 = vpack.c.b16 %v1811, %v1807
        %v1816 = vpack.c.b16 %v1812, %v1808
        %v1817 = vpack.c.b16 %v1813, %v1809
        %v1818 = vpack.c.b16 %v1814, %v1810
        %v1824 = vsel %vm999, %v1796, 0
        %1826 = vmatpush.bf16.msra.mxu0 0
        %1827 = vmatpush.bf16.msra.mxu0 0
        %1828 = vmatpush.bf16.msra.mxu0 0
        %1829 = vmatpush.bf16.msra.mxu0 0
        %1830 = vmatpush.bf16.msra.mxu0 0
        %1831 = vmatpush.bf16.msra.mxu0 0
        %1832 = vmatpush.bf16.msra.mxu0 0
        %1833 = vmatpush.bf16.msra.mxu0 %v1815
        %1834 = vmatmul.bf16.gmra.mxu0 %v1824
        %v1835 = vpop.f32.mrf.mxu0
        %v1836 = vadd.f32 %v1801, %v1835
        %v1837 = vpop.f32.mrf.mxu0
        %1838 = vdwg.mxu0
        %1839 = vmatpush.bf16.msra.mxu0 0
        %1840 = vmatpush.bf16.msra.mxu0 0
        %1841 = vmatpush.bf16.msra.mxu0 0
        %1842 = vmatpush.bf16.msra.mxu0 0
        %1843 = vmatpush.bf16.msra.mxu0 0
        %1844 = vmatpush.bf16.msra.mxu0 0
        %1845 = vmatpush.bf16.msra.mxu0 0
        %1846 = vmatpush.bf16.msra.mxu0 %v1816
        %1847 = vmatmul.bf16.gmra.mxu0 %v1824
        %v1848 = vpop.f32.mrf.mxu0
        %v1849 = vadd.f32 %v1801, %v1848
        %v1850 = vpop.f32.mrf.mxu0
        %1851 = vdwg.mxu0
        %1852 = vmatpush.bf16.msra.mxu0 0
        %1853 = vmatpush.bf16.msra.mxu0 0
        %1854 = vmatpush.bf16.msra.mxu0 0
        %1855 = vmatpush.bf16.msra.mxu0 0
        %1856 = vmatpush.bf16.msra.mxu0 0
        %1857 = vmatpush.bf16.msra.mxu0 0
        %1858 = vmatpush.bf16.msra.mxu0 0
        %1859 = vmatpush.bf16.msra.mxu0 %v1817
        %1860 = vmatmul.bf16.gmra.mxu0 %v1824
        %v1861 = vpop.f32.mrf.mxu0
        %v1862 = vadd.f32 %v1801, %v1861
        %v1863 = vpop.f32.mrf.mxu0
        %1864 = vdwg.mxu0
        %1865 = vmatpush.bf16.msra.mxu0 0
        %1866 = vmatpush.bf16.msra.mxu0 0
        %1867 = vmatpush.bf16.msra.mxu0 0
        %1868 = vmatpush.bf16.msra.mxu0 0
        %1869 = vmatpush.bf16.msra.mxu0 0
        %1870 = vmatpush.bf16.msra.mxu0 0
        %1871 = vmatpush.bf16.msra.mxu0 0
        %1872 = vmatpush.bf16.msra.mxu0 %v1818
        %1873 = vmatmul.bf16.gmra.mxu0 %v1824
        %v1874 = vpop.f32.mrf.mxu0
        %v1875 = vadd.f32 %v1801, %v1874
        %v1876 = vpop.f32.mrf.mxu0
        %1877 = vdwg.mxu0
        %v1878 = vadd.f32 %v1836, %v1788
        %v1879 = vadd.f32 %v1849, %v1789
        %v1880 = vadd.f32 %v1862, %v1790
        %v1881 = vadd.f32 %v1875, %v1791
        %v1882 = vmul.f32 %v1878, 0.70710677
        %v1883 = vmul.f32 %v1879, 0.70710677
        %v1884 = vmul.f32 %v1880, 0.70710677
        %v1885 = vmul.f32 %v1881, 0.70710677
        %1886 = vst [vmem:[%s386] sm:$0xff] %v1882
        %1887 = vst [vmem:[%s386 + $0x8] sm:$0xff] %v1883
        %s1888 = scalar_lea.vmem %s386, 16 [#allocation10]
        %1889 = vst [vmem:[%s1888] sm:$0xff] %v1884
        %1890 = vst [vmem:[%s1888 + $0x8] sm:$0xff] %v1885
        %s1891 = sand.u32 %s229, 1
        %s1892 = scalar_lea.sflag [#allocation6], %s1891
        %s1893 = sand.u32 %s229, 1
        %s1894 = smul.addr %s1893, 32
        %s1895 = scalar_lea.vmem [#allocation10], %s1894
        // Predicated region
        $region69: #{tpu_custom_call.1} parent=55 // pred_check
          %p1896 = pneg %p239
        $region70: #{tpu_custom_call.1} parent=55 // pred_check_branch
          %1898 = sbr.rel (%p1896) target = $region72
        $region71: #{tpu_custom_call.1} parent=55 // pred_region
          %s1899 = smul.u32 2, %s27
          %1901 = vsyncadd %s1892, 0
          %s1902 = smul.addr %s1899, 2
          %s1903 = smul.addr %s1902, 8
          %s1904 = scalar_lea.hbm %s9, %s1903
          %s1905 = sshll.u32 %s1895, 4
          %s1906 = int_to_ptr.vmem [resolvable:$true] %s1905
          %s1907 = sshll.u32 %s1904, 4
          %s1908 = int_to_ptr.hbm [resolvable:$true] %s1907
          %1913 = dma.vmem_to_hbm [thread:$0]  %s1906, 512, %s1908, %s1892, 256, 256, 16
        $region72: #{tpu_custom_call.1} parent=55 // pred_fallthru
          _
      $region56: #{tpu_custom_call.1} parent=5 // pred_fallthru
        _
      %p1914 = scmp.le.s32.totalorder 2, %s22
      // Predicated region
      $region73: #{tpu_custom_call.1} parent=5 // pred_check
        %p1915 = pneg %p1914
      $region74: #{tpu_custom_call.1} parent=5 // pred_check_branch
        %1917 = sbr.rel (%p1915) target = $region76
      $region75: #{tpu_custom_call.1} parent=5 // pred_region
        %s1918 = ssub.s32 %s22, 2
        // Predicated region
        $region77: #{tpu_custom_call.1} parent=75 // pred_check
          %p1919 = pneg %p245
        $region78: #{tpu_custom_call.1} parent=75 // pred_check_branch
          %1921 = sbr.rel (%p1919) target = $region80
        $region79: #{tpu_custom_call.1} parent=75 // pred_region
          %s1922 = sand.u32 %s230, 1
          %s1923 = scalar_lea.sflag [#allocation6], %s1922
          %s1924 = sand.u32 %s230, 1
          %s1925 = smul.addr %s1924, 32
          %s1926 = scalar_lea.vmem [#allocation10], %s1925
          %1928 = dma.done %s1923, 512
        $region80: #{tpu_custom_call.1} parent=75 // pred_fallthru
          _
      $region76: #{tpu_custom_call.1} parent=5 // pred_fallthru
        _
    $region6: #{tpu_custom_call.1} parent=1 // loop_footer
      %s26 = sadd.s32 1, %s22
    $region7: #{tpu_custom_call.1} parent=1 // loop_footer_branch
      %21 = sbr.rel target = $region3
    $region8: #{tpu_custom_call.1} parent=1 // loop_exit
      _
    %1929 = vsyncpa [#allocation5], 1
    %s1930 = scalar_lea.sflag [#allocation5], 1
    %1931 = vsyncpa %s1930, 1
    %1932 = vsyncpa [#allocation8], 1
    %1933 = vsyncpa [#allocation6], 1
    %s1934 = scalar_lea.sflag [#allocation6], 1
    %1935 = vsyncpa %s1934, 1

</llo_original>
